<compile_context>
chip_gen: v7x
topology: tpu7x:2x2x1
jax: 0.10.0
libtpu: 0.0.40
codegen_flags: <defaults>
</compile_context>

<pallas_src>
import functools

import jax
import jax.numpy as jnp
from jax.experimental import pallas as pl
from jax.experimental.pallas import tpu as pltpu

EPS = 1e-5                      # nn.LayerNorm default eps
LAMBD = 0.01                    # sparsity_threshold for softshrink
INV_SQRT2 = 0.7071067811865476

# MXU operand dtype: bf16 operands, f32 accumulation (perf feedback).
MXU_DTYPE = jnp.bfloat16


# --------------------- generation-aware knobs (v5e/v6e/v7x) ------------------
def _vmem_capacity_bytes():
    try:
        cap = getattr(pltpu.get_tpu_info(), "vmem_capacity_bytes", None)
        if cap:
            return int(cap)
    except Exception:
        pass
    return 128 * 1024 * 1024        # v5e / v6e default

_VMEM_CAP = _vmem_capacity_bytes()
# v7x: 64 MiB VMEM per TensorCore -> smaller row tiles + single-buffered
# weights; v5e/v6e (128 MiB): keep the big 1024-row tiles.
ROW_TARGET = 1024 if _VMEM_CAP >= 100 * 1024 * 1024 else 512
VMEM_LIMIT = min(64 * 1024 * 1024, _VMEM_CAP // 2)


# ----------------------------- helpers ---------------------------------------
def _gelu(x):
    # exact (erf) GELU, matching torch.nn.functional.gelu default
    return 0.5 * x * (1.0 + jax.lax.erf(x * INV_SQRT2))


def _softshrink(x, lambd):
    return jnp.where(x > lambd, x - lambd, jnp.where(x < -lambd, x + lambd, 0.0))


def _layernorm(x, w, b):
    mu = jnp.mean(x, axis=-1, keepdims=True)
    var = jnp.mean((x - mu) ** 2, axis=-1, keepdims=True)
    return (x - mu) * jax.lax.rsqrt(var + EPS) * w + b


def _pick_tile(n, target=1024, min_grid=4):
    """Largest divisor of n (multiple of 8 when possible), capped at `target`,
    preferring a grid of >= min_grid steps so both v7x TensorCores get at
    least two pipelined steps each."""
    def best(limit, need8):
        for t in range(min(n, limit), 0, -1):
            if n % t == 0 and (not need8 or t % 8 == 0):
                return t
        return None
    for limit, need8 in ((min(target, n // min_grid), True),
                         (min(target, n // min_grid), False),
                         (target, True),
                         (target, False)):
        if limit >= 1:
            t = best(limit, need8)
            if t:
                return t
    return n


def _lane_pack_factor(c, rows):
    """Smallest power-of-two row fold L such that L*C >= 128 lanes (unmasked
    vector loads/stores), constrained to divide the row count."""
    lp = 1
    while lp * c < 128:
        lp *= 2
    while lp > 1 and rows % lp:
        lp //= 2
    return lp


def _const_spec(shape, single_buffer):
    """BlockSpec for a grid-invariant (weight / bias) operand.  When supported,
    request a single VMEM buffer: the index_map is constant, so default
    double-buffering only wastes VMEM (matters at production C on v7x)."""
    index_map = lambda i: (0,) * len(shape)
    if single_buffer:
        try:
            return pl.BlockSpec(shape, index_map, pipeline_mode=pl.Buffered(1))
        except TypeError:
            pass
    return pl.BlockSpec(shape, index_map)


# ------------- K2: packed complex block-MLP + GELU + softshrink --------------
def cmlp_kernel(xr_ref, xi_ref, w1_ref, w2_ref, o_ref, *, lambd):
    # x = [xr | xi] along lanes; weights are the lane-packed real form of the
    # complex block-diagonal matrices -> one MXU dot per complex layer.
    x = jnp.concatenate([xr_ref[...], xi_ref[...]], axis=-1)
    h = jnp.dot(x.astype(MXU_DTYPE), w1_ref[...],
                preferred_element_type=jnp.float32)
    h = _gelu(h)                                    # RealImagGELU on [hr | hi]
    y = jnp.dot(h.astype(MXU_DTYPE), w2_ref[...],
                preferred_element_type=jnp.float32)
    o_ref[...] = _softshrink(y, lambd)              # softshrink on [yr | yi]


def cmlp_pallas(xr, xi, w1, w2, *, single_buffer, lambd=LAMBD):
    Mp, CL = xr.shape              # CL = lane_pack * C
    C2 = 2 * CL
    tm = _pick_tile(Mp, target=ROW_TARGET, min_grid=4)
    assert Mp % tm == 0, (Mp, tm)
    row_in = pl.BlockSpec((tm, CL), lambda i: (i, 0))
    row_out = pl.BlockSpec((tm, C2), lambda i: (i, 0))
    wsp = _const_spec((C2, C2), single_buffer)
    cost = pl.CostEstimate(
        flops=4 * Mp * C2 * C2,                     # two (Mp,2CL)x(2CL,2CL) dots
        transcendentals=Mp * C2,                    # erf in GELU
        bytes_accessed=4 * (2 * Mp * CL + Mp * C2) + 2 * 2 * C2 * C2)
    return pl.pallas_call(
        functools.partial(cmlp_kernel, lambd=lambd),
        out_shape=jax.ShapeDtypeStruct((Mp, C2), jnp.float32),
        grid=(Mp // tm,),
        in_specs=[row_in, row_in, wsp, wsp],
        out_specs=row_out,
        cost_estimate=cost,
        compiler_params=pltpu.CompilerParams(
            dimension_semantics=("parallel",),
            vmem_limit_bytes=VMEM_LIMIT),
    )(xr, xi, w1, w2)


# ------------- K3: skip + norm2 + Mlp(fc1/GELU/fc2) + residual ---------------
def _mlp_block_body(xf_ref, res_ref, avg_ref, lnw_ref, lnb_ref,
                    w1_ref, b1_ref, w2_ref, b2_ref, o_ref):
    # double skip:  y = filter_out + residual ; residual := y
    y = xf_ref[...].astype(jnp.float32) + res_ref[...].astype(jnp.float32)

    # norm2: f32 LayerNorm statistics.  When rows are lane-packed, avg_ref
    # holds kron(I_LP, 11^T/C): per-original-row mean / E[x^2] via one f32 MXU
    # dot each (no in-kernel reshapes, exact per-row stats).
    if avg_ref is None:
        mu = jnp.mean(y, axis=-1, keepdims=True)
        var = jnp.mean((y - mu) ** 2, axis=-1, keepdims=True)
    else:
        avg = avg_ref[...]
        mu = jnp.dot(y, avg, preferred_element_type=jnp.float32)
        var = jnp.dot(y * y, avg, preferred_element_type=jnp.float32) - mu * mu
    yn = (y - mu) * jax.lax.rsqrt(var + EPS) * lnw_ref[...] + lnb_ref[...]

    # Mlp: fc1 -> GELU -> fc2 (bf16 MXU operands, f32 accumulation)
    h = _gelu(jnp.dot(yn.astype(MXU_DTYPE), w1_ref[...],
                      preferred_element_type=jnp.float32) + b1_ref[...])
    z = jnp.dot(h.astype(MXU_DTYPE), w2_ref[...],
                preferred_element_type=jnp.float32) + b2_ref[...]
    o_ref[...] = (y + z).astype(o_ref.dtype)        # x = mlp(...) + residual


def _mlp_kernel_packed(xf_ref, res_ref, avg_ref, lnw_ref, lnb_ref,
                       w1_ref, b1_ref, w2_ref, b2_ref, o_ref):
    _mlp_block_body(xf_ref, res_ref, avg_ref, lnw_ref, lnb_ref,
                    w1_ref, b1_ref, w2_ref, b2_ref, o_ref)


def _mlp_kernel_plain(xf_ref, res_ref, lnw_ref, lnb_ref,
                      w1_ref, b1_ref, w2_ref, b2_ref, o_ref):
    _mlp_block_body(xf_ref, res_ref, None, lnw_ref, lnb_ref,
                    w1_ref, b1_ref, w2_ref, b2_ref, o_ref)


def mlp_block_pallas(xf, res, avg, lnw, lnb, w1, b1, w2, b2, *, single_buffer):
    Np, CL = xf.shape
    HL = w1.shape[1]
    tm = _pick_tile(Np, target=ROW_TARGET, min_grid=4)
    assert Np % tm == 0, (Np, tm)
    row = pl.BlockSpec((tm, CL), lambda i: (i, 0))

    args = [xf, res]
    in_specs = [row, row]
    if avg is not None:
        args.append(avg)
        in_specs.append(_const_spec((CL, CL), single_buffer))
        kern = _mlp_kernel_packed
    else:
        kern = _mlp_kernel_plain
    args += [lnw, lnb, w1, b1, w2, b2]
    in_specs += [_const_spec((1, CL), single_buffer),
                 _const_spec((1, CL), single_buffer),
                 _const_spec((CL, HL), single_buffer),
                 _const_spec((1, HL), single_buffer),
                 _const_spec((HL, CL), single_buffer),
                 _const_spec((1, CL), single_buffer)]

    cost = pl.CostEstimate(
        flops=4 * Np * CL * HL + (4 * Np * CL * CL if avg is not None else 0),
        transcendentals=Np * HL,
        bytes_accessed=4 * 3 * Np * CL + 2 * 2 * CL * HL)

    return pl.pallas_call(
        kern,
        out_shape=jax.ShapeDtypeStruct((Np, CL), xf.dtype),
        grid=(Np // tm,),
        in_specs=in_specs,
        out_specs=row,
        input_output_aliases={0: 0},    # filter-output buffer is dead after K3
        cost_estimate=cost,
        compiler_params=pltpu.CompilerParams(
            dimension_semantics=("parallel",),
            vmem_limit_bytes=VMEM_LIMIT),
    )(*args)


# ------------------------ host-side weight packing ---------------------------
def _block_diag(w):
    """(nb, bs, bs) per-block weights -> dense (C, C) block-diagonal matrix."""
    return jax.scipy.linalg.block_diag(*[w[i] for i in range(w.shape[0])])


def _pack_complex_weight(wr_blocks, wi_blocks, lane_pack):
    """Complex block-diag weight -> lane-packed real matrix.

    Rows/columns laid out as [re_0 .. re_{L-1} | im_0 .. im_{L-1}] (L =
    lane_pack spatial rows folded into lanes), so the matrix is
        [[kron(I_L, wr),  kron(I_L, wi)],
         [kron(I_L,-wi),  kron(I_L, wr)]]        shape (2*L*C, 2*L*C);
    L == 1 reduces to the plain packed complex form.
    """
    wr = _block_diag(wr_blocks)
    wi = _block_diag(wi_blocks)
    eye = jnp.eye(lane_pack, dtype=wr.dtype)
    wr, wi = jnp.kron(eye, wr), jnp.kron(eye, wi)
    top = jnp.concatenate([wr, wi], axis=1)
    bot = jnp.concatenate([-wi, wr], axis=1)
    return jnp.concatenate([top, bot], axis=0)


def prepare_block_params(p, x_shape):
    """Pack/expand weights on the host: complex block-diag -> lane-packed real,
    MLP weights -> kron(I_LP, W), biases/LN params tiled.  Everything feeding
    the MXU is pre-cast to bf16 (halves the weight DMA; accumulation is f32)."""
    B, H, W, C = x_shape
    Wf = W // 2 + 1
    M, N = B * H * Wf, B * H * W
    lpf = _lane_pack_factor(C, M)
    lpm = _lane_pack_factor(C, N)
    Hm = p["mlp_w1"].shape[1]

    q = dict(p)
    q["w1_packed"] = _pack_complex_weight(p["w1r"], p["w1i"], lpf).astype(MXU_DTYPE)
    q["w2_packed"] = _pack_complex_weight(p["w2r"], p["w2i"], lpf).astype(MXU_DTYPE)

    eye = jnp.eye(lpm, dtype=jnp.float32)
    q["mlp_w1_k"] = jnp.kron(eye, p["mlp_w1"]).astype(MXU_DTYPE)
    q["mlp_w2_k"] = jnp.kron(eye, p["mlp_w2"]).astype(MXU_DTYPE)
    q["mlp_b1_k"] = jnp.tile(p["mlp_b1"], lpm).reshape(1, lpm * Hm)
    q["mlp_b2_k"] = jnp.tile(p["mlp_b2"], lpm).reshape(1, lpm * C)
    q["ln2_w_k"] = jnp.tile(p["ln2_w"], lpm).reshape(1, lpm * C)
    q["ln2_b_k"] = jnp.tile(p["ln2_b"], lpm).reshape(1, lpm * C)
    if lpm > 1:
        # kron(I_L, 11^T / C): per-original-row LN mean via one f32 MXU dot.
        q["avg_mat"] = jnp.kron(eye, jnp.full((C, C), 1.0 / C, jnp.float32))
    return q


# ------------------------------ Block forward --------------------------------
def block_forward(x, p, *, single_buffer=True):
    """Block.forward with double_skip=True, drop=0, drop_path=0."""
    B, H, W, C = x.shape
    dtype = x.dtype
    N = B * H * W
    residual = x

    # norm1 stays in plain JAX so XLA fuses it with the rfftn input path.
    xn = _layernorm(x.astype(jnp.float32), p["ln1_w"], p["ln1_b"])

    # --- AFNO_ND filter: rfftn (XLA) -> Pallas complex block-MLP -> irfftn ---
    # TODO(synk): FFT has no Pallas TPU primitive; rfftn/irfftn stay in JAX.
    Xf = jnp.fft.rfftn(xn, axes=(1, 2), norm="ortho")
    Wf = Xf.shape[2]
    M = B * H * Wf
    lpf = _lane_pack_factor(C, M)
    Mp = M // lpf
    # Real/imag go to the kernel as two separate row-major slabs (no HBM concat
    # round-trip); lane-packing lpf rows per slab row keeps loads/stores dense.
    xr = jnp.real(Xf).reshape(Mp, lpf * C)
    xi = jnp.imag(Xf).reshape(Mp, lpf * C)
    y = cmlp_pallas(xr, xi, p["w1_packed"], p["w2_packed"],
                    single_buffer=single_buffer)
    yr = y[:, :lpf * C].reshape(B, H, Wf, C)
    yi = y[:, lpf * C:].reshape(B, H, Wf, C)
    filt = jnp.fft.irfftn(yr + 1j * yi, s=(H, W), axes=(1, 2),
                          norm="ortho").astype(jnp.float32)

    # --- double skip + norm2 + Mlp + residual (fused Pallas kernel) -----------
    lpm = _lane_pack_factor(C, N)
    Np = N // lpm
    out = mlp_block_pallas(
        filt.reshape(Np, lpm * C),
        residual.astype(jnp.float32).reshape(Np, lpm * C),
        p["avg_mat"] if lpm > 1 else None,
        p["ln2_w_k"], p["ln2_b_k"],
        p["mlp_w1_k"], p["mlp_b1_k"], p["mlp_w2_k"], p["mlp_b2_k"],
        single_buffer=single_buffer)
    return out.reshape(B, H, W, C).astype(dtype)


# --------------------------- pure-JAX reference -------------------------------
def block_reference(x, p, nb, bs):
    B, H, W, C = x.shape
    residual = x
    xn = _layernorm(x.astype(jnp.float32), p["ln1_w"], p["ln1_b"])
    Xf = jnp.fft.rfftn(xn, axes=(1, 2), norm="ortho")

    def cbl(z, wc):
        zz = z.reshape(*z.shape[:-1], nb, bs)
        o = jnp.einsum("...bi,bio->...bo", zz, wc)
        return o.reshape(*z.shape[:-1], nb * bs)

    w1c = p["w1r"] + 1j * p["w1i"]
    w2c = p["w2r"] + 1j * p["w2i"]
    z = cbl(Xf, w1c)
    z = _gelu(jnp.real(z)) + 1j * _gelu(jnp.imag(z))
    z = cbl(z, w2c)
    z = _softshrink(jnp.real(z), LAMBD) + 1j * _softshrink(jnp.imag(z), LAMBD)
    filt = jnp.fft.irfftn(z, s=(H, W), axes=(1, 2), norm="ortho").astype(x.dtype)

    x2 = filt + residual
    residual = x2
    xn2 = _layernorm(x2, p["ln2_w"], p["ln2_b"])
    h = _gelu(xn2 @ p["mlp_w1"] + p["mlp_b1"])
    y = h @ p["mlp_w2"] + p["mlp_b2"]
    return y + residual


# ---------------------------------- main --------------------------------------
if __name__ == "__main__":
    B, H, W, C = 2, 16, 16, 32
    NB = 8                      # cmlp_diagonal_blocks
    BS = C // NB                # block_size
    MLP_H = int(C * 4.0)        # mlp_ratio = 4.0
    SCALE = 0.02

    key = jax.random.PRNGKey(0)
    ks = jax.random.split(key, 12)

    params = {
        "ln1_w": 1.0 + 0.1 * jax.random.normal(ks[0], (C,), jnp.float32),
        "ln1_b": 0.1 * jax.random.normal(ks[1], (C,), jnp.float32),
        "ln2_w": 1.0 + 0.1 * jax.random.normal(ks[2], (C,), jnp.float32),
        "ln2_b": 0.1 * jax.random.normal(ks[3], (C,), jnp.float32),
        "w1r": SCALE * jax.random.normal(ks[4], (NB, BS, BS), jnp.float32),
        "w1i": SCALE * jax.random.normal(ks[5], (NB, BS, BS), jnp.float32),
        "w2r": SCALE * jax.random.normal(ks[6], (NB, BS, BS), jnp.float32),
        "w2i": SCALE * jax.random.normal(ks[7], (NB, BS, BS), jnp.float32),
        "mlp_w1": SCALE * jax.random.normal(ks[8], (C, MLP_H), jnp.float32),
        "mlp_b1": SCALE * jax.random.normal(ks[9], (MLP_H,), jnp.float32),
        "mlp_w2": SCALE * jax.random.normal(ks[10], (MLP_H, C), jnp.float32),
        "mlp_b2": SCALE * jax.random.normal(ks[11], (C,), jnp.float32),
    }
    x = jax.random.normal(jax.random.PRNGKey(42), (B, H, W, C), jnp.float32)

    pp = prepare_block_params(params, x.shape)

    fwd = jax.jit(functools.partial(block_forward, single_buffer=True))
    try:
        out = jax.block_until_ready(fwd(x, pp))
    except Exception:
        # pl.Buffered(1) (single-buffered weight specs) not supported by this
        # jax version -> fall back to default double-buffered weight specs.
        fwd = jax.jit(functools.partial(block_forward, single_buffer=False))
        out = jax.block_until_ready(fwd(x, pp))

    ref = jax.block_until_ready(block_reference(x, params, NB, BS))

    assert out.shape == x.shape and out.dtype == x.dtype
    err = float(jnp.max(jnp.abs(out - ref)))
    # bf16 MXU operands (f32 accumulation) vs an all-f32 reference: tolerance
    # 2e-3 ~= bf16 half-ulp propagated through the two small MLPs.
    if err > 2e-3:
        raise AssertionError(f"mismatch vs reference: max abs err = {err}")
    print("KERNEL_OK")
</pallas_src>

<mosaic_0001>
module attributes {stable_mosaic.version = 11 : i64} {
  func.func @cmlp_kernel(%arg0: i32, %arg1: memref<8x128xf32, #tpu.memory_space<vmem>>, %arg2: memref<8x128xf32, #tpu.memory_space<vmem>>, %arg3: memref<256x256xbf16, #tpu.memory_space<vmem>>, %arg4: memref<256x256xbf16, #tpu.memory_space<vmem>>, %arg5: memref<8x256xf32, #tpu.memory_space<vmem>>) attributes {dimension_semantics = [#tpu.dimension_semantics<parallel>], iteration_bounds = array<i64: 9>, scalar_prefetch = 0 : i64, scratch_operands = 0 : i64, tpu.core_type = #tpu.core_type<tc>, window_params = [{transform_indices = @transform_0, window_bounds = array<i64: 8, 128>}, {transform_indices = @transform_1, window_bounds = array<i64: 8, 128>}, {pipeline_mode = #tpu.pipeline_mode<synchronous>, transform_indices = @transform_2, window_bounds = array<i64: 256, 256>}, {pipeline_mode = #tpu.pipeline_mode<synchronous>, transform_indices = @transform_3, window_bounds = array<i64: 256, 256>}, {transform_indices = @transform_4, window_bounds = array<i64: 8, 256>}]} {
    %c0 = arith.constant 0 : index
    %c0_0 = arith.constant 0 : index
    %0 = vector.load %arg1[%c0, %c0_0] : memref<8x128xf32, #tpu.memory_space<vmem>>, vector<8x128xf32>
    %c0_1 = arith.constant 0 : index
    %c0_2 = arith.constant 0 : index
    %1 = vector.load %arg2[%c0_1, %c0_2] : memref<8x128xf32, #tpu.memory_space<vmem>>, vector<8x128xf32>
    %2 = tpu.concatenate %0, %1 in 1 : vector<8x128xf32>, vector<8x128xf32> -> vector<8x256xf32>
    %3 = arith.truncf %2 : vector<8x256xf32> to vector<8x256xbf16>
    %c0_3 = arith.constant 0 : index
    %c0_4 = arith.constant 0 : index
    %4 = vector.load %arg3[%c0_3, %c0_4] : memref<256x256xbf16, #tpu.memory_space<vmem>>, vector<256x256xbf16>
    %cst = arith.constant dense<0.000000e+00> : vector<8x256xf32>
    %5 = tpu.matmul %3, %4, %cst {dimension_numbers = #tpu.dot_dimension_numbers<[1], [0], [0], [1], [0, 0, 1, 1], [], []>} : vector<8x256xbf16>, vector<256x256xbf16>, vector<8x256xf32> -> vector<8x256xf32>
    %cst_5 = arith.constant 5.000000e-01 : f32
    %6 = vector.broadcast %cst_5 : f32 to vector<8x256xf32>
    %7 = arith.mulf %6, %5 : vector<8x256xf32>
    %cst_6 = arith.constant 0.707106769 : f32
    %8 = vector.broadcast %cst_6 : f32 to vector<8x256xf32>
    %9 = arith.mulf %5, %8 : vector<8x256xf32>
    %10 = math.erf %9 : vector<8x256xf32>
    %cst_7 = arith.constant 1.000000e+00 : f32
    %11 = vector.broadcast %cst_7 : f32 to vector<8x256xf32>
    %12 = arith.addf %11, %10 : vector<8x256xf32>
    %13 = arith.mulf %7, %12 : vector<8x256xf32>
    %14 = arith.truncf %13 : vector<8x256xf32> to vector<8x256xbf16>
    %c0_8 = arith.constant 0 : index
    %c0_9 = arith.constant 0 : index
    %15 = vector.load %arg4[%c0_8, %c0_9] : memref<256x256xbf16, #tpu.memory_space<vmem>>, vector<256x256xbf16>
    %cst_10 = arith.constant dense<0.000000e+00> : vector<8x256xf32>
    %16 = tpu.matmul %14, %15, %cst_10 {dimension_numbers = #tpu.dot_dimension_numbers<[1], [0], [0], [1], [0, 0, 1, 1], [], []>} : vector<8x256xbf16>, vector<256x256xbf16>, vector<8x256xf32> -> vector<8x256xf32>
    %cst_11 = arith.constant 0.00999999977 : f32
    %17 = vector.broadcast %cst_11 : f32 to vector<8x256xf32>
    %18 = arith.cmpf ogt, %16, %17 : vector<8x256xf32>
    %cst_12 = arith.constant 0.00999999977 : f32
    %19 = vector.broadcast %cst_12 : f32 to vector<8x256xf32>
    %20 = arith.subf %16, %19 : vector<8x256xf32>
    %cst_13 = arith.constant -0.00999999977 : f32
    %21 = vector.broadcast %cst_13 : f32 to vector<8x256xf32>
    %22 = arith.cmpf olt, %16, %21 : vector<8x256xf32>
    %cst_14 = arith.constant 0.00999999977 : f32
    %23 = vector.broadcast %cst_14 : f32 to vector<8x256xf32>
    %24 = arith.addf %16, %23 : vector<8x256xf32>
    %cst_15 = arith.constant 0.000000e+00 : f32
    %25 = vector.broadcast %cst_15 : f32 to vector<8x256xf32>
    %26 = arith.select %22, %24, %25 : vector<8x256xi1>, vector<8x256xf32>
    %27 = arith.select %18, %20, %26 : vector<8x256xi1>, vector<8x256xf32>
    %c0_16 = arith.constant 0 : index
    %c0_17 = arith.constant 0 : index
    %28 = vector.load %arg5[%c0_16, %c0_17] : memref<8x256xf32, #tpu.memory_space<vmem>>, vector<8x256xf32>
    tpu.vector_store %arg5[%c0_16, %c0_17], %27 {strides = array<i32>} : memref<8x256xf32, #tpu.memory_space<vmem>>, vector<8x256xf32>,
    return
  }
  func.func @transform_0(%arg0: i32) -> (i32, i32) {
    %c0_i32 = arith.constant 0 : i32
    %c0_i32_0 = arith.constant 0 : i32
    return %arg0, %c0_i32 : i32, i32
  }
  func.func @transform_1(%arg0: i32) -> (i32, i32) {
    %c0_i32 = arith.constant 0 : i32
    %c0_i32_0 = arith.constant 0 : i32
    return %arg0, %c0_i32 : i32, i32
  }
  func.func @transform_2(%arg0: i32) -> (i32, i32) {
    %c0_i32 = arith.constant 0 : i32
    %c0_i32_0 = arith.constant 0 : i32
    %c0_i32_1 = arith.constant 0 : i32
    return %c0_i32, %c0_i32_0 : i32, i32
  }
  func.func @transform_3(%arg0: i32) -> (i32, i32) {
    %c0_i32 = arith.constant 0 : i32
    %c0_i32_0 = arith.constant 0 : i32
    %c0_i32_1 = arith.constant 0 : i32
    return %c0_i32, %c0_i32_0 : i32, i32
  }
  func.func @transform_4(%arg0: i32) -> (i32, i32) {
    %c0_i32 = arith.constant 0 : i32
    %c0_i32_0 = arith.constant 0 : i32
    return %arg0, %c0_i32 : i32, i32
  }
}

module attributes {stable_mosaic.version = 11 : i64} {
  func.func @_mlp_kernel_packed(%arg0: i32, %arg1: memref<32x128xf32, #tpu.memory_space<vmem>>, %arg2: memref<32x128xf32, #tpu.memory_space<vmem>>, %arg3: memref<128x128xf32, #tpu.memory_space<vmem>>, %arg4: memref<1x128xf32, #tpu.memory_space<vmem>>, %arg5: memref<1x128xf32, #tpu.memory_space<vmem>>, %arg6: memref<128x512xbf16, #tpu.memory_space<vmem>>, %arg7: memref<1x512xf32, #tpu.memory_space<vmem>>, %arg8: memref<512x128xbf16, #tpu.memory_space<vmem>>, %arg9: memref<1x128xf32, #tpu.memory_space<vmem>>, %arg10: memref<32x128xf32, #tpu.memory_space<vmem>>) attributes {dimension_semantics = [#tpu.dimension_semantics<parallel>], iteration_bounds = array<i64: 4>, scalar_prefetch = 0 : i64, scratch_operands = 0 : i64, tpu.core_type = #tpu.core_type<tc>, window_params = [{transform_indices = @transform_0, window_bounds = array<i64: 32, 128>}, {transform_indices = @transform_1, window_bounds = array<i64: 32, 128>}, {pipeline_mode = #tpu.pipeline_mode<synchronous>, transform_indices = @transform_2, window_bounds = array<i64: 128, 128>}, {pipeline_mode = #tpu.pipeline_mode<synchronous>, transform_indices = @transform_3, window_bounds = array<i64: 1, 128>}, {pipeline_mode = #tpu.pipeline_mode<synchronous>, transform_indices = @transform_4, window_bounds = array<i64: 1, 128>}, {pipeline_mode = #tpu.pipeline_mode<synchronous>, transform_indices = @transform_5, window_bounds = array<i64: 128, 512>}, {pipeline_mode = #tpu.pipeline_mode<synchronous>, transform_indices = @transform_6, window_bounds = array<i64: 1, 512>}, {pipeline_mode = #tpu.pipeline_mode<synchronous>, transform_indices = @transform_7, window_bounds = array<i64: 512, 128>}, {pipeline_mode = #tpu.pipeline_mode<synchronous>, transform_indices = @transform_8, window_bounds = array<i64: 1, 128>}, {transform_indices = @transform_9, window_bounds = array<i64: 32, 128>}]} {
    %c0 = arith.constant 0 : index
    %c0_0 = arith.constant 0 : index
    %0 = vector.load %arg1[%c0, %c0_0] : memref<32x128xf32, #tpu.memory_space<vmem>>, vector<32x128xf32>
    %c0_1 = arith.constant 0 : index
    %c0_2 = arith.constant 0 : index
    %1 = vector.load %arg2[%c0_1, %c0_2] : memref<32x128xf32, #tpu.memory_space<vmem>>, vector<32x128xf32>
    %2 = arith.addf %0, %1 : vector<32x128xf32>
    %c0_3 = arith.constant 0 : index
    %c0_4 = arith.constant 0 : index
    %3 = vector.load %arg3[%c0_3, %c0_4] : memref<128x128xf32, #tpu.memory_space<vmem>>, vector<128x128xf32>
    %cst = arith.constant dense<0.000000e+00> : vector<32x128xf32>
    %4 = tpu.matmul %2, %3, %cst {dimension_numbers = #tpu.dot_dimension_numbers<[1], [0], [0], [1], [0, 0, 1, 1], [], []>} : vector<32x128xf32>, vector<128x128xf32>, vector<32x128xf32> -> vector<32x128xf32>
    %5 = arith.mulf %2, %2 : vector<32x128xf32>
    %cst_5 = arith.constant dense<0.000000e+00> : vector<32x128xf32>
    %6 = tpu.matmul %5, %3, %cst_5 {dimension_numbers = #tpu.dot_dimension_numbers<[1], [0], [0], [1], [0, 0, 1, 1], [], []>} : vector<32x128xf32>, vector<128x128xf32>, vector<32x128xf32> -> vector<32x128xf32>
    %7 = arith.mulf %4, %4 : vector<32x128xf32>
    %8 = arith.subf %6, %7 : vector<32x128xf32>
    %9 = arith.subf %2, %4 : vector<32x128xf32>
    %cst_6 = arith.constant 9.99999974E-6 : f32
    %10 = vector.broadcast %cst_6 : f32 to vector<32x128xf32>
    %11 = arith.addf %8, %10 : vector<32x128xf32>
    %12 = math.rsqrt %11 : vector<32x128xf32>
    %13 = arith.mulf %9, %12 : vector<32x128xf32>
    %c0_7 = arith.constant 0 : index
    %c0_8 = arith.constant 0 : index
    %14 = vector.load %arg4[%c0_7, %c0_8] : memref<1x128xf32, #tpu.memory_space<vmem>>, vector<1x128xf32>
    %15 = vector.broadcast %14 : vector<1x128xf32> to vector<32x128xf32>
    %16 = arith.mulf %13, %15 : vector<32x128xf32>
    %c0_9 = arith.constant 0 : index
    %c0_10 = arith.constant 0 : index
    %17 = vector.load %arg5[%c0_9, %c0_10] : memref<1x128xf32, #tpu.memory_space<vmem>>, vector<1x128xf32>
    %18 = vector.broadcast %17 : vector<1x128xf32> to vector<32x128xf32>
    %19 = arith.addf %16, %18 : vector<32x128xf32>
    %20 = arith.truncf %19 : vector<32x128xf32> to vector<32x128xbf16>
    %c0_11 = arith.constant 0 : index
    %c0_12 = arith.constant 0 : index
    %21 = vector.load %arg6[%c0_11, %c0_12] : memref<128x512xbf16, #tpu.memory_space<vmem>>, vector<128x512xbf16>
    %cst_13 = arith.constant dense<0.000000e+00> : vector<32x512xf32>
    %22 = tpu.matmul %20, %21, %cst_13 {dimension_numbers = #tpu.dot_dimension_numbers<[1], [0], [0], [1], [0, 0, 1, 1], [], []>} : vector<32x128xbf16>, vector<128x512xbf16>, vector<32x512xf32> -> vector<32x512xf32>
    %c0_14 = arith.constant 0 : index
    %c0_15 = arith.constant 0 : index
    %23 = vector.load %arg7[%c0_14, %c0_15] : memref<1x512xf32, #tpu.memory_space<vmem>>, vector<1x512xf32>
    %24 = vector.broadcast %23 : vector<1x512xf32> to vector<32x512xf32>
    %25 = arith.addf %22, %24 : vector<32x512xf32>
    %cst_16 = arith.constant 5.000000e-01 : f32
    %26 = vector.broadcast %cst_16 : f32 to vector<32x512xf32>
    %27 = arith.mulf %26, %25 : vector<32x512xf32>
    %cst_17 = arith.constant 0.707106769 : f32
    %28 = vector.broadcast %cst_17 : f32 to vector<32x512xf32>
    %29 = arith.mulf %25, %28 : vector<32x512xf32>
    %30 = math.erf %29 : vector<32x512xf32>
    %cst_18 = arith.constant 1.000000e+00 : f32
    %31 = vector.broadcast %cst_18 : f32 to vector<32x512xf32>
    %32 = arith.addf %31, %30 : vector<32x512xf32>
    %33 = arith.mulf %27, %32 : vector<32x512xf32>
    %34 = arith.truncf %33 : vector<32x512xf32> to vector<32x512xbf16>
    %c0_19 = arith.constant 0 : index
    %c0_20 = arith.constant 0 : index
    %35 = vector.load %arg8[%c0_19, %c0_20] : memref<512x128xbf16, #tpu.memory_space<vmem>>, vector<512x128xbf16>
    %cst_21 = arith.constant dense<0.000000e+00> : vector<32x128xf32>
    %36 = tpu.matmul %34, %35, %cst_21 {dimension_numbers = #tpu.dot_dimension_numbers<[1], [0], [0], [1], [0, 0, 1, 1], [], []>} : vector<32x512xbf16>, vector<512x128xbf16>, vector<32x128xf32> -> vector<32x128xf32>
    %c0_22 = arith.constant 0 : index
    %c0_23 = arith.constant 0 : index
    %37 = vector.load %arg9[%c0_22, %c0_23] : memref<1x128xf32, #tpu.memory_space<vmem>>, vector<1x128xf32>
    %38 = vector.broadcast %37 : vector<1x128xf32> to vector<32x128xf32>
    %39 = arith.addf %36, %38 : vector<32x128xf32>
    %40 = arith.addf %2, %39 : vector<32x128xf32>
    %c0_24 = arith.constant 0 : index
    %c0_25 = arith.constant 0 : index
    %41 = vector.load %arg10[%c0_24, %c0_25] : memref<32x128xf32, #tpu.memory_space<vmem>>, vector<32x128xf32>
    tpu.vector_store %arg10[%c0_24, %c0_25], %40 {strides = array<i32>} : memref<32x128xf32, #tpu.memory_space<vmem>>, vector<32x128xf32>,
    return
  }
  func.func @transform_0(%arg0: i32) -> (i32, i32) {
    %c0_i32 = arith.constant 0 : i32
    %c0_i32_0 = arith.constant 0 : i32
    return %arg0, %c0_i32 : i32, i32
  }
  func.func @transform_1(%arg0: i32) -> (i32, i32) {
    %c0_i32 = arith.constant 0 : i32
    %c0_i32_0 = arith.constant 0 : i32
    return %arg0, %c0_i32 : i32, i32
  }
  func.func @transform_2(%arg0: i32) -> (i32, i32) {
    %c0_i32 = arith.constant 0 : i32
    %c0_i32_0 = arith.constant 0 : i32
    %c0_i32_1 = arith.constant 0 : i32
    return %c0_i32, %c0_i32_0 : i32, i32
  }
  func.func @transform_3(%arg0: i32) -> (i32, i32) {
    %c0_i32 = arith.constant 0 : i32
    %c0_i32_0 = arith.constant 0 : i32
    %c0_i32_1 = arith.constant 0 : i32
    return %c0_i32, %c0_i32_0 : i32, i32
  }
  func.func @transform_4(%arg0: i32) -> (i32, i32) {
    %c0_i32 = arith.constant 0 : i32
    %c0_i32_0 = arith.constant 0 : i32
    %c0_i32_1 = arith.constant 0 : i32
    return %c0_i32, %c0_i32_0 : i32, i32
  }
  func.func @transform_5(%arg0: i32) -> (i32, i32) {
    %c0_i32 = arith.constant 0 : i32
    %c0_i32_0 = arith.constant 0 : i32
    %c0_i32_1 = arith.constant 0 : i32
    return %c0_i32, %c0_i32_0 : i32, i32
  }
  func.func @transform_6(%arg0: i32) -> (i32, i32) {
    %c0_i32 = arith.constant 0 : i32
    %c0_i32_0 = arith.constant 0 : i32
    %c0_i32_1 = arith.constant 0 : i32
    return %c0_i32, %c0_i32_0 : i32, i32
  }
  func.func @transform_7(%arg0: i32) -> (i32, i32) {
    %c0_i32 = arith.constant 0 : i32
    %c0_i32_0 = arith.constant 0 : i32
    %c0_i32_1 = arith.constant 0 : i32
    return %c0_i32, %c0_i32_0 : i32, i32
  }
  func.func @transform_8(%arg0: i32) -> (i32, i32) {
    %c0_i32 = arith.constant 0 : i32
    %c0_i32_0 = arith.constant 0 : i32
    %c0_i32_1 = arith.constant 0 : i32
    return %c0_i32, %c0_i32_0 : i32, i32
  }
  func.func @transform_9(%arg0: i32) -> (i32, i32) {
    %c0_i32 = arith.constant 0 : i32
    %c0_i32_0 = arith.constant 0 : i32
    return %arg0, %c0_i32 : i32, i32
  }
}

module attributes {stable_mosaic.version = 11 : i64} {
  func.func @cmlp_kernel(%arg0: i32, %arg1: memref<8x128xf32, #tpu.memory_space<vmem>>, %arg2: memref<8x128xf32, #tpu.memory_space<vmem>>, %arg3: memref<256x256xbf16, #tpu.memory_space<vmem>>, %arg4: memref<256x256xbf16, #tpu.memory_space<vmem>>, %arg5: memref<8x256xf32, #tpu.memory_space<vmem>>) attributes {dimension_semantics = [#tpu.dimension_semantics<parallel>], iteration_bounds = array<i64: 9>, scalar_prefetch = 0 : i64, scratch_operands = 0 : i64, tpu.core_type = #tpu.core_type<tc>, window_params = [{transform_indices = @transform_0, window_bounds = array<i64: 8, 128>}, {transform_indices = @transform_1, window_bounds = array<i64: 8, 128>}, {pipeline_mode = #tpu.pipeline_mode<synchronous>, transform_indices = @transform_2, window_bounds = array<i64: 256, 256>}, {pipeline_mode = #tpu.pipeline_mode<synchronous>, transform_indices = @transform_3, window_bounds = array<i64: 256, 256>}, {transform_indices = @transform_4, window_bounds = array<i64: 8, 256>}]} {
    %c0 = arith.constant 0 : index
    %c0_0 = arith.constant 0 : index
    %0 = vector.load %arg1[%c0, %c0_0] : memref<8x128xf32, #tpu.memory_space<vmem>>, vector<8x128xf32>
    %c0_1 = arith.constant 0 : index
    %c0_2 = arith.constant 0 : index
    %1 = vector.load %arg2[%c0_1, %c0_2] : memref<8x128xf32, #tpu.memory_space<vmem>>, vector<8x128xf32>
    %2 = tpu.concatenate %0, %1 in 1 : vector<8x128xf32>, vector<8x128xf32> -> vector<8x256xf32>
    %3 = arith.truncf %2 : vector<8x256xf32> to vector<8x256xbf16>
    %c0_3 = arith.constant 0 : index
    %c0_4 = arith.constant 0 : index
    %4 = vector.load %arg3[%c0_3, %c0_4] : memref<256x256xbf16, #tpu.memory_space<vmem>>, vector<256x256xbf16>
    %cst = arith.constant dense<0.000000e+00> : vector<8x256xf32>
    %5 = tpu.matmul %3, %4, %cst {dimension_numbers = #tpu.dot_dimension_numbers<[1], [0], [0], [1], [0, 0, 1, 1], [], []>} : vector<8x256xbf16>, vector<256x256xbf16>, vector<8x256xf32> -> vector<8x256xf32>
    %cst_5 = arith.constant 5.000000e-01 : f32
    %6 = vector.broadcast %cst_5 : f32 to vector<8x256xf32>
    %7 = arith.mulf %6, %5 : vector<8x256xf32>
    %cst_6 = arith.constant 0.707106769 : f32
    %8 = vector.broadcast %cst_6 : f32 to vector<8x256xf32>
    %9 = arith.mulf %5, %8 : vector<8x256xf32>
    %10 = math.erf %9 : vector<8x256xf32>
    %cst_7 = arith.constant 1.000000e+00 : f32
    %11 = vector.broadcast %cst_7 : f32 to vector<8x256xf32>
    %12 = arith.addf %11, %10 : vector<8x256xf32>
    %13 = arith.mulf %7, %12 : vector<8x256xf32>
    %14 = arith.truncf %13 : vector<8x256xf32> to vector<8x256xbf16>
    %c0_8 = arith.constant 0 : index
    %c0_9 = arith.constant 0 : index
    %15 = vector.load %arg4[%c0_8, %c0_9] : memref<256x256xbf16, #tpu.memory_space<vmem>>, vector<256x256xbf16>
    %cst_10 = arith.constant dense<0.000000e+00> : vector<8x256xf32>
    %16 = tpu.matmul %14, %15, %cst_10 {dimension_numbers = #tpu.dot_dimension_numbers<[1], [0], [0], [1], [0, 0, 1, 1], [], []>} : vector<8x256xbf16>, vector<256x256xbf16>, vector<8x256xf32> -> vector<8x256xf32>
    %cst_11 = arith.constant 0.00999999977 : f32
    %17 = vector.broadcast %cst_11 : f32 to vector<8x256xf32>
    %18 = arith.cmpf ogt, %16, %17 : vector<8x256xf32>
    %cst_12 = arith.constant 0.00999999977 : f32
    %19 = vector.broadcast %cst_12 : f32 to vector<8x256xf32>
    %20 = arith.subf %16, %19 : vector<8x256xf32>
    %cst_13 = arith.constant -0.00999999977 : f32
    %21 = vector.broadcast %cst_13 : f32 to vector<8x256xf32>
    %22 = arith.cmpf olt, %16, %21 : vector<8x256xf32>
    %cst_14 = arith.constant 0.00999999977 : f32
    %23 = vector.broadcast %cst_14 : f32 to vector<8x256xf32>
    %24 = arith.addf %16, %23 : vector<8x256xf32>
    %cst_15 = arith.constant 0.000000e+00 : f32
    %25 = vector.broadcast %cst_15 : f32 to vector<8x256xf32>
    %26 = arith.select %22, %24, %25 : vector<8x256xi1>, vector<8x256xf32>
    %27 = arith.select %18, %20, %26 : vector<8x256xi1>, vector<8x256xf32>
    %c0_16 = arith.constant 0 : index
    %c0_17 = arith.constant 0 : index
    %28 = vector.load %arg5[%c0_16, %c0_17] : memref<8x256xf32, #tpu.memory_space<vmem>>, vector<8x256xf32>
    tpu.vector_store %arg5[%c0_16, %c0_17], %27 {strides = array<i32>} : memref<8x256xf32, #tpu.memory_space<vmem>>, vector<8x256xf32>,
    return
  }
  func.func @transform_0(%arg0: i32) -> (i32, i32) {
    %c0_i32 = arith.constant 0 : i32
    %c0_i32_0 = arith.constant 0 : i32
    return %arg0, %c0_i32 : i32, i32
  }
  func.func @transform_1(%arg0: i32) -> (i32, i32) {
    %c0_i32 = arith.constant 0 : i32
    %c0_i32_0 = arith.constant 0 : i32
    return %arg0, %c0_i32 : i32, i32
  }
  func.func @transform_2(%arg0: i32) -> (i32, i32) {
    %c0_i32 = arith.constant 0 : i32
    %c0_i32_0 = arith.constant 0 : i32
    %c0_i32_1 = arith.constant 0 : i32
    return %c0_i32, %c0_i32_0 : i32, i32
  }
  func.func @transform_3(%arg0: i32) -> (i32, i32) {
    %c0_i32 = arith.constant 0 : i32
    %c0_i32_0 = arith.constant 0 : i32
    %c0_i32_1 = arith.constant 0 : i32
    return %c0_i32, %c0_i32_0 : i32, i32
  }
  func.func @transform_4(%arg0: i32) -> (i32, i32) {
    %c0_i32 = arith.constant 0 : i32
    %c0_i32_0 = arith.constant 0 : i32
    return %arg0, %c0_i32 : i32, i32
  }
}

module attributes {stable_mosaic.version = 11 : i64} {
  func.func @_mlp_kernel_packed(%arg0: i32, %arg1: memref<32x128xf32, #tpu.memory_space<vmem>>, %arg2: memref<32x128xf32, #tpu.memory_space<vmem>>, %arg3: memref<128x128xf32, #tpu.memory_space<vmem>>, %arg4: memref<1x128xf32, #tpu.memory_space<vmem>>, %arg5: memref<1x128xf32, #tpu.memory_space<vmem>>, %arg6: memref<128x512xbf16, #tpu.memory_space<vmem>>, %arg7: memref<1x512xf32, #tpu.memory_space<vmem>>, %arg8: memref<512x128xbf16, #tpu.memory_space<vmem>>, %arg9: memref<1x128xf32, #tpu.memory_space<vmem>>, %arg10: memref<32x128xf32, #tpu.memory_space<vmem>>) attributes {dimension_semantics = [#tpu.dimension_semantics<parallel>], iteration_bounds = array<i64: 4>, scalar_prefetch = 0 : i64, scratch_operands = 0 : i64, tpu.core_type = #tpu.core_type<tc>, window_params = [{transform_indices = @transform_0, window_bounds = array<i64: 32, 128>}, {transform_indices = @transform_1, window_bounds = array<i64: 32, 128>}, {pipeline_mode = #tpu.pipeline_mode<synchronous>, transform_indices = @transform_2, window_bounds = array<i64: 128, 128>}, {pipeline_mode = #tpu.pipeline_mode<synchronous>, transform_indices = @transform_3, window_bounds = array<i64: 1, 128>}, {pipeline_mode = #tpu.pipeline_mode<synchronous>, transform_indices = @transform_4, window_bounds = array<i64: 1, 128>}, {pipeline_mode = #tpu.pipeline_mode<synchronous>, transform_indices = @transform_5, window_bounds = array<i64: 128, 512>}, {pipeline_mode = #tpu.pipeline_mode<synchronous>, transform_indices = @transform_6, window_bounds = array<i64: 1, 512>}, {pipeline_mode = #tpu.pipeline_mode<synchronous>, transform_indices = @transform_7, window_bounds = array<i64: 512, 128>}, {pipeline_mode = #tpu.pipeline_mode<synchronous>, transform_indices = @transform_8, window_bounds = array<i64: 1, 128>}, {transform_indices = @transform_9, window_bounds = array<i64: 32, 128>}]} {
    %c0 = arith.constant 0 : index
    %c0_0 = arith.constant 0 : index
    %0 = vector.load %arg1[%c0, %c0_0] : memref<32x128xf32, #tpu.memory_space<vmem>>, vector<32x128xf32>
    %c0_1 = arith.constant 0 : index
    %c0_2 = arith.constant 0 : index
    %1 = vector.load %arg2[%c0_1, %c0_2] : memref<32x128xf32, #tpu.memory_space<vmem>>, vector<32x128xf32>
    %2 = arith.addf %0, %1 : vector<32x128xf32>
    %c0_3 = arith.constant 0 : index
    %c0_4 = arith.constant 0 : index
    %3 = vector.load %arg3[%c0_3, %c0_4] : memref<128x128xf32, #tpu.memory_space<vmem>>, vector<128x128xf32>
    %cst = arith.constant dense<0.000000e+00> : vector<32x128xf32>
    %4 = tpu.matmul %2, %3, %cst {dimension_numbers = #tpu.dot_dimension_numbers<[1], [0], [0], [1], [0, 0, 1, 1], [], []>} : vector<32x128xf32>, vector<128x128xf32>, vector<32x128xf32> -> vector<32x128xf32>
    %5 = arith.mulf %2, %2 : vector<32x128xf32>
    %cst_5 = arith.constant dense<0.000000e+00> : vector<32x128xf32>
    %6 = tpu.matmul %5, %3, %cst_5 {dimension_numbers = #tpu.dot_dimension_numbers<[1], [0], [0], [1], [0, 0, 1, 1], [], []>} : vector<32x128xf32>, vector<128x128xf32>, vector<32x128xf32> -> vector<32x128xf32>
    %7 = arith.mulf %4, %4 : vector<32x128xf32>
    %8 = arith.subf %6, %7 : vector<32x128xf32>
    %9 = arith.subf %2, %4 : vector<32x128xf32>
    %cst_6 = arith.constant 9.99999974E-6 : f32
    %10 = vector.broadcast %cst_6 : f32 to vector<32x128xf32>
    %11 = arith.addf %8, %10 : vector<32x128xf32>
    %12 = math.rsqrt %11 : vector<32x128xf32>
    %13 = arith.mulf %9, %12 : vector<32x128xf32>
    %c0_7 = arith.constant 0 : index
    %c0_8 = arith.constant 0 : index
    %14 = vector.load %arg4[%c0_7, %c0_8] : memref<1x128xf32, #tpu.memory_space<vmem>>, vector<1x128xf32>
    %15 = vector.broadcast %14 : vector<1x128xf32> to vector<32x128xf32>
    %16 = arith.mulf %13, %15 : vector<32x128xf32>
    %c0_9 = arith.constant 0 : index
    %c0_10 = arith.constant 0 : index
    %17 = vector.load %arg5[%c0_9, %c0_10] : memref<1x128xf32, #tpu.memory_space<vmem>>, vector<1x128xf32>
    %18 = vector.broadcast %17 : vector<1x128xf32> to vector<32x128xf32>
    %19 = arith.addf %16, %18 : vector<32x128xf32>
    %20 = arith.truncf %19 : vector<32x128xf32> to vector<32x128xbf16>
    %c0_11 = arith.constant 0 : index
    %c0_12 = arith.constant 0 : index
    %21 = vector.load %arg6[%c0_11, %c0_12] : memref<128x512xbf16, #tpu.memory_space<vmem>>, vector<128x512xbf16>
    %cst_13 = arith.constant dense<0.000000e+00> : vector<32x512xf32>
    %22 = tpu.matmul %20, %21, %cst_13 {dimension_numbers = #tpu.dot_dimension_numbers<[1], [0], [0], [1], [0, 0, 1, 1], [], []>} : vector<32x128xbf16>, vector<128x512xbf16>, vector<32x512xf32> -> vector<32x512xf32>
    %c0_14 = arith.constant 0 : index
    %c0_15 = arith.constant 0 : index
    %23 = vector.load %arg7[%c0_14, %c0_15] : memref<1x512xf32, #tpu.memory_space<vmem>>, vector<1x512xf32>
    %24 = vector.broadcast %23 : vector<1x512xf32> to vector<32x512xf32>
    %25 = arith.addf %22, %24 : vector<32x512xf32>
    %cst_16 = arith.constant 5.000000e-01 : f32
    %26 = vector.broadcast %cst_16 : f32 to vector<32x512xf32>
    %27 = arith.mulf %26, %25 : vector<32x512xf32>
    %cst_17 = arith.constant 0.707106769 : f32
    %28 = vector.broadcast %cst_17 : f32 to vector<32x512xf32>
    %29 = arith.mulf %25, %28 : vector<32x512xf32>
    %30 = math.erf %29 : vector<32x512xf32>
    %cst_18 = arith.constant 1.000000e+00 : f32
    %31 = vector.broadcast %cst_18 : f32 to vector<32x512xf32>
    %32 = arith.addf %31, %30 : vector<32x512xf32>
    %33 = arith.mulf %27, %32 : vector<32x512xf32>
    %34 = arith.truncf %33 : vector<32x512xf32> to vector<32x512xbf16>
    %c0_19 = arith.constant 0 : index
    %c0_20 = arith.constant 0 : index
    %35 = vector.load %arg8[%c0_19, %c0_20] : memref<512x128xbf16, #tpu.memory_space<vmem>>, vector<512x128xbf16>
    %cst_21 = arith.constant dense<0.000000e+00> : vector<32x128xf32>
    %36 = tpu.matmul %34, %35, %cst_21 {dimension_numbers = #tpu.dot_dimension_numbers<[1], [0], [0], [1], [0, 0, 1, 1], [], []>} : vector<32x512xbf16>, vector<512x128xbf16>, vector<32x128xf32> -> vector<32x128xf32>
    %c0_22 = arith.constant 0 : index
    %c0_23 = arith.constant 0 : index
    %37 = vector.load %arg9[%c0_22, %c0_23] : memref<1x128xf32, #tpu.memory_space<vmem>>, vector<1x128xf32>
    %38 = vector.broadcast %37 : vector<1x128xf32> to vector<32x128xf32>
    %39 = arith.addf %36, %38 : vector<32x128xf32>
    %40 = arith.addf %2, %39 : vector<32x128xf32>
    %c0_24 = arith.constant 0 : index
    %c0_25 = arith.constant 0 : index
    %41 = vector.load %arg10[%c0_24, %c0_25] : memref<32x128xf32, #tpu.memory_space<vmem>>, vector<32x128xf32>
    tpu.vector_store %arg10[%c0_24, %c0_25], %40 {strides = array<i32>} : memref<32x128xf32, #tpu.memory_space<vmem>>, vector<32x128xf32>,
    return
  }
  func.func @transform_0(%arg0: i32) -> (i32, i32) {
    %c0_i32 = arith.constant 0 : i32
    %c0_i32_0 = arith.constant 0 : i32
    return %arg0, %c0_i32 : i32, i32
  }
  func.func @transform_1(%arg0: i32) -> (i32, i32) {
    %c0_i32 = arith.constant 0 : i32
    %c0_i32_0 = arith.constant 0 : i32
    return %arg0, %c0_i32 : i32, i32
  }
  func.func @transform_2(%arg0: i32) -> (i32, i32) {
    %c0_i32 = arith.constant 0 : i32
    %c0_i32_0 = arith.constant 0 : i32
    %c0_i32_1 = arith.constant 0 : i32
    return %c0_i32, %c0_i32_0 : i32, i32
  }
  func.func @transform_3(%arg0: i32) -> (i32, i32) {
    %c0_i32 = arith.constant 0 : i32
    %c0_i32_0 = arith.constant 0 : i32
    %c0_i32_1 = arith.constant 0 : i32
    return %c0_i32, %c0_i32_0 : i32, i32
  }
  func.func @transform_4(%arg0: i32) -> (i32, i32) {
    %c0_i32 = arith.constant 0 : i32
    %c0_i32_0 = arith.constant 0 : i32
    %c0_i32_1 = arith.constant 0 : i32
    return %c0_i32, %c0_i32_0 : i32, i32
  }
  func.func @transform_5(%arg0: i32) -> (i32, i32) {
    %c0_i32 = arith.constant 0 : i32
    %c0_i32_0 = arith.constant 0 : i32
    %c0_i32_1 = arith.constant 0 : i32
    return %c0_i32, %c0_i32_0 : i32, i32
  }
  func.func @transform_6(%arg0: i32) -> (i32, i32) {
    %c0_i32 = arith.constant 0 : i32
    %c0_i32_0 = arith.constant 0 : i32
    %c0_i32_1 = arith.constant 0 : i32
    return %c0_i32, %c0_i32_0 : i32, i32
  }
  func.func @transform_7(%arg0: i32) -> (i32, i32) {
    %c0_i32 = arith.constant 0 : i32
    %c0_i32_0 = arith.constant 0 : i32
    %c0_i32_1 = arith.constant 0 : i32
    return %c0_i32, %c0_i32_0 : i32, i32
  }
  func.func @transform_8(%arg0: i32) -> (i32, i32) {
    %c0_i32 = arith.constant 0 : i32
    %c0_i32_0 = arith.constant 0 : i32
    %c0_i32_1 = arith.constant 0 : i32
    return %c0_i32, %c0_i32_0 : i32, i32
  }
  func.func @transform_9(%arg0: i32) -> (i32, i32) {
    %c0_i32 = arith.constant 0 : i32
    %c0_i32_0 = arith.constant 0 : i32
    return %arg0, %c0_i32 : i32, i32
  }
}

</mosaic_0001>

<llo_original>
// kernel: block_forward.2
$region0: #{block_forward.2}
  #allocation0 [shape = 'u32[]', space=smem, size = 0x4, offset = 0x4, fixed_abs, tag = 'smem constant byte address 0x4 - core index']
  #allocation1 [shape = 'u32[144,128]{1,0:T(1,128)}', space=vmem, size = 0x12000, scoped, tag = 'internal scratch']
  %s0 = inlined_call_operand.hbm [shape: f32[72,128], index: 0, kind: input, shape index: {}]
  %s1 = inlined_call_operand.hbm [shape: f32[72,128], index: 1, kind: input, shape index: {}]
  %s2 = inlined_call_operand.hbm [shape: bf16[256,256], index: 2, kind: input, shape index: {}]
  %s3 = inlined_call_operand.hbm [shape: bf16[256,256], index: 3, kind: input, shape index: {}]
  %s4 = inlined_call_operand.hbm [shape: f32[72,256], index: 4, kind: output, shape index: {}]
  %s5 = sld [smem:[#allocation0]]
  $region65: #{block_forward.2} parent=0
    _
  %s7 = ssub.s32 1, %s5
  %s8 = scalar_select 0, %s7, %s5
  $region1: #{block_forward.2} parent=0
    #allocation2 [shape = 'u8[8192]{0}', space=vmem, size = 0x2000, scoped, tag = 'input window, operand 0']
    #allocation3 [shape = 's32[2]{0}', space=sflag, size = 0x8, scoped, tag = 'scoped memory for block_forward.2']
    #allocation4 [shape = 's32[2]{0}', space=sflag, size = 0x8, scoped, tag = 'scoped memory for block_forward.2']
    #allocation5 [shape = 'u8[8192]{0}', space=vmem, size = 0x2000, scoped, tag = 'input window, operand 1']
    #allocation6 [shape = 's32[2]{0}', space=sflag, size = 0x8, scoped, tag = 'scoped memory for block_forward.2']
    #allocation7 [shape = 'u8[131072]{0}', space=vmem, size = 0x20000, scoped, tag = 'input window, operand 2, single buffered']
    #allocation8 [shape = 'u8[131072]{0}', space=vmem, size = 0x20000, scoped, tag = 'input window, operand 3, single buffered']
    #allocation9 [shape = 's32[1]{0}', space=sflag, size = 0x4, scoped, tag = 'scoped memory for block_forward.2']
    #allocation10 [shape = 'u8[16384]{0}', space=vmem, size = 0x4000, scoped, tag = 'output window, operand 0']
    %9 = vsyncpa [#allocation3], 0
    %s10 = scalar_lea.sflag [#allocation3], 1
    %11 = vsyncpa %s10, 0
    %12 = vsyncpa [#allocation6], 0
    %s13 = scalar_lea.sflag [#allocation6], 1
    %14 = vsyncpa %s13, 0
    %15 = vsyncpa [#allocation9], 0
    %16 = vsyncpa [#allocation4], 0
    %s17 = scalar_lea.sflag [#allocation4], 1
    %18 = vsyncpa %s17, 0
    loop: start=0, step=1, limit=11
    $region2: #{block_forward.2} parent=1 // loop_pre_header
      _
    $region3: #{block_forward.2} parent=1 // loop_header
      %s20 = sphi 0, %s24
      %p21 = scmp.ge.s32.totalorder %s20, 11
      %s30 = sphi 0, %s32
      %s33 = sphi 0, %s30
      %s34 = sphi 0, %s33
      %s50 = sphi 0, %s34
      %s56 = sphi 0, %s58
      %s59 = sphi 0, %s56
      %s60 = sphi 0, %s59
      %s76 = sphi 0, %s60
      %s80 = sphi 0, %s80
      %s82 = sphi 0, %s80
      %s83 = sphi 0, %s82
      %s97 = sphi 0, %s83
      %s101 = sphi 0, %s101
      %s103 = sphi 0, %s101
      %s104 = sphi 0, %s103
      %s118 = sphi 0, %s104
      %s124 = sphi 0, %s126
      %s127 = sphi 0, %s124
      %s128 = sphi 0, %s127
      %s144 = sphi 0, %s128
    $region4: #{block_forward.2} parent=1 // loop_header_branch
      %23 = sbr.rel (%p21) target = $region8
    $region5: #{block_forward.2} parent=1 // loop_body
      %s25 = ssub.s32 %s20, 1
      %s26 = ssub.s32 %s20, 2
      %s27 = sadd.s32 %s20, 1
      %s28 = ssub.s32 %s20, %s27
      %p29 = scmp.eq.s32.totalorder %s28, 0
      %s31 = sadd.s32 %s30, 1
      %s32 = scalar_select %p29, %s30, %s31
      %p35 = pneg %p29
      %p36 = scmp.eq.s32.totalorder %s20, 8
      %p37 = por %p35, %p36
      %p38 = scmp.ne.s32.totalorder %s30, %s33
      %p39 = scmp.eq.s32.totalorder %s20, 0
      %p40 = por %p38, %p39
      %p41 = scmp.ne.s32.totalorder %s30, %s33
      %p42 = scmp.eq.s32.totalorder %s25, 8
      %p43 = por %p41, %p42
      %p44 = scmp.ne.s32.totalorder %s33, %s34
      %p45 = scmp.eq.s32.totalorder %s25, 0
      %p46 = por %p44, %p45
      %p47 = scmp.ne.s32.totalorder %s33, %s34
      %p48 = scmp.eq.s32.totalorder %s26, 8
      %p49 = por %p47, %p48
      %p51 = scmp.ne.s32.totalorder %s34, %s50
      %p52 = scmp.eq.s32.totalorder %s26, 0
      %p53 = por %p51, %p52
      %s54 = ssub.s32 %s20, %s27
      %p55 = scmp.eq.s32.totalorder %s54, 0
      %s57 = sadd.s32 %s56, 1
      %s58 = scalar_select %p55, %s56, %s57
      %p61 = pneg %p55
      %p62 = scmp.eq.s32.totalorder %s20, 8
      %p63 = por %p61, %p62
      %p64 = scmp.ne.s32.totalorder %s56, %s59
      %p65 = scmp.eq.s32.totalorder %s20, 0
      %p66 = por %p64, %p65
      %p67 = scmp.ne.s32.totalorder %s56, %s59
      %p68 = scmp.eq.s32.totalorder %s25, 8
      %p69 = por %p67, %p68
      %p70 = scmp.ne.s32.totalorder %s59, %s60
      %p71 = scmp.eq.s32.totalorder %s25, 0
      %p72 = por %p70, %p71
      %p73 = scmp.ne.s32.totalorder %s59, %s60
      %p74 = scmp.eq.s32.totalorder %s26, 8
      %p75 = por %p73, %p74
      %p77 = scmp.ne.s32.totalorder %s60, %s76
      %p78 = scmp.eq.s32.totalorder %s26, 0
      %p79 = por %p77, %p78
      %s81 = sadd.s32 %s80, 1
      %p84 = scmp.eq.s32.totalorder %s20, 8
      %p85 = scmp.ne.s32.totalorder %s80, %s82
      %p86 = scmp.eq.s32.totalorder %s20, 0
      %p87 = por %p85, %p86
      %p88 = scmp.ne.s32.totalorder %s80, %s82
      %p89 = scmp.eq.s32.totalorder %s25, 8
      %p90 = por %p88, %p89
      %p91 = scmp.ne.s32.totalorder %s82, %s83
      %p92 = scmp.eq.s32.totalorder %s25, 0
      %p93 = por %p91, %p92
      %p94 = scmp.ne.s32.totalorder %s82, %s83
      %p95 = scmp.eq.s32.totalorder %s26, 8
      %p96 = por %p94, %p95
      %p98 = scmp.ne.s32.totalorder %s83, %s97
      %p99 = scmp.eq.s32.totalorder %s26, 0
      %p100 = por %p98, %p99
      %s102 = sadd.s32 %s101, 1
      %p105 = scmp.eq.s32.totalorder %s20, 8
      %p106 = scmp.ne.s32.totalorder %s101, %s103
      %p107 = scmp.eq.s32.totalorder %s20, 0
      %p108 = por %p106, %p107
      %p109 = scmp.ne.s32.totalorder %s101, %s103
      %p110 = scmp.eq.s32.totalorder %s25, 8
      %p111 = por %p109, %p110
      %p112 = scmp.ne.s32.totalorder %s103, %s104
      %p113 = scmp.eq.s32.totalorder %s25, 0
      %p114 = por %p112, %p113
      %p115 = scmp.ne.s32.totalorder %s103, %s104
      %p116 = scmp.eq.s32.totalorder %s26, 8
      %p117 = por %p115, %p116
      %p119 = scmp.ne.s32.totalorder %s104, %s118
      %p120 = scmp.eq.s32.totalorder %s26, 0
      %p121 = por %p119, %p120
      %s122 = ssub.s32 %s20, %s27
      %p123 = scmp.eq.s32.totalorder %s122, 0
      %s125 = sadd.s32 %s124, 1
      %s126 = scalar_select %p123, %s124, %s125
      %p129 = pneg %p123
      %p130 = scmp.eq.s32.totalorder %s20, 8
      %p131 = por %p129, %p130
      %p132 = scmp.ne.s32.totalorder %s124, %s127
      %p133 = scmp.eq.s32.totalorder %s20, 0
      %p134 = por %p132, %p133
      %p135 = scmp.ne.s32.totalorder %s124, %s127
      %p136 = scmp.eq.s32.totalorder %s25, 8
      %p137 = por %p135, %p136
      %p138 = scmp.ne.s32.totalorder %s127, %s128
      %p139 = scmp.eq.s32.totalorder %s25, 0
      %p140 = por %p138, %p139
      %p141 = scmp.ne.s32.totalorder %s127, %s128
      %p142 = scmp.eq.s32.totalorder %s26, 8
      %p143 = por %p141, %p142
      %p145 = scmp.ne.s32.totalorder %s128, %s144
      %p146 = scmp.eq.s32.totalorder %s26, 0
      %p147 = por %p145, %p146
      %p148 = scmp.le.s32.totalorder 1, %s20
      %p149 = scmp.lt.s32.totalorder %s20, 10
      %p150 = pnand %p148, %p149
      %p151 = pneg %p150
      // Predicated region
      $region9: #{block_forward.2} parent=5 // pred_check
        _
      $region10: #{block_forward.2} parent=5 // pred_check_branch
        %153 = sbr.rel (%p150) target = $region12
      $region11: #{block_forward.2} parent=5 // pred_region
        %s154 = ssub.s32 %s20, 1
        // Predicated region
        $region13: #{block_forward.2} parent=11 // pred_check
          %p155 = pneg %p93
        $region14: #{block_forward.2} parent=11 // pred_check_branch
          %157 = sbr.rel (%p155) target = $region16
        $region15: #{block_forward.2} parent=11 // pred_region
          %s159 = ssub.s32 4096, 4096
          %160 = vsyncadd [#allocation6], %s159
          %s161 = sshll.u32 [#allocation7], 4
          %s162 = int_to_ptr.vmem [resolvable:$true] %s161
          %167 = dma.hbm_to_vmem [thread:$0]  %s2, 4096, %s162, [#allocation6], 128, 128, 8
        $region16: #{block_forward.2} parent=11 // pred_fallthru
          _
        // Predicated region
        $region17: #{block_forward.2} parent=11 // pred_check
          %p168 = pneg %p114
        $region18: #{block_forward.2} parent=11 // pred_check_branch
          %170 = sbr.rel (%p168) target = $region20
        $region19: #{block_forward.2} parent=11 // pred_region
          %s172 = ssub.s32 4096, 4096
          %173 = vsyncadd [#allocation9], %s172
          %s174 = sshll.u32 [#allocation8], 4
          %s175 = int_to_ptr.vmem [resolvable:$true] %s174
          %180 = dma.hbm_to_vmem [thread:$0]  %s3, 4096, %s175, [#allocation9], 128, 128, 8
        $region20: #{block_forward.2} parent=11 // pred_fallthru
          _
      $region12: #{block_forward.2} parent=5 // pred_fallthru
        _
      %p181 = scmp.lt.s32.totalorder %s20, 9
      // Predicated region
      $region21: #{block_forward.2} parent=5 // pred_check
        %p182 = pneg %p181
      $region22: #{block_forward.2} parent=5 // pred_check_branch
        %184 = sbr.rel (%p182) target = $region24
      $region23: #{block_forward.2} parent=5 // pred_region
        // Predicated region
        $region25: #{block_forward.2} parent=23 // pred_check
          %p185 = pneg %p40
        $region26: #{block_forward.2} parent=23 // pred_check_branch
          %187 = sbr.rel (%p185) target = $region28
        $region27: #{block_forward.2} parent=23 // pred_region
          %s188 = sand.u32 %s30, 1
          %s189 = scalar_lea.sflag [#allocation3], %s188
          %s190 = sand.u32 %s30, 1
          %s191 = smul.addr %s190, 8
          %s192 = scalar_lea.vmem [#allocation2], %s191
          %s194 = ssub.s32 128, 128
          %195 = vsyncadd %s189, %s194
          %s196 = smul.addr %s20, 128
          %s197 = scalar_lea.hbm %s0, %s196
          %s199 = sshll.u32 %s192, 4
          %s200 = int_to_ptr.vmem [resolvable:$true] %s199
          %202 = dma.hbm_to_vmem [thread:$0]  %s197, 128, %s200, %s189
        $region28: #{block_forward.2} parent=23 // pred_fallthru
          _
        // Predicated region
        $region29: #{block_forward.2} parent=23 // pred_check
          %p203 = pneg %p66
        $region30: #{block_forward.2} parent=23 // pred_check_branch
          %205 = sbr.rel (%p203) target = $region32
        $region31: #{block_forward.2} parent=23 // pred_region
          %s206 = sand.u32 %s20, 1
          %s207 = scalar_lea.sflag [#allocation6], %s206
          %s208 = sand.u32 %s56, 1
          %s209 = smul.addr %s208, 8
          %s210 = scalar_lea.vmem [#allocation5], %s209
          %s212 = ssub.s32 128, 128
          %213 = vsyncadd %s207, %s212
          %s214 = smul.addr %s20, 128
          %s215 = scalar_lea.hbm %s1, %s214
          %s217 = sshll.u32 %s210, 4
          %s218 = int_to_ptr.vmem [resolvable:$true] %s217
          %220 = dma.hbm_to_vmem [thread:$0]  %s215, 128, %s218, %s207
        $region32: #{block_forward.2} parent=23 // pred_fallthru
          _
      $region24: #{block_forward.2} parent=5 // pred_fallthru
        _
      %p221 = scmp.le.s32.totalorder 1, %s20
      %p222 = scmp.lt.s32.totalorder %s20, 10
      %p223 = pnand %p221, %p222
      %p224 = pneg %p223
      // Predicated region
      $region33: #{block_forward.2} parent=5 // pred_check
        _
      $region34: #{block_forward.2} parent=5 // pred_check_branch
        %226 = sbr.rel (%p223) target = $region36
      $region35: #{block_forward.2} parent=5 // pred_region
        %s227 = ssub.s32 %s20, 1
        %s228 = sand.u32 %s33, 1
        %s229 = scalar_lea.sflag [#allocation3], %s228
        %s230 = sand.u32 %s33, 1
        %s231 = smul.addr %s230, 8
        %s232 = scalar_lea.vmem [#allocation2], %s231
        // Predicated region
        $region37: #{block_forward.2} parent=35 // pred_check
          %p233 = pneg %p46
        $region38: #{block_forward.2} parent=35 // pred_check_branch
          %235 = sbr.rel (%p233) target = $region40
        $region39: #{block_forward.2} parent=35 // pred_region
          %236 = dma.done %s229, 128
        $region40: #{block_forward.2} parent=35 // pred_fallthru
          _
        %s237 = sand.u32 %s25, 1
        %s238 = scalar_lea.sflag [#allocation6], %s237
        %s239 = sand.u32 %s59, 1
        %s240 = smul.addr %s239, 8
        %s241 = scalar_lea.vmem [#allocation5], %s240
        // Predicated region
        $region41: #{block_forward.2} parent=35 // pred_check
          %p242 = pneg %p72
        $region42: #{block_forward.2} parent=35 // pred_check_branch
          %244 = sbr.rel (%p242) target = $region44
        $region43: #{block_forward.2} parent=35 // pred_region
          %245 = dma.done %s238, 128
        $region44: #{block_forward.2} parent=35 // pred_fallthru
          _
        // Predicated region
        $region45: #{block_forward.2} parent=35 // pred_check
          %p246 = pneg %p93
        $region46: #{block_forward.2} parent=35 // pred_check_branch
          %248 = sbr.rel (%p246) target = $region48
        $region47: #{block_forward.2} parent=35 // pred_region
          %249 = dma.done [#allocation6], 4096
        $region48: #{block_forward.2} parent=35 // pred_fallthru
          _
        // Predicated region
        $region49: #{block_forward.2} parent=35 // pred_check
          %p250 = pneg %p114
        $region50: #{block_forward.2} parent=35 // pred_check_branch
          %252 = sbr.rel (%p250) target = $region52
        $region51: #{block_forward.2} parent=35 // pred_region
          %253 = dma.done [#allocation9], 4096
        $region52: #{block_forward.2} parent=35 // pred_fallthru
          _
        %s254 = sand.u32 %s33, 1
        %s255 = scalar_lea.sflag [#allocation3], %s254
        %s256 = sand.u32 %s33, 1
        %s257 = smul.addr %s256, 8
        %s258 = scalar_lea.vmem [#allocation2], %s257
        %p259 = pneg %p46
        %p260 = pneg %p43
        %s261 = sand.u32 %s25, 1
        %s262 = scalar_lea.sflag [#allocation6], %s261
        %s263 = sand.u32 %s59, 1
        %s264 = smul.addr %s263, 8
        %s265 = scalar_lea.vmem [#allocation5], %s264
        %p266 = pneg %p72
        %p267 = pneg %p69
        %p268 = pneg %p93
        %p269 = pneg %p90
        %p270 = pneg %p114
        %p271 = pneg %p111
        %p272 = pneg %p140
        %p273 = pneg %p137
        %s274 = sand.u32 %s127, 1
        %s275 = scalar_lea.sflag [#allocation4], %s274
        %s276 = sand.u32 %s127, 1
        %s277 = smul.addr %s276, 16
        %s278 = scalar_lea.vmem [#allocation10], %s277
        %v279 = vld [vmem:[%s232] sm:$0xff]
        %v280 = vld [vmem:[%s241] sm:$0xff]
        %v281 = vpack.c.bf16 %v279, %v279
        %v282 = vpack.c.bf16 %v280, %v280
        %v283 = vld [vmem:[#allocation7] sm:$0xff]
        %v284 = vld [vmem:[#allocation7 + $0x8] sm:$0xff]
        %v285 = vld [vmem:[#allocation7 + $0x10] sm:$0xff]
        %v286 = vld [vmem:[#allocation7 + $0x18] sm:$0xff]
        %v287 = vld [vmem:[#allocation7 + $0x20] sm:$0xff]
        %v288 = vld [vmem:[#allocation7 + $0x28] sm:$0xff]
        %v289 = vld [vmem:[#allocation7 + $0x30] sm:$0xff]
        %v290 = vld [vmem:[#allocation7 + $0x38] sm:$0xff]
        %v291 = vld [vmem:[#allocation7 + $0x40] sm:$0xff]
        %v292 = vld [vmem:[#allocation7 + $0x48] sm:$0xff]
        %v293 = vld [vmem:[#allocation7 + $0x50] sm:$0xff]
        %v294 = vld [vmem:[#allocation7 + $0x58] sm:$0xff]
        %v295 = vld [vmem:[#allocation7 + $0x60] sm:$0xff]
        %v296 = vld [vmem:[#allocation7 + $0x68] sm:$0xff]
        %v297 = vld [vmem:[#allocation7 + $0x70] sm:$0xff]
        %v298 = vld [vmem:[#allocation7 + $0x78] sm:$0xff]
        %v299 = vld [vmem:[#allocation7 + $0x80] sm:$0xff]
        %v300 = vld [vmem:[#allocation7 + $0x88] sm:$0xff]
        %v301 = vld [vmem:[#allocation7 + $0x90] sm:$0xff]
        %v302 = vld [vmem:[#allocation7 + $0x98] sm:$0xff]
        %v303 = vld [vmem:[#allocation7 + $0xa0] sm:$0xff]
        %v304 = vld [vmem:[#allocation7 + $0xa8] sm:$0xff]
        %v305 = vld [vmem:[#allocation7 + $0xb0] sm:$0xff]
        %v306 = vld [vmem:[#allocation7 + $0xb8] sm:$0xff]
        %v307 = vld [vmem:[#allocation7 + $0xc0] sm:$0xff]
        %v308 = vld [vmem:[#allocation7 + $0xc8] sm:$0xff]
        %v309 = vld [vmem:[#allocation7 + $0xd0] sm:$0xff]
        %v310 = vld [vmem:[#allocation7 + $0xd8] sm:$0xff]
        %v311 = vld [vmem:[#allocation7 + $0xe0] sm:$0xff]
        %v312 = vld [vmem:[#allocation7 + $0xe8] sm:$0xff]
        %v313 = vld [vmem:[#allocation7 + $0xf0] sm:$0xff]
        %v314 = vld [vmem:[#allocation7 + $0xf8] sm:$0xff]
        %v347 = vunpack.c.l.b16 %v283
        %v348 = vunpack.c.h.b16 %v283
        %v349 = vunpack.c.l.b16 %v284
        %v350 = vunpack.c.h.b16 %v284
        %v351 = vunpack.c.l.b16 %v285
        %v352 = vunpack.c.h.b16 %v285
        %v353 = vunpack.c.l.b16 %v286
        %v354 = vunpack.c.h.b16 %v286
        %v355 = vunpack.c.l.b16 %v287
        %v356 = vunpack.c.h.b16 %v287
        %v357 = vunpack.c.l.b16 %v288
        %v358 = vunpack.c.h.b16 %v288
        %v359 = vunpack.c.l.b16 %v289
        %v360 = vunpack.c.h.b16 %v289
        %v361 = vunpack.c.l.b16 %v290
        %v362 = vunpack.c.h.b16 %v290
        %v363 = vunpack.c.l.b16 %v291
        %v364 = vunpack.c.h.b16 %v291
        %v365 = vunpack.c.l.b16 %v292
        %v366 = vunpack.c.h.b16 %v292
        %v367 = vunpack.c.l.b16 %v293
        %v368 = vunpack.c.h.b16 %v293
        %v369 = vunpack.c.l.b16 %v294
        %v370 = vunpack.c.h.b16 %v294
        %v371 = vunpack.c.l.b16 %v295
        %v372 = vunpack.c.h.b16 %v295
        %v373 = vunpack.c.l.b16 %v296
        %v374 = vunpack.c.h.b16 %v296
        %v375 = vunpack.c.l.b16 %v297
        %v376 = vunpack.c.h.b16 %v297
        %v377 = vunpack.c.l.b16 %v298
        %v378 = vunpack.c.h.b16 %v298
        %v379 = vunpack.c.l.b16 %v299
        %v380 = vunpack.c.h.b16 %v299
        %v381 = vunpack.c.l.b16 %v300
        %v382 = vunpack.c.h.b16 %v300
        %v383 = vunpack.c.l.b16 %v301
        %v384 = vunpack.c.h.b16 %v301
        %v385 = vunpack.c.l.b16 %v302
        %v386 = vunpack.c.h.b16 %v302
        %v387 = vunpack.c.l.b16 %v303
        %v388 = vunpack.c.h.b16 %v303
        %v389 = vunpack.c.l.b16 %v304
        %v390 = vunpack.c.h.b16 %v304
        %v391 = vunpack.c.l.b16 %v305
        %v392 = vunpack.c.h.b16 %v305
        %v393 = vunpack.c.l.b16 %v306
        %v394 = vunpack.c.h.b16 %v306
        %v395 = vunpack.c.l.b16 %v307
        %v396 = vunpack.c.h.b16 %v307
        %v397 = vunpack.c.l.b16 %v308
        %v398 = vunpack.c.h.b16 %v308
        %v399 = vunpack.c.l.b16 %v309
        %v400 = vunpack.c.h.b16 %v309
        %v401 = vunpack.c.l.b16 %v310
        %v402 = vunpack.c.h.b16 %v310
        %v403 = vunpack.c.l.b16 %v311
        %v404 = vunpack.c.h.b16 %v311
        %v405 = vunpack.c.l.b16 %v312
        %v406 = vunpack.c.h.b16 %v312
        %v407 = vunpack.c.l.b16 %v313
        %v408 = vunpack.c.h.b16 %v313
        %v409 = vunpack.c.l.b16 %v314
        %v410 = vunpack.c.h.b16 %v314
        %v411 = vpack.c.b16 %v349, %v347
        %v412 = vpack.c.b16 %v350, %v348
        %v413 = vpack.c.b16 %v353, %v351
        %v414 = vpack.c.b16 %v354, %v352
        %v415 = vpack.c.b16 %v357, %v355
        %v416 = vpack.c.b16 %v358, %v356
        %v417 = vpack.c.b16 %v361, %v359
        %v418 = vpack.c.b16 %v362, %v360
        %v419 = vpack.c.b16 %v365, %v363
        %v420 = vpack.c.b16 %v366, %v364
        %v421 = vpack.c.b16 %v369, %v367
        %v422 = vpack.c.b16 %v370, %v368
        %v423 = vpack.c.b16 %v373, %v371
        %v424 = vpack.c.b16 %v374, %v372
        %v425 = vpack.c.b16 %v377, %v375
        %v426 = vpack.c.b16 %v378, %v376
        %v427 = vpack.c.b16 %v381, %v379
        %v428 = vpack.c.b16 %v382, %v380
        %v429 = vpack.c.b16 %v385, %v383
        %v430 = vpack.c.b16 %v386, %v384
        %v431 = vpack.c.b16 %v389, %v387
        %v432 = vpack.c.b16 %v390, %v388
        %v433 = vpack.c.b16 %v393, %v391
        %v434 = vpack.c.b16 %v394, %v392
        %v435 = vpack.c.b16 %v397, %v395
        %v436 = vpack.c.b16 %v398, %v396
        %v437 = vpack.c.b16 %v401, %v399
        %v438 = vpack.c.b16 %v402, %v400
        %v439 = vpack.c.b16 %v405, %v403
        %v440 = vpack.c.b16 %v406, %v404
        %v441 = vpack.c.b16 %v409, %v407
        %v442 = vpack.c.b16 %v410, %v408
        %475 = vmatprep.subr.bf16.mxu0 %v412
        %476 = vmatpush1.bf16.msra.mxu0 %v411
        %477 = vmatprep.subr.bf16.mxu0 %v414
        %478 = vmatpush1.bf16.msra.mxu0 %v413
        %479 = vmatprep.subr.bf16.mxu0 %v416
        %480 = vmatpush1.bf16.msra.mxu0 %v415
        %481 = vmatprep.subr.bf16.mxu0 %v418
        %482 = vmatpush1.bf16.msra.mxu0 %v417
        %483 = vmatprep.subr.bf16.mxu0 %v420
        %484 = vmatpush1.bf16.msra.mxu0 %v419
        %485 = vmatprep.subr.bf16.mxu0 %v422
        %486 = vmatpush1.bf16.msra.mxu0 %v421
        %487 = vmatprep.subr.bf16.mxu0 %v424
        %488 = vmatpush1.bf16.msra.mxu0 %v423
        %489 = vmatprep.subr.bf16.mxu0 %v426
        %490 = vmatpush1.bf16.msra.mxu0 %v425
        %491 = vmatprep.subr.bf16.mxu0 %v428
        %492 = vmatpush1.bf16.msra.mxu0 %v427
        %493 = vmatprep.subr.bf16.mxu0 %v430
        %494 = vmatpush1.bf16.msra.mxu0 %v429
        %495 = vmatprep.subr.bf16.mxu0 %v432
        %496 = vmatpush1.bf16.msra.mxu0 %v431
        %497 = vmatprep.subr.bf16.mxu0 %v434
        %498 = vmatpush1.bf16.msra.mxu0 %v433
        %499 = vmatprep.subr.bf16.mxu0 %v436
        %500 = vmatpush1.bf16.msra.mxu0 %v435
        %501 = vmatprep.subr.bf16.mxu0 %v438
        %502 = vmatpush1.bf16.msra.mxu0 %v437
        %503 = vmatprep.subr.bf16.mxu0 %v440
        %504 = vmatpush1.bf16.msra.mxu0 %v439
        %505 = vmatprep.subr.bf16.mxu0 %v442
        %506 = vmatpush1.bf16.msra.mxu0 %v441
        %507 = vmatprep.mubr.bf16.mxu0 %v282
        %508 = vmatmul.mubr.bf16.gmra.mrb[0].mxu0 %v281
        %v509 = vpop.f32.mrb[0].mxu0
        %v510 = vadd.f32 0.0, %v509
        %v511 = vpop.f32.mrb[0].mxu0
        %v512 = vadd.f32 0.0, %v511
        %v513 = vpop.f32.mrb[0].mxu0
        %v514 = vpop.f32.mrb[0].mxu0
        %515 = vdwg.mxu0
        %v516 = vmul.f32 %v510, 0.5
        %v517 = vmul.f32 %v512, 0.5
        %v518 = vmul.f32 %v510, 0.70710677
        %v519 = vmul.f32 %v512, 0.70710677
        %v520 = verf.f32.pop %v518
        %v521 = verf.f32.pop %v519
        %v522 = vadd.f32 %v520, 1.0
        %v523 = vadd.f32 %v521, 1.0
        %v524 = vmul.f32 %v516, %v522
        %v525 = vmul.f32 %v517, %v523
        %v526 = vpack.c.bf16 %v524, %v524
        %v527 = vpack.c.bf16 %v525, %v525
        %v528 = vld [vmem:[#allocation8] sm:$0xff]
        %v529 = vld [vmem:[#allocation8 + $0x8] sm:$0xff]
        %v530 = vld [vmem:[#allocation8 + $0x10] sm:$0xff]
        %v531 = vld [vmem:[#allocation8 + $0x18] sm:$0xff]
        %v532 = vld [vmem:[#allocation8 + $0x20] sm:$0xff]
        %v533 = vld [vmem:[#allocation8 + $0x28] sm:$0xff]
        %v534 = vld [vmem:[#allocation8 + $0x30] sm:$0xff]
        %v535 = vld [vmem:[#allocation8 + $0x38] sm:$0xff]
        %v536 = vld [vmem:[#allocation8 + $0x40] sm:$0xff]
        %v537 = vld [vmem:[#allocation8 + $0x48] sm:$0xff]
        %v538 = vld [vmem:[#allocation8 + $0x50] sm:$0xff]
        %v539 = vld [vmem:[#allocation8 + $0x58] sm:$0xff]
        %v540 = vld [vmem:[#allocation8 + $0x60] sm:$0xff]
        %v541 = vld [vmem:[#allocation8 + $0x68] sm:$0xff]
        %v542 = vld [vmem:[#allocation8 + $0x70] sm:$0xff]
        %v543 = vld [vmem:[#allocation8 + $0x78] sm:$0xff]
        %v544 = vld [vmem:[#allocation8 + $0x80] sm:$0xff]
        %v545 = vld [vmem:[#allocation8 + $0x88] sm:$0xff]
        %v546 = vld [vmem:[#allocation8 + $0x90] sm:$0xff]
        %v547 = vld [vmem:[#allocation8 + $0x98] sm:$0xff]
        %v548 = vld [vmem:[#allocation8 + $0xa0] sm:$0xff]
        %v549 = vld [vmem:[#allocation8 + $0xa8] sm:$0xff]
        %v550 = vld [vmem:[#allocation8 + $0xb0] sm:$0xff]
        %v551 = vld [vmem:[#allocation8 + $0xb8] sm:$0xff]
        %v552 = vld [vmem:[#allocation8 + $0xc0] sm:$0xff]
        %v553 = vld [vmem:[#allocation8 + $0xc8] sm:$0xff]
        %v554 = vld [vmem:[#allocation8 + $0xd0] sm:$0xff]
        %v555 = vld [vmem:[#allocation8 + $0xd8] sm:$0xff]
        %v556 = vld [vmem:[#allocation8 + $0xe0] sm:$0xff]
        %v557 = vld [vmem:[#allocation8 + $0xe8] sm:$0xff]
        %v558 = vld [vmem:[#allocation8 + $0xf0] sm:$0xff]
        %v559 = vld [vmem:[#allocation8 + $0xf8] sm:$0xff]
        %v592 = vunpack.c.l.b16 %v528
        %v593 = vunpack.c.h.b16 %v528
        %v594 = vunpack.c.l.b16 %v529
        %v595 = vunpack.c.h.b16 %v529
        %v596 = vunpack.c.l.b16 %v530
        %v597 = vunpack.c.h.b16 %v530
        %v598 = vunpack.c.l.b16 %v531
        %v599 = vunpack.c.h.b16 %v531
        %v600 = vunpack.c.l.b16 %v532
        %v601 = vunpack.c.h.b16 %v532
        %v602 = vunpack.c.l.b16 %v533
        %v603 = vunpack.c.h.b16 %v533
        %v604 = vunpack.c.l.b16 %v534
        %v605 = vunpack.c.h.b16 %v534
        %v606 = vunpack.c.l.b16 %v535
        %v607 = vunpack.c.h.b16 %v535
        %v608 = vunpack.c.l.b16 %v536
        %v609 = vunpack.c.h.b16 %v536
        %v610 = vunpack.c.l.b16 %v537
        %v611 = vunpack.c.h.b16 %v537
        %v612 = vunpack.c.l.b16 %v538
        %v613 = vunpack.c.h.b16 %v538
        %v614 = vunpack.c.l.b16 %v539
        %v615 = vunpack.c.h.b16 %v539
        %v616 = vunpack.c.l.b16 %v540
        %v617 = vunpack.c.h.b16 %v540
        %v618 = vunpack.c.l.b16 %v541
        %v619 = vunpack.c.h.b16 %v541
        %v620 = vunpack.c.l.b16 %v542
        %v621 = vunpack.c.h.b16 %v542
        %v622 = vunpack.c.l.b16 %v543
        %v623 = vunpack.c.h.b16 %v543
        %v624 = vunpack.c.l.b16 %v544
        %v625 = vunpack.c.h.b16 %v544
        %v626 = vunpack.c.l.b16 %v545
        %v627 = vunpack.c.h.b16 %v545
        %v628 = vunpack.c.l.b16 %v546
        %v629 = vunpack.c.h.b16 %v546
        %v630 = vunpack.c.l.b16 %v547
        %v631 = vunpack.c.h.b16 %v547
        %v632 = vunpack.c.l.b16 %v548
        %v633 = vunpack.c.h.b16 %v548
        %v634 = vunpack.c.l.b16 %v549
        %v635 = vunpack.c.h.b16 %v549
        %v636 = vunpack.c.l.b16 %v550
        %v637 = vunpack.c.h.b16 %v550
        %v638 = vunpack.c.l.b16 %v551
        %v639 = vunpack.c.h.b16 %v551
        %v640 = vunpack.c.l.b16 %v552
        %v641 = vunpack.c.h.b16 %v552
        %v642 = vunpack.c.l.b16 %v553
        %v643 = vunpack.c.h.b16 %v553
        %v644 = vunpack.c.l.b16 %v554
        %v645 = vunpack.c.h.b16 %v554
        %v646 = vunpack.c.l.b16 %v555
        %v647 = vunpack.c.h.b16 %v555
        %v648 = vunpack.c.l.b16 %v556
        %v649 = vunpack.c.h.b16 %v556
        %v650 = vunpack.c.l.b16 %v557
        %v651 = vunpack.c.h.b16 %v557
        %v652 = vunpack.c.l.b16 %v558
        %v653 = vunpack.c.h.b16 %v558
        %v654 = vunpack.c.l.b16 %v559
        %v655 = vunpack.c.h.b16 %v559
        %v656 = vpack.c.b16 %v594, %v592
        %v657 = vpack.c.b16 %v595, %v593
        %v658 = vpack.c.b16 %v598, %v596
        %v659 = vpack.c.b16 %v599, %v597
        %v660 = vpack.c.b16 %v602, %v600
        %v661 = vpack.c.b16 %v603, %v601
        %v662 = vpack.c.b16 %v606, %v604
        %v663 = vpack.c.b16 %v607, %v605
        %v664 = vpack.c.b16 %v610, %v608
        %v665 = vpack.c.b16 %v611, %v609
        %v666 = vpack.c.b16 %v614, %v612
        %v667 = vpack.c.b16 %v615, %v613
        %v668 = vpack.c.b16 %v618, %v616
        %v669 = vpack.c.b16 %v619, %v617
        %v670 = vpack.c.b16 %v622, %v620
        %v671 = vpack.c.b16 %v623, %v621
        %v672 = vpack.c.b16 %v626, %v624
        %v673 = vpack.c.b16 %v627, %v625
        %v674 = vpack.c.b16 %v630, %v628
        %v675 = vpack.c.b16 %v631, %v629
        %v676 = vpack.c.b16 %v634, %v632
        %v677 = vpack.c.b16 %v635, %v633
        %v678 = vpack.c.b16 %v638, %v636
        %v679 = vpack.c.b16 %v639, %v637
        %v680 = vpack.c.b16 %v642, %v640
        %v681 = vpack.c.b16 %v643, %v641
        %v682 = vpack.c.b16 %v646, %v644
        %v683 = vpack.c.b16 %v647, %v645
        %v684 = vpack.c.b16 %v650, %v648
        %v685 = vpack.c.b16 %v651, %v649
        %v686 = vpack.c.b16 %v654, %v652
        %v687 = vpack.c.b16 %v655, %v653
        %720 = vmatprep.subr.bf16.mxu0 %v657
        %721 = vmatpush1.bf16.msra.mxu0 %v656
        %722 = vmatprep.subr.bf16.mxu0 %v659
        %723 = vmatpush1.bf16.msra.mxu0 %v658
        %724 = vmatprep.subr.bf16.mxu0 %v661
        %725 = vmatpush1.bf16.msra.mxu0 %v660
        %726 = vmatprep.subr.bf16.mxu0 %v663
        %727 = vmatpush1.bf16.msra.mxu0 %v662
        %728 = vmatprep.subr.bf16.mxu0 %v665
        %729 = vmatpush1.bf16.msra.mxu0 %v664
        %730 = vmatprep.subr.bf16.mxu0 %v667
        %731 = vmatpush1.bf16.msra.mxu0 %v666
        %732 = vmatprep.subr.bf16.mxu0 %v669
        %733 = vmatpush1.bf16.msra.mxu0 %v668
        %734 = vmatprep.subr.bf16.mxu0 %v671
        %735 = vmatpush1.bf16.msra.mxu0 %v670
        %736 = vmatprep.subr.bf16.mxu0 %v673
        %737 = vmatpush1.bf16.msra.mxu0 %v672
        %738 = vmatprep.subr.bf16.mxu0 %v675
        %739 = vmatpush1.bf16.msra.mxu0 %v674
        %740 = vmatprep.subr.bf16.mxu0 %v677
        %741 = vmatpush1.bf16.msra.mxu0 %v676
        %742 = vmatprep.subr.bf16.mxu0 %v679
        %743 = vmatpush1.bf16.msra.mxu0 %v678
        %744 = vmatprep.subr.bf16.mxu0 %v681
        %745 = vmatpush1.bf16.msra.mxu0 %v680
        %746 = vmatprep.subr.bf16.mxu0 %v683
        %747 = vmatpush1.bf16.msra.mxu0 %v682
        %748 = vmatprep.subr.bf16.mxu0 %v685
        %749 = vmatpush1.bf16.msra.mxu0 %v684
        %750 = vmatprep.subr.bf16.mxu0 %v687
        %751 = vmatpush1.bf16.msra.mxu0 %v686
        %752 = vmatprep.mubr.bf16.mxu0 %v527
        %753 = vmatmul.mubr.bf16.gmra.mrb[0].mxu0 %v526
        %v754 = vpop.f32.mrb[0].mxu0
        %v755 = vadd.f32 0.0, %v754
        %v756 = vpop.f32.mrb[0].mxu0
        %v757 = vadd.f32 0.0, %v756
        %v758 = vpop.f32.mrb[0].mxu0
        %v759 = vpop.f32.mrb[0].mxu0
        %760 = vdwg.mxu0
        %vm761 = vcmp.gt.f32.partialorder %v755, 0.01
        %vm762 = vcmp.gt.f32.partialorder %v757, 0.01
        %v763 = vsub.f32 %v755, 0.01
        %v764 = vsub.f32 %v757, 0.01
        %vm765 = vcmp.lt.f32.partialorder %v755, -0.01
        %vm766 = vcmp.lt.f32.partialorder %v757, -0.01
        %v767 = vadd.f32 %v755, 0.01
        %v768 = vadd.f32 %v757, 0.01
        %v769 = vsel %vm765, %v767, 0.0
        %v770 = vsel %vm766, %v768, 0.0
        %v771 = vsel %vm761, %v763, %v769
        %v772 = vsel %vm762, %v764, %v770
        %773 = vst [vmem:[%s278] sm:$0xff] %v771
        %774 = vst [vmem:[%s278 + $0x8] sm:$0xff] %v772
        %s775 = sand.u32 %s127, 1
        %s776 = scalar_lea.sflag [#allocation4], %s775
        %s777 = sand.u32 %s127, 1
        %s778 = smul.addr %s777, 16
        %s779 = scalar_lea.vmem [#allocation10], %s778
        // Predicated region
        $region53: #{block_forward.2} parent=35 // pred_check
          %p780 = pneg %p137
        $region54: #{block_forward.2} parent=35 // pred_check_branch
          %782 = sbr.rel (%p780) target = $region56
        $region55: #{block_forward.2} parent=35 // pred_region
          %s784 = ssub.s32 256, 256
          %785 = vsyncadd %s776, %s784
          %s786 = smul.addr %s25, 2
          %s787 = smul.addr %s786, 128
          %s788 = scalar_lea.hbm %s4, %s787
          %s790 = sshll.u32 %s779, 4
          %s791 = int_to_ptr.vmem [resolvable:$true] %s790
          %793 = dma.vmem_to_hbm [thread:$0]  %s791, 256, %s788, %s776
        $region56: #{block_forward.2} parent=35 // pred_fallthru
          _
      $region36: #{block_forward.2} parent=5 // pred_fallthru
        _
      %p794 = scmp.le.s32.totalorder 2, %s20
      // Predicated region
      $region57: #{block_forward.2} parent=5 // pred_check
        %p795 = pneg %p794
      $region58: #{block_forward.2} parent=5 // pred_check_branch
        %797 = sbr.rel (%p795) target = $region60
      $region59: #{block_forward.2} parent=5 // pred_region
        %s798 = ssub.s32 %s20, 2
        // Predicated region
        $region61: #{block_forward.2} parent=59 // pred_check
          %p799 = pneg %p143
        $region62: #{block_forward.2} parent=59 // pred_check_branch
          %801 = sbr.rel (%p799) target = $region64
        $region63: #{block_forward.2} parent=59 // pred_region
          %s802 = sand.u32 %s128, 1
          %s803 = scalar_lea.sflag [#allocation4], %s802
          %s804 = sand.u32 %s128, 1
          %s805 = smul.addr %s804, 16
          %s806 = scalar_lea.vmem [#allocation10], %s805
          %807 = dma.done %s803, 256
        $region64: #{block_forward.2} parent=59 // pred_fallthru
          _
      $region60: #{block_forward.2} parent=5 // pred_fallthru
        _
    $region6: #{block_forward.2} parent=1 // loop_footer
      %s24 = sadd.s32 1, %s20
    $region7: #{block_forward.2} parent=1 // loop_footer_branch
      %19 = sbr.rel target = $region3
    $region8: #{block_forward.2} parent=1 // loop_exit
      _
    %808 = vsyncpa [#allocation3], 1
    %s809 = scalar_lea.sflag [#allocation3], 1
    %810 = vsyncpa %s809, 1
    %811 = vsyncpa [#allocation6], 1
    %s812 = scalar_lea.sflag [#allocation6], 1
    %813 = vsyncpa %s812, 1
    %814 = vsyncpa [#allocation9], 1
    %815 = vsyncpa [#allocation4], 1
    %s816 = scalar_lea.sflag [#allocation4], 1
    %817 = vsyncpa %s816, 1

// kernel: reverse.1
$region0: #{reverse.1}
  #allocation0 [shape = 's32[1]{0}', space=sflag, size = 0x4, scoped, tag = 'scoped memory for reverse.1']
  %s0 = inlined_call_operand.vmem [shape: f32[2,32,16,7], index: 0, kind: input, shape index: {}]
  %s1 = inlined_call_operand.vmem [shape: f32[2,32,16,7], index: 1, kind: output, shape index: {}]
  %s2 = scalar_lea.vmem %s0, 96
  %v3 = vld [vmem:[%s2] sm:$0xff]
  %4 = vst [vmem:[%s1] sm:$0xff] %v3
  %s5 = scalar_lea.vmem %s0, 208
  %v6 = vld [vmem:[%s5] sm:$0xff]
  %s7 = scalar_lea.vmem %s1, 112
  %8 = vst [vmem:[%s7] sm:$0xff] %v6
  %s9 = scalar_lea.vmem %s0, 80
  %v10 = vld [vmem:[%s9] sm:$0xff]
  %s11 = scalar_lea.vmem %s1, 16
  %12 = vst [vmem:[%s11] sm:$0xff] %v10
  %s13 = scalar_lea.vmem %s0, 192
  %v14 = vld [vmem:[%s13] sm:$0xff]
  %s15 = scalar_lea.vmem %s1, 128
  %16 = vst [vmem:[%s15] sm:$0xff] %v14
  %s17 = scalar_lea.vmem %s0, 64
  %v18 = vld [vmem:[%s17] sm:$0xff]
  %s19 = scalar_lea.vmem %s1, 32
  %20 = vst [vmem:[%s19] sm:$0xff] %v18
  %s21 = scalar_lea.vmem %s0, 176
  %v22 = vld [vmem:[%s21] sm:$0xff]
  %s23 = scalar_lea.vmem %s1, 144
  %24 = vst [vmem:[%s23] sm:$0xff] %v22
  %s25 = scalar_lea.vmem %s0, 48
  %v26 = vld [vmem:[%s25] sm:$0xff]
  %s27 = scalar_lea.vmem %s1, 48
  %28 = vst [vmem:[%s27] sm:$0xff] %v26
  %s29 = scalar_lea.vmem %s0, 160
  %v30 = vld [vmem:[%s29] sm:$0xff]
  %s31 = scalar_lea.vmem %s1, 160
  %32 = vst [vmem:[%s31] sm:$0xff] %v30
  %s33 = scalar_lea.vmem %s0, 32
  %v34 = vld [vmem:[%s33] sm:$0xff]
  %s35 = scalar_lea.vmem %s1, 64
  %36 = vst [vmem:[%s35] sm:$0xff] %v34
  %s37 = scalar_lea.vmem %s0, 144
  %v38 = vld [vmem:[%s37] sm:$0xff]
  %s39 = scalar_lea.vmem %s1, 176
  %40 = vst [vmem:[%s39] sm:$0xff] %v38
  %s41 = scalar_lea.vmem %s0, 16
  %v42 = vld [vmem:[%s41] sm:$0xff]
  %s43 = scalar_lea.vmem %s1, 80
  %44 = vst [vmem:[%s43] sm:$0xff] %v42
  %s45 = scalar_lea.vmem %s0, 128
  %v46 = vld [vmem:[%s45] sm:$0xff]
  %s47 = scalar_lea.vmem %s1, 192
  %48 = vst [vmem:[%s47] sm:$0xff] %v46
  %v49 = vld [vmem:[%s0] sm:$0xff]
  %s50 = scalar_lea.vmem %s1, 96
  %51 = vst [vmem:[%s50] sm:$0xff] %v49
  %s52 = scalar_lea.vmem %s0, 112
  %v53 = vld [vmem:[%s52] sm:$0xff]
  %s54 = scalar_lea.vmem %s1, 208
  %55 = vst [vmem:[%s54] sm:$0xff] %v53
  %s56 = scalar_lea.vmem %s0, 104
  %v57 = vld [vmem:[%s56] sm:$0xff]
  %s58 = scalar_lea.vmem %s1, 8
  %59 = vst [vmem:[%s58] sm:$0xff] %v57
  %s60 = scalar_lea.vmem %s0, 216
  %v61 = vld [vmem:[%s60] sm:$0xff]
  %s62 = scalar_lea.vmem %s1, 120
  %63 = vst [vmem:[%s62] sm:$0xff] %v61
  %s64 = scalar_lea.vmem %s0, 88
  %v65 = vld [vmem:[%s64] sm:$0xff]
  %s66 = scalar_lea.vmem %s1, 24
  %67 = vst [vmem:[%s66] sm:$0xff] %v65
  %s68 = scalar_lea.vmem %s0, 200
  %v69 = vld [vmem:[%s68] sm:$0xff]
  %s70 = scalar_lea.vmem %s1, 136
  %71 = vst [vmem:[%s70] sm:$0xff] %v69
  %s72 = scalar_lea.vmem %s0, 72
  %v73 = vld [vmem:[%s72] sm:$0xff]
  %s74 = scalar_lea.vmem %s1, 40
  %75 = vst [vmem:[%s74] sm:$0xff] %v73
  %s76 = scalar_lea.vmem %s0, 184
  %v77 = vld [vmem:[%s76] sm:$0xff]
  %s78 = scalar_lea.vmem %s1, 152
  %79 = vst [vmem:[%s78] sm:$0xff] %v77
  %s80 = scalar_lea.vmem %s0, 56
  %v81 = vld [vmem:[%s80] sm:$0xff]
  %s82 = scalar_lea.vmem %s1, 56
  %83 = vst [vmem:[%s82] sm:$0xff] %v81
  %s84 = scalar_lea.vmem %s0, 168
  %v85 = vld [vmem:[%s84] sm:$0xff]
  %s86 = scalar_lea.vmem %s1, 168
  %87 = vst [vmem:[%s86] sm:$0xff] %v85
  %s88 = scalar_lea.vmem %s0, 40
  %v89 = vld [vmem:[%s88] sm:$0xff]
  %s90 = scalar_lea.vmem %s1, 72
  %91 = vst [vmem:[%s90] sm:$0xff] %v89
  %s92 = scalar_lea.vmem %s0, 152
  %v93 = vld [vmem:[%s92] sm:$0xff]
  %s94 = scalar_lea.vmem %s1, 184
  %95 = vst [vmem:[%s94] sm:$0xff] %v93
  %s96 = scalar_lea.vmem %s0, 24
  %v97 = vld [vmem:[%s96] sm:$0xff]
  %s98 = scalar_lea.vmem %s1, 88
  %99 = vst [vmem:[%s98] sm:$0xff] %v97
  %s100 = scalar_lea.vmem %s0, 136
  %v101 = vld [vmem:[%s100] sm:$0xff]
  %s102 = scalar_lea.vmem %s1, 200
  %103 = vst [vmem:[%s102] sm:$0xff] %v101
  %s104 = scalar_lea.vmem %s0, 8
  %v105 = vld [vmem:[%s104] sm:$0xff]
  %s106 = scalar_lea.vmem %s1, 104
  %107 = vst [vmem:[%s106] sm:$0xff] %v105
  %s108 = scalar_lea.vmem %s0, 120
  %v109 = vld [vmem:[%s108] sm:$0xff]
  %s110 = scalar_lea.vmem %s1, 216
  %111 = vst [vmem:[%s110] sm:$0xff] %v109

// kernel: block_forward.3
$region0: #{block_forward.3}
  #allocation0 [shape = 'u32[]', space=smem, size = 0x4, offset = 0x4, fixed_abs, tag = 'smem constant byte address 0x4 - core index']
  #allocation1 [shape = 'u32[144,128]{1,0:T(1,128)}', space=vmem, size = 0x12000, scoped, tag = 'internal scratch']
  %s0 = inlined_call_operand.hbm [shape: f32[128,128], index: 0, kind: input, shape index: {}, may-alias: {0,9}]
  %s1 = inlined_call_operand.hbm [shape: f32[128,128], index: 1, kind: input, shape index: {}]
  %s2 = inlined_call_operand.hbm [shape: f32[128,128], index: 2, kind: input, shape index: {}]
  %s3 = inlined_call_operand.hbm [shape: f32[1,128], index: 3, kind: input, shape index: {}]
  %s4 = inlined_call_operand.hbm [shape: f32[1,128], index: 4, kind: input, shape index: {}]
  %s5 = inlined_call_operand.hbm [shape: bf16[128,512], index: 5, kind: input, shape index: {}]
  %s6 = inlined_call_operand.hbm [shape: f32[1,512], index: 6, kind: input, shape index: {}]
  %s7 = inlined_call_operand.hbm [shape: bf16[512,128], index: 7, kind: input, shape index: {}]
  %s8 = inlined_call_operand.hbm [shape: f32[1,128], index: 8, kind: input, shape index: {}]
  %s9 = inlined_call_operand.hbm [shape: f32[128,128], index: 9, kind: output, shape index: {}, may-alias: {0,9}]
  %s10 = sld [smem:[#allocation0]]
  $region105: #{block_forward.3} parent=0
    _
  %s12 = ssub.s32 1, %s10
  %s13 = scalar_select 0, %s12, %s10
  $region1: #{block_forward.3} parent=0
    #allocation2 [shape = 'u8[32768]{0}', space=vmem, size = 0x8000, scoped, tag = 'input window, operand 0']
    #allocation3 [shape = 's32[2]{0}', space=sflag, size = 0x8, scoped, tag = 'scoped memory for block_forward.3']
    #allocation4 [shape = 's32[2]{0}', space=sflag, size = 0x8, scoped, tag = 'scoped memory for block_forward.3']
    #allocation5 [shape = 'u8[32768]{0}', space=vmem, size = 0x8000, scoped, tag = 'input window, operand 1']
    #allocation6 [shape = 's32[2]{0}', space=sflag, size = 0x8, scoped, tag = 'scoped memory for block_forward.3']
    #allocation7 [shape = 'u8[65536]{0}', space=vmem, size = 0x10000, scoped, tag = 'input window, operand 2, single buffered']
    #allocation8 [shape = 'u8[512]{0}', space=vmem, size = 0x400, scoped, tag = 'input window, operand 3, single buffered']
    #allocation9 [shape = 's32[1]{0}', space=sflag, size = 0x4, scoped, tag = 'scoped memory for block_forward.3']
    #allocation10 [shape = 'u8[512]{0}', space=vmem, size = 0x400, scoped, tag = 'input window, operand 4, single buffered']
    #allocation11 [shape = 'u8[131072]{0}', space=vmem, size = 0x20000, scoped, tag = 'input window, operand 5, single buffered']
    #allocation12 [shape = 's32[1]{0}', space=sflag, size = 0x4, scoped, tag = 'scoped memory for block_forward.3']
    #allocation13 [shape = 'u8[2048]{0}', space=vmem, size = 0x800, scoped, tag = 'input window, operand 6, single buffered']
    #allocation14 [shape = 'u8[131072]{0}', space=vmem, size = 0x20000, scoped, tag = 'input window, operand 7, single buffered']
    #allocation15 [shape = 's32[1]{0}', space=sflag, size = 0x4, scoped, tag = 'scoped memory for block_forward.3']
    #allocation16 [shape = 'u8[512]{0}', space=vmem, size = 0x400, scoped, tag = 'input window, operand 8, single buffered']
    #allocation17 [shape = 'u8[32768]{0}', space=vmem, size = 0x8000, scoped, tag = 'output window, operand 0']
    %14 = vsyncpa [#allocation3], 0
    %s15 = scalar_lea.sflag [#allocation3], 1
    %16 = vsyncpa %s15, 0
    %17 = vsyncpa [#allocation6], 0
    %s18 = scalar_lea.sflag [#allocation6], 1
    %19 = vsyncpa %s18, 0
    %20 = vsyncpa [#allocation9], 0
    %21 = vsyncpa [#allocation12], 0
    %22 = vsyncpa [#allocation15], 0
    %23 = vsyncpa [#allocation4], 0
    %s24 = scalar_lea.sflag [#allocation4], 1
    %25 = vsyncpa %s24, 0
    loop: start=0, step=1, limit=6
    $region2: #{block_forward.3} parent=1 // loop_pre_header
      _
    $region3: #{block_forward.3} parent=1 // loop_header
      %s27 = sphi 0, %s31
      %p28 = scmp.ge.s32.totalorder %s27, 6
      %s37 = sphi 0, %s39
      %s40 = sphi 0, %s37
      %s41 = sphi 0, %s40
      %s57 = sphi 0, %s41
      %s63 = sphi 0, %s65
      %s66 = sphi 0, %s63
      %s67 = sphi 0, %s66
      %s83 = sphi 0, %s67
      %s87 = sphi 0, %s87
      %s89 = sphi 0, %s87
      %s90 = sphi 0, %s89
      %s104 = sphi 0, %s90
      %s108 = sphi 0, %s108
      %s110 = sphi 0, %s108
      %s111 = sphi 0, %s110
      %s125 = sphi 0, %s111
      %s129 = sphi 0, %s129
      %s131 = sphi 0, %s129
      %s132 = sphi 0, %s131
      %s146 = sphi 0, %s132
      %s150 = sphi 0, %s150
      %s152 = sphi 0, %s150
      %s153 = sphi 0, %s152
      %s167 = sphi 0, %s153
      %s171 = sphi 0, %s171
      %s173 = sphi 0, %s171
      %s174 = sphi 0, %s173
      %s188 = sphi 0, %s174
      %s192 = sphi 0, %s192
      %s194 = sphi 0, %s192
      %s195 = sphi 0, %s194
      %s209 = sphi 0, %s195
      %s213 = sphi 0, %s213
      %s215 = sphi 0, %s213
      %s216 = sphi 0, %s215
      %s230 = sphi 0, %s216
      %s236 = sphi 0, %s238
      %s239 = sphi 0, %s236
      %s240 = sphi 0, %s239
      %s256 = sphi 0, %s240
    $region4: #{block_forward.3} parent=1 // loop_header_branch
      %30 = sbr.rel (%p28) target = $region8
    $region5: #{block_forward.3} parent=1 // loop_body
      %s32 = ssub.s32 %s27, 1
      %s33 = ssub.s32 %s27, 2
      %s34 = sadd.s32 %s27, 1
      %s35 = ssub.s32 %s27, %s34
      %p36 = scmp.eq.s32.totalorder %s35, 0
      %s38 = sadd.s32 %s37, 1
      %s39 = scalar_select %p36, %s37, %s38
      %p42 = pneg %p36
      %p43 = scmp.eq.s32.totalorder %s27, 3
      %p44 = por %p42, %p43
      %p45 = scmp.ne.s32.totalorder %s37, %s40
      %p46 = scmp.eq.s32.totalorder %s27, 0
      %p47 = por %p45, %p46
      %p48 = scmp.ne.s32.totalorder %s37, %s40
      %p49 = scmp.eq.s32.totalorder %s32, 3
      %p50 = por %p48, %p49
      %p51 = scmp.ne.s32.totalorder %s40, %s41
      %p52 = scmp.eq.s32.totalorder %s32, 0
      %p53 = por %p51, %p52
      %p54 = scmp.ne.s32.totalorder %s40, %s41
      %p55 = scmp.eq.s32.totalorder %s33, 3
      %p56 = por %p54, %p55
      %p58 = scmp.ne.s32.totalorder %s41, %s57
      %p59 = scmp.eq.s32.totalorder %s33, 0
      %p60 = por %p58, %p59
      %s61 = ssub.s32 %s27, %s34
      %p62 = scmp.eq.s32.totalorder %s61, 0
      %s64 = sadd.s32 %s63, 1
      %s65 = scalar_select %p62, %s63, %s64
      %p68 = pneg %p62
      %p69 = scmp.eq.s32.totalorder %s27, 3
      %p70 = por %p68, %p69
      %p71 = scmp.ne.s32.totalorder %s63, %s66
      %p72 = scmp.eq.s32.totalorder %s27, 0
      %p73 = por %p71, %p72
      %p74 = scmp.ne.s32.totalorder %s63, %s66
      %p75 = scmp.eq.s32.totalorder %s32, 3
      %p76 = por %p74, %p75
      %p77 = scmp.ne.s32.totalorder %s66, %s67
      %p78 = scmp.eq.s32.totalorder %s32, 0
      %p79 = por %p77, %p78
      %p80 = scmp.ne.s32.totalorder %s66, %s67
      %p81 = scmp.eq.s32.totalorder %s33, 3
      %p82 = por %p80, %p81
      %p84 = scmp.ne.s32.totalorder %s67, %s83
      %p85 = scmp.eq.s32.totalorder %s33, 0
      %p86 = por %p84, %p85
      %s88 = sadd.s32 %s87, 1
      %p91 = scmp.eq.s32.totalorder %s27, 3
      %p92 = scmp.ne.s32.totalorder %s87, %s89
      %p93 = scmp.eq.s32.totalorder %s27, 0
      %p94 = por %p92, %p93
      %p95 = scmp.ne.s32.totalorder %s87, %s89
      %p96 = scmp.eq.s32.totalorder %s32, 3
      %p97 = por %p95, %p96
      %p98 = scmp.ne.s32.totalorder %s89, %s90
      %p99 = scmp.eq.s32.totalorder %s32, 0
      %p100 = por %p98, %p99
      %p101 = scmp.ne.s32.totalorder %s89, %s90
      %p102 = scmp.eq.s32.totalorder %s33, 3
      %p103 = por %p101, %p102
      %p105 = scmp.ne.s32.totalorder %s90, %s104
      %p106 = scmp.eq.s32.totalorder %s33, 0
      %p107 = por %p105, %p106
      %s109 = sadd.s32 %s108, 1
      %p112 = scmp.eq.s32.totalorder %s27, 3
      %p113 = scmp.ne.s32.totalorder %s108, %s110
      %p114 = scmp.eq.s32.totalorder %s27, 0
      %p115 = por %p113, %p114
      %p116 = scmp.ne.s32.totalorder %s108, %s110
      %p117 = scmp.eq.s32.totalorder %s32, 3
      %p118 = por %p116, %p117
      %p119 = scmp.ne.s32.totalorder %s110, %s111
      %p120 = scmp.eq.s32.totalorder %s32, 0
      %p121 = por %p119, %p120
      %p122 = scmp.ne.s32.totalorder %s110, %s111
      %p123 = scmp.eq.s32.totalorder %s33, 3
      %p124 = por %p122, %p123
      %p126 = scmp.ne.s32.totalorder %s111, %s125
      %p127 = scmp.eq.s32.totalorder %s33, 0
      %p128 = por %p126, %p127
      %s130 = sadd.s32 %s129, 1
      %p133 = scmp.eq.s32.totalorder %s27, 3
      %p134 = scmp.ne.s32.totalorder %s129, %s131
      %p135 = scmp.eq.s32.totalorder %s27, 0
      %p136 = por %p134, %p135
      %p137 = scmp.ne.s32.totalorder %s129, %s131
      %p138 = scmp.eq.s32.totalorder %s32, 3
      %p139 = por %p137, %p138
      %p140 = scmp.ne.s32.totalorder %s131, %s132
      %p141 = scmp.eq.s32.totalorder %s32, 0
      %p142 = por %p140, %p141
      %p143 = scmp.ne.s32.totalorder %s131, %s132
      %p144 = scmp.eq.s32.totalorder %s33, 3
      %p145 = por %p143, %p144
      %p147 = scmp.ne.s32.totalorder %s132, %s146
      %p148 = scmp.eq.s32.totalorder %s33, 0
      %p149 = por %p147, %p148
      %s151 = sadd.s32 %s150, 1
      %p154 = scmp.eq.s32.totalorder %s27, 3
      %p155 = scmp.ne.s32.totalorder %s150, %s152
      %p156 = scmp.eq.s32.totalorder %s27, 0
      %p157 = por %p155, %p156
      %p158 = scmp.ne.s32.totalorder %s150, %s152
      %p159 = scmp.eq.s32.totalorder %s32, 3
      %p160 = por %p158, %p159
      %p161 = scmp.ne.s32.totalorder %s152, %s153
      %p162 = scmp.eq.s32.totalorder %s32, 0
      %p163 = por %p161, %p162
      %p164 = scmp.ne.s32.totalorder %s152, %s153
      %p165 = scmp.eq.s32.totalorder %s33, 3
      %p166 = por %p164, %p165
      %p168 = scmp.ne.s32.totalorder %s153, %s167
      %p169 = scmp.eq.s32.totalorder %s33, 0
      %p170 = por %p168, %p169
      %s172 = sadd.s32 %s171, 1
      %p175 = scmp.eq.s32.totalorder %s27, 3
      %p176 = scmp.ne.s32.totalorder %s171, %s173
      %p177 = scmp.eq.s32.totalorder %s27, 0
      %p178 = por %p176, %p177
      %p179 = scmp.ne.s32.totalorder %s171, %s173
      %p180 = scmp.eq.s32.totalorder %s32, 3
      %p181 = por %p179, %p180
      %p182 = scmp.ne.s32.totalorder %s173, %s174
      %p183 = scmp.eq.s32.totalorder %s32, 0
      %p184 = por %p182, %p183
      %p185 = scmp.ne.s32.totalorder %s173, %s174
      %p186 = scmp.eq.s32.totalorder %s33, 3
      %p187 = por %p185, %p186
      %p189 = scmp.ne.s32.totalorder %s174, %s188
      %p190 = scmp.eq.s32.totalorder %s33, 0
      %p191 = por %p189, %p190
      %s193 = sadd.s32 %s192, 1
      %p196 = scmp.eq.s32.totalorder %s27, 3
      %p197 = scmp.ne.s32.totalorder %s192, %s194
      %p198 = scmp.eq.s32.totalorder %s27, 0
      %p199 = por %p197, %p198
      %p200 = scmp.ne.s32.totalorder %s192, %s194
      %p201 = scmp.eq.s32.totalorder %s32, 3
      %p202 = por %p200, %p201
      %p203 = scmp.ne.s32.totalorder %s194, %s195
      %p204 = scmp.eq.s32.totalorder %s32, 0
      %p205 = por %p203, %p204
      %p206 = scmp.ne.s32.totalorder %s194, %s195
      %p207 = scmp.eq.s32.totalorder %s33, 3
      %p208 = por %p206, %p207
      %p210 = scmp.ne.s32.totalorder %s195, %s209
      %p211 = scmp.eq.s32.totalorder %s33, 0
      %p212 = por %p210, %p211
      %s214 = sadd.s32 %s213, 1
      %p217 = scmp.eq.s32.totalorder %s27, 3
      %p218 = scmp.ne.s32.totalorder %s213, %s215
      %p219 = scmp.eq.s32.totalorder %s27, 0
      %p220 = por %p218, %p219
      %p221 = scmp.ne.s32.totalorder %s213, %s215
      %p222 = scmp.eq.s32.totalorder %s32, 3
      %p223 = por %p221, %p222
      %p224 = scmp.ne.s32.totalorder %s215, %s216
      %p225 = scmp.eq.s32.totalorder %s32, 0
      %p226 = por %p224, %p225
      %p227 = scmp.ne.s32.totalorder %s215, %s216
      %p228 = scmp.eq.s32.totalorder %s33, 3
      %p229 = por %p227, %p228
      %p231 = scmp.ne.s32.totalorder %s216, %s230
      %p232 = scmp.eq.s32.totalorder %s33, 0
      %p233 = por %p231, %p232
      %s234 = ssub.s32 %s27, %s34
      %p235 = scmp.eq.s32.totalorder %s234, 0
      %s237 = sadd.s32 %s236, 1
      %s238 = scalar_select %p235, %s236, %s237
      %p241 = pneg %p235
      %p242 = scmp.eq.s32.totalorder %s27, 3
      %p243 = por %p241, %p242
      %p244 = scmp.ne.s32.totalorder %s236, %s239
      %p245 = scmp.eq.s32.totalorder %s27, 0
      %p246 = por %p244, %p245
      %p247 = scmp.ne.s32.totalorder %s236, %s239
      %p248 = scmp.eq.s32.totalorder %s32, 3
      %p249 = por %p247, %p248
      %p250 = scmp.ne.s32.totalorder %s239, %s240
      %p251 = scmp.eq.s32.totalorder %s32, 0
      %p252 = por %p250, %p251
      %p253 = scmp.ne.s32.totalorder %s239, %s240
      %p254 = scmp.eq.s32.totalorder %s33, 3
      %p255 = por %p253, %p254
      %p257 = scmp.ne.s32.totalorder %s240, %s256
      %p258 = scmp.eq.s32.totalorder %s33, 0
      %p259 = por %p257, %p258
      %p260 = scmp.le.s32.totalorder 1, %s27
      %p261 = scmp.lt.s32.totalorder %s27, 5
      %p262 = pnand %p260, %p261
      %p263 = pneg %p262
      // Predicated region
      $region9: #{block_forward.3} parent=5 // pred_check
        _
      $region10: #{block_forward.3} parent=5 // pred_check_branch
        %265 = sbr.rel (%p262) target = $region12
      $region11: #{block_forward.3} parent=5 // pred_region
        %s266 = ssub.s32 %s27, 1
        // Predicated region
        $region13: #{block_forward.3} parent=11 // pred_check
          %p267 = pneg %p100
        $region14: #{block_forward.3} parent=11 // pred_check_branch
          %269 = sbr.rel (%p267) target = $region16
        $region15: #{block_forward.3} parent=11 // pred_region
          %s271 = ssub.s32 2048, 2048
          %272 = vsyncadd [#allocation6], %s271
          %s273 = sshll.u32 [#allocation7], 4
          %s274 = int_to_ptr.vmem [resolvable:$true] %s273
          %279 = dma.hbm_to_vmem [thread:$0]  %s2, 2048, %s274, [#allocation6], 128, 128, 8
        $region16: #{block_forward.3} parent=11 // pred_fallthru
          _
        // Predicated region
        $region17: #{block_forward.3} parent=11 // pred_check
          %p280 = pneg %p121
        $region18: #{block_forward.3} parent=11 // pred_check_branch
          %282 = sbr.rel (%p280) target = $region20
        $region19: #{block_forward.3} parent=11 // pred_region
          %s284 = ssub.s32 16, 16
          %285 = vsyncadd [#allocation9], %s284
          %s287 = sshll.u32 [#allocation8], 4
          %s288 = int_to_ptr.vmem [resolvable:$true] %s287
          %290 = dma.hbm_to_vmem [thread:$0]  %s3, 16, %s288, [#allocation9]
        $region20: #{block_forward.3} parent=11 // pred_fallthru
          _
        // Predicated region
        $region21: #{block_forward.3} parent=11 // pred_check
          %p291 = pneg %p142
        $region22: #{block_forward.3} parent=11 // pred_check_branch
          %293 = sbr.rel (%p291) target = $region24
        $region23: #{block_forward.3} parent=11 // pred_region
          %s295 = ssub.s32 16, 16
          %296 = vsyncadd [#allocation9], %s295
          %s298 = sshll.u32 [#allocation10], 4
          %s299 = int_to_ptr.vmem [resolvable:$true] %s298
          %301 = dma.hbm_to_vmem [thread:$0]  %s4, 16, %s299, [#allocation9]
        $region24: #{block_forward.3} parent=11 // pred_fallthru
          _
        // Predicated region
        $region25: #{block_forward.3} parent=11 // pred_check
          %p302 = pneg %p163
        $region26: #{block_forward.3} parent=11 // pred_check_branch
          %304 = sbr.rel (%p302) target = $region28
        $region27: #{block_forward.3} parent=11 // pred_region
          %s306 = ssub.s32 4096, 4096
          %307 = vsyncadd [#allocation12], %s306
          %s308 = sshll.u32 [#allocation11], 4
          %s309 = int_to_ptr.vmem [resolvable:$true] %s308
          %314 = dma.hbm_to_vmem [thread:$0]  %s5, 4096, %s309, [#allocation12], 256, 256, 16
        $region28: #{block_forward.3} parent=11 // pred_fallthru
          _
        // Predicated region
        $region29: #{block_forward.3} parent=11 // pred_check
          %p315 = pneg %p184
        $region30: #{block_forward.3} parent=11 // pred_check_branch
          %317 = sbr.rel (%p315) target = $region32
        $region31: #{block_forward.3} parent=11 // pred_region
          %s319 = ssub.s32 64, 64
          %320 = vsyncadd [#allocation12], %s319
          %s322 = sshll.u32 [#allocation13], 4
          %s323 = int_to_ptr.vmem [resolvable:$true] %s322
          %325 = dma.hbm_to_vmem [thread:$0]  %s6, 64, %s323, [#allocation12]
        $region32: #{block_forward.3} parent=11 // pred_fallthru
          _
        // Predicated region
        $region33: #{block_forward.3} parent=11 // pred_check
          %p326 = pneg %p205
        $region34: #{block_forward.3} parent=11 // pred_check_branch
          %328 = sbr.rel (%p326) target = $region36
        $region35: #{block_forward.3} parent=11 // pred_region
          %s330 = ssub.s32 4096, 4096
          %331 = vsyncadd [#allocation15], %s330
          %s332 = sshll.u32 [#allocation14], 4
          %s333 = int_to_ptr.vmem [resolvable:$true] %s332
          %338 = dma.hbm_to_vmem [thread:$0]  %s7, 4096, %s333, [#allocation15], 64, 64, 4
        $region36: #{block_forward.3} parent=11 // pred_fallthru
          _
        // Predicated region
        $region37: #{block_forward.3} parent=11 // pred_check
          %p339 = pneg %p226
        $region38: #{block_forward.3} parent=11 // pred_check_branch
          %341 = sbr.rel (%p339) target = $region40
        $region39: #{block_forward.3} parent=11 // pred_region
          %s343 = ssub.s32 16, 16
          %344 = vsyncadd [#allocation15], %s343
          %s346 = sshll.u32 [#allocation16], 4
          %s347 = int_to_ptr.vmem [resolvable:$true] %s346
          %349 = dma.hbm_to_vmem [thread:$0]  %s8, 16, %s347, [#allocation15]
        $region40: #{block_forward.3} parent=11 // pred_fallthru
          _
      $region12: #{block_forward.3} parent=5 // pred_fallthru
        _
      %p350 = scmp.lt.s32.totalorder %s27, 4
      // Predicated region
      $region41: #{block_forward.3} parent=5 // pred_check
        %p351 = pneg %p350
      $region42: #{block_forward.3} parent=5 // pred_check_branch
        %353 = sbr.rel (%p351) target = $region44
      $region43: #{block_forward.3} parent=5 // pred_region
        // Predicated region
        $region45: #{block_forward.3} parent=43 // pred_check
          %p354 = pneg %p47
        $region46: #{block_forward.3} parent=43 // pred_check_branch
          %356 = sbr.rel (%p354) target = $region48
        $region47: #{block_forward.3} parent=43 // pred_region
          %s357 = sand.u32 %s37, 1
          %s358 = scalar_lea.sflag [#allocation3], %s357
          %s359 = sand.u32 %s37, 1
          %s360 = smul.addr %s359, 32
          %s361 = scalar_lea.vmem [#allocation2], %s360
          %s362 = smul.u32 4, %s27
          %s364 = ssub.s32 512, 512
          %365 = vsyncadd %s358, %s364
          %s366 = smul.addr %s362, 128
          %s367 = scalar_lea.hbm %s0, %s366
          %s368 = sshll.u32 %s361, 4
          %s369 = int_to_ptr.vmem [resolvable:$true] %s368
          %374 = dma.hbm_to_vmem [thread:$0]  %s367, 512, %s369, %s358, 128, 128, 8
        $region48: #{block_forward.3} parent=43 // pred_fallthru
          _
        // Predicated region
        $region49: #{block_forward.3} parent=43 // pred_check
          %p375 = pneg %p73
        $region50: #{block_forward.3} parent=43 // pred_check_branch
          %377 = sbr.rel (%p375) target = $region52
        $region51: #{block_forward.3} parent=43 // pred_region
          %s378 = sand.u32 %s27, 1
          %s379 = scalar_lea.sflag [#allocation6], %s378
          %s380 = sand.u32 %s63, 1
          %s381 = smul.addr %s380, 32
          %s382 = scalar_lea.vmem [#allocation5], %s381
          %s383 = smul.u32 4, %s27
          %s385 = ssub.s32 512, 512
          %386 = vsyncadd %s379, %s385
          %s387 = smul.addr %s383, 128
          %s388 = scalar_lea.hbm %s1, %s387
          %s389 = sshll.u32 %s382, 4
          %s390 = int_to_ptr.vmem [resolvable:$true] %s389
          %395 = dma.hbm_to_vmem [thread:$0]  %s388, 512, %s390, %s379, 128, 128, 8
        $region52: #{block_forward.3} parent=43 // pred_fallthru
          _
      $region44: #{block_forward.3} parent=5 // pred_fallthru
        _
      %p396 = scmp.le.s32.totalorder 1, %s27
      %p397 = scmp.lt.s32.totalorder %s27, 5
      %p398 = pnand %p396, %p397
      %p399 = pneg %p398
      // Predicated region
      $region53: #{block_forward.3} parent=5 // pred_check
        _
      $region54: #{block_forward.3} parent=5 // pred_check_branch
        %401 = sbr.rel (%p398) target = $region56
      $region55: #{block_forward.3} parent=5 // pred_region
        %s402 = ssub.s32 %s27, 1
        %s403 = sand.u32 %s40, 1
        %s404 = scalar_lea.sflag [#allocation3], %s403
        %s405 = sand.u32 %s40, 1
        %s406 = smul.addr %s405, 32
        %s407 = scalar_lea.vmem [#allocation2], %s406
        // Predicated region
        $region57: #{block_forward.3} parent=55 // pred_check
          %p408 = pneg %p53
        $region58: #{block_forward.3} parent=55 // pred_check_branch
          %410 = sbr.rel (%p408) target = $region60
        $region59: #{block_forward.3} parent=55 // pred_region
          %411 = dma.done %s404, 512
        $region60: #{block_forward.3} parent=55 // pred_fallthru
          _
        %s412 = sand.u32 %s32, 1
        %s413 = scalar_lea.sflag [#allocation6], %s412
        %s414 = sand.u32 %s66, 1
        %s415 = smul.addr %s414, 32
        %s416 = scalar_lea.vmem [#allocation5], %s415
        // Predicated region
        $region61: #{block_forward.3} parent=55 // pred_check
          %p417 = pneg %p79
        $region62: #{block_forward.3} parent=55 // pred_check_branch
          %419 = sbr.rel (%p417) target = $region64
        $region63: #{block_forward.3} parent=55 // pred_region
          %420 = dma.done %s413, 512
        $region64: #{block_forward.3} parent=55 // pred_fallthru
          _
        // Predicated region
        $region65: #{block_forward.3} parent=55 // pred_check
          %p421 = pneg %p100
        $region66: #{block_forward.3} parent=55 // pred_check_branch
          %423 = sbr.rel (%p421) target = $region68
        $region67: #{block_forward.3} parent=55 // pred_region
          %424 = dma.done [#allocation6], 2048
        $region68: #{block_forward.3} parent=55 // pred_fallthru
          _
        // Predicated region
        $region69: #{block_forward.3} parent=55 // pred_check
          %p425 = pneg %p121
        $region70: #{block_forward.3} parent=55 // pred_check_branch
          %427 = sbr.rel (%p425) target = $region72
        $region71: #{block_forward.3} parent=55 // pred_region
          %428 = dma.done [#allocation9], 16
        $region72: #{block_forward.3} parent=55 // pred_fallthru
          _
        // Predicated region
        $region73: #{block_forward.3} parent=55 // pred_check
          %p429 = pneg %p142
        $region74: #{block_forward.3} parent=55 // pred_check_branch
          %431 = sbr.rel (%p429) target = $region76
        $region75: #{block_forward.3} parent=55 // pred_region
          %432 = dma.done [#allocation9], 16
        $region76: #{block_forward.3} parent=55 // pred_fallthru
          _
        // Predicated region
        $region77: #{block_forward.3} parent=55 // pred_check
          %p433 = pneg %p163
        $region78: #{block_forward.3} parent=55 // pred_check_branch
          %435 = sbr.rel (%p433) target = $region80
        $region79: #{block_forward.3} parent=55 // pred_region
          %436 = dma.done [#allocation12], 4096
        $region80: #{block_forward.3} parent=55 // pred_fallthru
          _
        // Predicated region
        $region81: #{block_forward.3} parent=55 // pred_check
          %p437 = pneg %p184
        $region82: #{block_forward.3} parent=55 // pred_check_branch
          %439 = sbr.rel (%p437) target = $region84
        $region83: #{block_forward.3} parent=55 // pred_region
          %440 = dma.done [#allocation12], 64
        $region84: #{block_forward.3} parent=55 // pred_fallthru
          _
        // Predicated region
        $region85: #{block_forward.3} parent=55 // pred_check
          %p441 = pneg %p205
        $region86: #{block_forward.3} parent=55 // pred_check_branch
          %443 = sbr.rel (%p441) target = $region88
        $region87: #{block_forward.3} parent=55 // pred_region
          %444 = dma.done [#allocation15], 4096
        $region88: #{block_forward.3} parent=55 // pred_fallthru
          _
        // Predicated region
        $region89: #{block_forward.3} parent=55 // pred_check
          %p445 = pneg %p226
        $region90: #{block_forward.3} parent=55 // pred_check_branch
          %447 = sbr.rel (%p445) target = $region92
        $region91: #{block_forward.3} parent=55 // pred_region
          %448 = dma.done [#allocation15], 16
        $region92: #{block_forward.3} parent=55 // pred_fallthru
          _
        %s449 = sand.u32 %s40, 1
        %s450 = scalar_lea.sflag [#allocation3], %s449
        %s451 = sand.u32 %s40, 1
        %s452 = smul.addr %s451, 32
        %s453 = scalar_lea.vmem [#allocation2], %s452
        %p454 = pneg %p53
        %p455 = pneg %p50
        %s456 = sand.u32 %s32, 1
        %s457 = scalar_lea.sflag [#allocation6], %s456
        %s458 = sand.u32 %s66, 1
        %s459 = smul.addr %s458, 32
        %s460 = scalar_lea.vmem [#allocation5], %s459
        %p461 = pneg %p79
        %p462 = pneg %p76
        %p463 = pneg %p100
        %p464 = pneg %p97
        %p465 = pneg %p121
        %p466 = pneg %p118
        %p467 = pneg %p142
        %p468 = pneg %p139
        %p469 = pneg %p163
        %p470 = pneg %p160
        %p471 = pneg %p184
        %p472 = pneg %p181
        %p473 = pneg %p205
        %p474 = pneg %p202
        %p475 = pneg %p226
        %p476 = pneg %p223
        %p477 = pneg %p252
        %p478 = pneg %p249
        %s479 = sand.u32 %s239, 1
        %s480 = scalar_lea.sflag [#allocation4], %s479
        %s481 = sand.u32 %s239, 1
        %s482 = smul.addr %s481, 32
        %s483 = scalar_lea.vmem [#allocation17], %s482
        %s484 = smul.u32 4, %s32
        %s485 = smul.u32 4, %s32
        %s486 = smul.u32 4, %s32
        %v488 = vld [vmem:[%s407] sm:$0xff]
        %v489 = vld [vmem:[%s407 + $0x8] sm:$0xff]
        %v490 = vld [vmem:[%s407 + $0x10] sm:$0xff]
        %v491 = vld [vmem:[%s407 + $0x18] sm:$0xff]
        %v492 = vld [vmem:[%s416] sm:$0xff]
        %v493 = vld [vmem:[%s416 + $0x8] sm:$0xff]
        %v494 = vld [vmem:[%s416 + $0x10] sm:$0xff]
        %v495 = vld [vmem:[%s416 + $0x18] sm:$0xff]
        %v496 = vadd.f32 %v488, %v492
        %v497 = vadd.f32 %v489, %v493
        %v498 = vadd.f32 %v490, %v494
        %v499 = vadd.f32 %v491, %v495
        %v500 = vld [vmem:[#allocation7] sm:$0xff]
        %v501 = vld [vmem:[#allocation7 + $0x8] sm:$0xff]
        %v502 = vld [vmem:[#allocation7 + $0x10] sm:$0xff]
        %v503 = vld [vmem:[#allocation7 + $0x18] sm:$0xff]
        %v504 = vld [vmem:[#allocation7 + $0x20] sm:$0xff]
        %v505 = vld [vmem:[#allocation7 + $0x28] sm:$0xff]
        %v506 = vld [vmem:[#allocation7 + $0x30] sm:$0xff]
        %v507 = vld [vmem:[#allocation7 + $0x38] sm:$0xff]
        %v508 = vld [vmem:[#allocation7 + $0x40] sm:$0xff]
        %v509 = vld [vmem:[#allocation7 + $0x48] sm:$0xff]
        %v510 = vld [vmem:[#allocation7 + $0x50] sm:$0xff]
        %v511 = vld [vmem:[#allocation7 + $0x58] sm:$0xff]
        %v512 = vld [vmem:[#allocation7 + $0x60] sm:$0xff]
        %v513 = vld [vmem:[#allocation7 + $0x68] sm:$0xff]
        %v514 = vld [vmem:[#allocation7 + $0x70] sm:$0xff]
        %v515 = vld [vmem:[#allocation7 + $0x78] sm:$0xff]
        %516 = vmatprep.subr.mxu0 0.0
        %517 = vmatpush1.msra.mxu0 %v500
        %518 = vmatprep.subr.mxu0 0.0
        %519 = vmatpush1.msra.mxu0 %v501
        %520 = vmatprep.subr.mxu0 0.0
        %521 = vmatpush1.msra.mxu0 %v502
        %522 = vmatprep.subr.mxu0 0.0
        %523 = vmatpush1.msra.mxu0 %v503
        %524 = vmatprep.subr.mxu0 0.0
        %525 = vmatpush1.msra.mxu0 %v504
        %526 = vmatprep.subr.mxu0 0.0
        %527 = vmatpush1.msra.mxu0 %v505
        %528 = vmatprep.subr.mxu0 0.0
        %529 = vmatpush1.msra.mxu0 %v506
        %530 = vmatprep.subr.mxu0 0.0
        %531 = vmatpush1.msra.mxu0 %v507
        %532 = vmatprep.subr.mxu0 0.0
        %533 = vmatpush1.msra.mxu0 %v508
        %534 = vmatprep.subr.mxu0 0.0
        %535 = vmatpush1.msra.mxu0 %v509
        %536 = vmatprep.subr.mxu0 0.0
        %537 = vmatpush1.msra.mxu0 %v510
        %538 = vmatprep.subr.mxu0 0.0
        %539 = vmatpush1.msra.mxu0 %v511
        %540 = vmatprep.subr.mxu0 0.0
        %541 = vmatpush1.msra.mxu0 %v512
        %542 = vmatprep.subr.mxu0 0.0
        %543 = vmatpush1.msra.mxu0 %v513
        %544 = vmatprep.subr.mxu0 0.0
        %545 = vmatpush1.msra.mxu0 %v514
        %546 = vmatprep.subr.mxu0 0.0
        %547 = vmatpush1.msra.mxu0 %v515
        %548 = vmatprep.subr.mxu0 0.0
        %549 = vmatpush1.msra.mxu0 0.0
        %550 = vmatprep.subr.mxu0 0.0
        %551 = vmatpush1.msra.mxu0 0.0
        %552 = vmatprep.subr.mxu0 0.0
        %553 = vmatpush1.msra.mxu0 0.0
        %554 = vmatprep.subr.mxu0 0.0
        %555 = vmatpush1.msra.mxu0 0.0
        %556 = vmatprep.subr.mxu0 0.0
        %557 = vmatpush1.msra.mxu0 0.0
        %558 = vmatprep.subr.mxu0 0.0
        %559 = vmatpush1.msra.mxu0 0.0
        %560 = vmatprep.subr.mxu0 0.0
        %561 = vmatpush1.msra.mxu0 0.0
        %562 = vmatprep.subr.mxu0 0.0
        %563 = vmatpush1.msra.mxu0 0.0
        %564 = vmatprep.subr.mxu0 0.0
        %565 = vmatpush1.msra.mxu0 0.0
        %566 = vmatprep.subr.mxu0 0.0
        %567 = vmatpush1.msra.mxu0 0.0
        %568 = vmatprep.subr.mxu0 0.0
        %569 = vmatpush1.msra.mxu0 0.0
        %570 = vmatprep.subr.mxu0 0.0
        %571 = vmatpush1.msra.mxu0 0.0
        %572 = vmatprep.subr.mxu0 0.0
        %573 = vmatpush1.msra.mxu0 0.0
        %574 = vmatprep.subr.mxu0 0.0
        %575 = vmatpush1.msra.mxu0 0.0
        %576 = vmatprep.subr.mxu0 0.0
        %577 = vmatpush1.msra.mxu0 0.0
        %578 = vmatprep.subr.mxu0 0.0
        %579 = vmatpush1.msra.mxu0 0.0
        %580 = vmatprep.mubr.f32.mxu0 0.0
        %581 = vmatmul.mubr.f32.gmra.mrb[0].mxu0 %v496
        %v582 = vpop.f32.mrb[0].mxu0
        %v583 = vadd.f32 0.0, %v582
        %v584 = vpop.f32.mrb[0].mxu0
        %585 = vmatprep.mubr.f32.mxu0 0.0
        %586 = vmatmul.mubr.f32.gmra.mrb[0].mxu0 %v497
        %v587 = vpop.f32.mrb[0].mxu0
        %v588 = vadd.f32 0.0, %v587
        %v589 = vpop.f32.mrb[0].mxu0
        %590 = vmatprep.mubr.f32.mxu0 0.0
        %591 = vmatmul.mubr.f32.gmra.mrb[0].mxu0 %v498
        %v592 = vpop.f32.mrb[0].mxu0
        %v593 = vadd.f32 0.0, %v592
        %v594 = vpop.f32.mrb[0].mxu0
        %595 = vmatprep.mubr.f32.mxu0 0.0
        %596 = vmatmul.mubr.f32.gmra.mrb[0].mxu0 %v499
        %v597 = vpop.f32.mrb[0].mxu0
        %v598 = vadd.f32 0.0, %v597
        %v599 = vpop.f32.mrb[0].mxu0
        %600 = vdwg.mxu0
        %v601 = vmul.f32 %v496, %v496
        %v602 = vmul.f32 %v497, %v497
        %v603 = vmul.f32 %v498, %v498
        %v604 = vmul.f32 %v499, %v499
        %605 = vmatprep.subr.mxu0 0.0
        %606 = vmatpush1.msra.mxu0 %v500
        %607 = vmatprep.subr.mxu0 0.0
        %608 = vmatpush1.msra.mxu0 %v501
        %609 = vmatprep.subr.mxu0 0.0
        %610 = vmatpush1.msra.mxu0 %v502
        %611 = vmatprep.subr.mxu0 0.0
        %612 = vmatpush1.msra.mxu0 %v503
        %613 = vmatprep.subr.mxu0 0.0
        %614 = vmatpush1.msra.mxu0 %v504
        %615 = vmatprep.subr.mxu0 0.0
        %616 = vmatpush1.msra.mxu0 %v505
        %617 = vmatprep.subr.mxu0 0.0
        %618 = vmatpush1.msra.mxu0 %v506
        %619 = vmatprep.subr.mxu0 0.0
        %620 = vmatpush1.msra.mxu0 %v507
        %621 = vmatprep.subr.mxu0 0.0
        %622 = vmatpush1.msra.mxu0 %v508
        %623 = vmatprep.subr.mxu0 0.0
        %624 = vmatpush1.msra.mxu0 %v509
        %625 = vmatprep.subr.mxu0 0.0
        %626 = vmatpush1.msra.mxu0 %v510
        %627 = vmatprep.subr.mxu0 0.0
        %628 = vmatpush1.msra.mxu0 %v511
        %629 = vmatprep.subr.mxu0 0.0
        %630 = vmatpush1.msra.mxu0 %v512
        %631 = vmatprep.subr.mxu0 0.0
        %632 = vmatpush1.msra.mxu0 %v513
        %633 = vmatprep.subr.mxu0 0.0
        %634 = vmatpush1.msra.mxu0 %v514
        %635 = vmatprep.subr.mxu0 0.0
        %636 = vmatpush1.msra.mxu0 %v515
        %637 = vmatprep.subr.mxu0 0.0
        %638 = vmatpush1.msra.mxu0 0.0
        %639 = vmatprep.subr.mxu0 0.0
        %640 = vmatpush1.msra.mxu0 0.0
        %641 = vmatprep.subr.mxu0 0.0
        %642 = vmatpush1.msra.mxu0 0.0
        %643 = vmatprep.subr.mxu0 0.0
        %644 = vmatpush1.msra.mxu0 0.0
        %645 = vmatprep.subr.mxu0 0.0
        %646 = vmatpush1.msra.mxu0 0.0
        %647 = vmatprep.subr.mxu0 0.0
        %648 = vmatpush1.msra.mxu0 0.0
        %649 = vmatprep.subr.mxu0 0.0
        %650 = vmatpush1.msra.mxu0 0.0
        %651 = vmatprep.subr.mxu0 0.0
        %652 = vmatpush1.msra.mxu0 0.0
        %653 = vmatprep.subr.mxu0 0.0
        %654 = vmatpush1.msra.mxu0 0.0
        %655 = vmatprep.subr.mxu0 0.0
        %656 = vmatpush1.msra.mxu0 0.0
        %657 = vmatprep.subr.mxu0 0.0
        %658 = vmatpush1.msra.mxu0 0.0
        %659 = vmatprep.subr.mxu0 0.0
        %660 = vmatpush1.msra.mxu0 0.0
        %661 = vmatprep.subr.mxu0 0.0
        %662 = vmatpush1.msra.mxu0 0.0
        %663 = vmatprep.subr.mxu0 0.0
        %664 = vmatpush1.msra.mxu0 0.0
        %665 = vmatprep.subr.mxu0 0.0
        %666 = vmatpush1.msra.mxu0 0.0
        %667 = vmatprep.subr.mxu0 0.0
        %668 = vmatpush1.msra.mxu0 0.0
        %669 = vmatprep.mubr.f32.mxu0 0.0
        %670 = vmatmul.mubr.f32.gmra.mrb[0].mxu0 %v601
        %v671 = vpop.f32.mrb[0].mxu0
        %v672 = vadd.f32 0.0, %v671
        %v673 = vpop.f32.mrb[0].mxu0
        %674 = vmatprep.mubr.f32.mxu0 0.0
        %675 = vmatmul.mubr.f32.gmra.mrb[0].mxu0 %v602
        %v676 = vpop.f32.mrb[0].mxu0
        %v677 = vadd.f32 0.0, %v676
        %v678 = vpop.f32.mrb[0].mxu0
        %679 = vmatprep.mubr.f32.mxu0 0.0
        %680 = vmatmul.mubr.f32.gmra.mrb[0].mxu0 %v603
        %v681 = vpop.f32.mrb[0].mxu0
        %v682 = vadd.f32 0.0, %v681
        %v683 = vpop.f32.mrb[0].mxu0
        %684 = vmatprep.mubr.f32.mxu0 0.0
        %685 = vmatmul.mubr.f32.gmra.mrb[0].mxu0 %v604
        %v686 = vpop.f32.mrb[0].mxu0
        %v687 = vadd.f32 0.0, %v686
        %v688 = vpop.f32.mrb[0].mxu0
        %689 = vdwg.mxu0
        %v690 = vmul.f32 %v583, %v583
        %v691 = vmul.f32 %v588, %v588
        %v692 = vmul.f32 %v593, %v593
        %v693 = vmul.f32 %v598, %v598
        %v694 = vsub.f32 %v672, %v690
        %v695 = vsub.f32 %v677, %v691
        %v696 = vsub.f32 %v682, %v692
        %v697 = vsub.f32 %v687, %v693
        %v698 = vsub.f32 %v496, %v583
        %v699 = vsub.f32 %v497, %v588
        %v700 = vsub.f32 %v498, %v593
        %v701 = vsub.f32 %v499, %v598
        %v702 = vadd.f32 %v694, 1e-05
        %v703 = vadd.f32 %v695, 1e-05
        %v704 = vadd.f32 %v696, 1e-05
        %v705 = vadd.f32 %v697, 1e-05
        %v706 = vrsqrt.pop %v702
        %v707 = vrsqrt.pop %v703
        %v708 = vrsqrt.pop %v704
        %v709 = vrsqrt.pop %v705
        %v710 = vmul.f32 %v698, %v706
        %v711 = vmul.f32 %v699, %v707
        %v712 = vmul.f32 %v700, %v708
        %v713 = vmul.f32 %v701, %v709
        %v714 = vld [vmem:[#allocation8] sm:$0x1]
        %v716 = vlaneseq
        %v717 = vshrl.u32 %v716, 7
        %v718 = vsub.s32 0, %v717
        %v719 = vrot.slane %v714, %v718
        %v721 = vmul.f32 %v710, %v719
        %v722 = vmul.f32 %v711, %v719
        %v723 = vmul.f32 %v712, %v719
        %v724 = vmul.f32 %v713, %v719
        %v725 = vld [vmem:[#allocation10] sm:$0x1]
        %v727 = vlaneseq
        %v728 = vshrl.u32 %v727, 7
        %v729 = vsub.s32 0, %v728
        %v730 = vrot.slane %v725, %v729
        %v732 = vadd.f32 %v721, %v730
        %v733 = vadd.f32 %v722, %v730
        %v734 = vadd.f32 %v723, %v730
        %v735 = vadd.f32 %v724, %v730
        %v736 = vpack.c.bf16 %v733, %v732
        %v737 = vpack.c.bf16 %v735, %v734
        %v738 = vld [vmem:[#allocation11] sm:$0xff]
        %v739 = vld [vmem:[#allocation11 + $0x8] sm:$0xff]
        %v740 = vld [vmem:[#allocation11 + $0x10] sm:$0xff]
        %v741 = vld [vmem:[#allocation11 + $0x18] sm:$0xff]
        %v742 = vld [vmem:[#allocation11 + $0x20] sm:$0xff]
        %v743 = vld [vmem:[#allocation11 + $0x28] sm:$0xff]
        %v744 = vld [vmem:[#allocation11 + $0x30] sm:$0xff]
        %v745 = vld [vmem:[#allocation11 + $0x38] sm:$0xff]
        %v746 = vld [vmem:[#allocation11 + $0x40] sm:$0xff]
        %v747 = vld [vmem:[#allocation11 + $0x48] sm:$0xff]
        %v748 = vld [vmem:[#allocation11 + $0x50] sm:$0xff]
        %v749 = vld [vmem:[#allocation11 + $0x58] sm:$0xff]
        %v750 = vld [vmem:[#allocation11 + $0x60] sm:$0xff]
        %v751 = vld [vmem:[#allocation11 + $0x68] sm:$0xff]
        %v752 = vld [vmem:[#allocation11 + $0x70] sm:$0xff]
        %v753 = vld [vmem:[#allocation11 + $0x78] sm:$0xff]
        %v754 = vld [vmem:[#allocation11 + $0x80] sm:$0xff]
        %v755 = vld [vmem:[#allocation11 + $0x88] sm:$0xff]
        %v756 = vld [vmem:[#allocation11 + $0x90] sm:$0xff]
        %v757 = vld [vmem:[#allocation11 + $0x98] sm:$0xff]
        %v758 = vld [vmem:[#allocation11 + $0xa0] sm:$0xff]
        %v759 = vld [vmem:[#allocation11 + $0xa8] sm:$0xff]
        %v760 = vld [vmem:[#allocation11 + $0xb0] sm:$0xff]
        %v761 = vld [vmem:[#allocation11 + $0xb8] sm:$0xff]
        %v762 = vld [vmem:[#allocation11 + $0xc0] sm:$0xff]
        %v763 = vld [vmem:[#allocation11 + $0xc8] sm:$0xff]
        %v764 = vld [vmem:[#allocation11 + $0xd0] sm:$0xff]
        %v765 = vld [vmem:[#allocation11 + $0xd8] sm:$0xff]
        %v766 = vld [vmem:[#allocation11 + $0xe0] sm:$0xff]
        %v767 = vld [vmem:[#allocation11 + $0xe8] sm:$0xff]
        %v768 = vld [vmem:[#allocation11 + $0xf0] sm:$0xff]
        %v769 = vld [vmem:[#allocation11 + $0xf8] sm:$0xff]
        %v770 = vld [vmem:[#allocation13] sm:$0xf]
        %v772 = vlaneseq
        %v773 = vshrl.u32 %v772, 7
        %v774 = vsub.s32 0, %v773
        %v775 = vrot.slane %v770, %v774
        %v776 = vlaneseq
        %v777 = vshrl.u32 %v776, 7
        %v778 = vsub.s32 1, %v777
        %v779 = vrot.slane %v770, %v778
        %v780 = vlaneseq
        %v781 = vshrl.u32 %v780, 7
        %v782 = vsub.s32 2, %v781
        %v783 = vrot.slane %v770, %v782
        %v784 = vlaneseq
        %v785 = vshrl.u32 %v784, 7
        %v786 = vsub.s32 3, %v785
        %v787 = vrot.slane %v770, %v786
        %v824 = vunpack.c.l.b16 %v738
        %v825 = vunpack.c.h.b16 %v738
        %v826 = vunpack.c.l.b16 %v739
        %v827 = vunpack.c.h.b16 %v739
        %v828 = vunpack.c.l.b16 %v740
        %v829 = vunpack.c.h.b16 %v740
        %v830 = vunpack.c.l.b16 %v741
        %v831 = vunpack.c.h.b16 %v741
        %v832 = vunpack.c.l.b16 %v742
        %v833 = vunpack.c.h.b16 %v742
        %v834 = vunpack.c.l.b16 %v743
        %v835 = vunpack.c.h.b16 %v743
        %v836 = vunpack.c.l.b16 %v744
        %v837 = vunpack.c.h.b16 %v744
        %v838 = vunpack.c.l.b16 %v745
        %v839 = vunpack.c.h.b16 %v745
        %v840 = vunpack.c.l.b16 %v746
        %v841 = vunpack.c.h.b16 %v746
        %v842 = vunpack.c.l.b16 %v747
        %v843 = vunpack.c.h.b16 %v747
        %v844 = vunpack.c.l.b16 %v748
        %v845 = vunpack.c.h.b16 %v748
        %v846 = vunpack.c.l.b16 %v749
        %v847 = vunpack.c.h.b16 %v749
        %v848 = vunpack.c.l.b16 %v750
        %v849 = vunpack.c.h.b16 %v750
        %v850 = vunpack.c.l.b16 %v751
        %v851 = vunpack.c.h.b16 %v751
        %v852 = vunpack.c.l.b16 %v752
        %v853 = vunpack.c.h.b16 %v752
        %v854 = vunpack.c.l.b16 %v753
        %v855 = vunpack.c.h.b16 %v753
        %v856 = vunpack.c.l.b16 %v754
        %v857 = vunpack.c.h.b16 %v754
        %v858 = vunpack.c.l.b16 %v755
        %v859 = vunpack.c.h.b16 %v755
        %v860 = vunpack.c.l.b16 %v756
        %v861 = vunpack.c.h.b16 %v756
        %v862 = vunpack.c.l.b16 %v757
        %v863 = vunpack.c.h.b16 %v757
        %v864 = vunpack.c.l.b16 %v758
        %v865 = vunpack.c.h.b16 %v758
        %v866 = vunpack.c.l.b16 %v759
        %v867 = vunpack.c.h.b16 %v759
        %v868 = vunpack.c.l.b16 %v760
        %v869 = vunpack.c.h.b16 %v760
        %v870 = vunpack.c.l.b16 %v761
        %v871 = vunpack.c.h.b16 %v761
        %v872 = vunpack.c.l.b16 %v762
        %v873 = vunpack.c.h.b16 %v762
        %v874 = vunpack.c.l.b16 %v763
        %v875 = vunpack.c.h.b16 %v763
        %v876 = vunpack.c.l.b16 %v764
        %v877 = vunpack.c.h.b16 %v764
        %v878 = vunpack.c.l.b16 %v765
        %v879 = vunpack.c.h.b16 %v765
        %v880 = vunpack.c.l.b16 %v766
        %v881 = vunpack.c.h.b16 %v766
        %v882 = vunpack.c.l.b16 %v767
        %v883 = vunpack.c.h.b16 %v767
        %v884 = vunpack.c.l.b16 %v768
        %v885 = vunpack.c.h.b16 %v768
        %v886 = vunpack.c.l.b16 %v769
        %v887 = vunpack.c.h.b16 %v769
        %v888 = vpack.c.b16 %v828, %v824
        %v889 = vpack.c.b16 %v829, %v825
        %v890 = vpack.c.b16 %v830, %v826
        %v891 = vpack.c.b16 %v831, %v827
        %v892 = vpack.c.b16 %v836, %v832
        %v893 = vpack.c.b16 %v837, %v833
        %v894 = vpack.c.b16 %v838, %v834
        %v895 = vpack.c.b16 %v839, %v835
        %v896 = vpack.c.b16 %v844, %v840
        %v897 = vpack.c.b16 %v845, %v841
        %v898 = vpack.c.b16 %v846, %v842
        %v899 = vpack.c.b16 %v847, %v843
        %v900 = vpack.c.b16 %v852, %v848
        %v901 = vpack.c.b16 %v853, %v849
        %v902 = vpack.c.b16 %v854, %v850
        %v903 = vpack.c.b16 %v855, %v851
        %v904 = vpack.c.b16 %v860, %v856
        %v905 = vpack.c.b16 %v861, %v857
        %v906 = vpack.c.b16 %v862, %v858
        %v907 = vpack.c.b16 %v863, %v859
        %v908 = vpack.c.b16 %v868, %v864
        %v909 = vpack.c.b16 %v869, %v865
        %v910 = vpack.c.b16 %v870, %v866
        %v911 = vpack.c.b16 %v871, %v867
        %v912 = vpack.c.b16 %v876, %v872
        %v913 = vpack.c.b16 %v877, %v873
        %v914 = vpack.c.b16 %v878, %v874
        %v915 = vpack.c.b16 %v879, %v875
        %v916 = vpack.c.b16 %v884, %v880
        %v917 = vpack.c.b16 %v885, %v881
        %v918 = vpack.c.b16 %v886, %v882
        %v919 = vpack.c.b16 %v887, %v883
        %952 = vmatprep.subr.bf16.mxu0 %v889
        %953 = vmatpush1.bf16.msra.mxu0 %v888
        %954 = vmatprep.subr.bf16.mxu0 %v893
        %955 = vmatpush1.bf16.msra.mxu0 %v892
        %956 = vmatprep.subr.bf16.mxu0 %v897
        %957 = vmatpush1.bf16.msra.mxu0 %v896
        %958 = vmatprep.subr.bf16.mxu0 %v901
        %959 = vmatpush1.bf16.msra.mxu0 %v900
        %960 = vmatprep.subr.bf16.mxu0 %v905
        %961 = vmatpush1.bf16.msra.mxu0 %v904
        %962 = vmatprep.subr.bf16.mxu0 %v909
        %963 = vmatpush1.bf16.msra.mxu0 %v908
        %964 = vmatprep.subr.bf16.mxu0 %v913
        %965 = vmatpush1.bf16.msra.mxu0 %v912
        %966 = vmatprep.subr.bf16.mxu0 %v917
        %967 = vmatpush1.bf16.msra.mxu0 %v916
        %968 = vmatprep.subr.bf16.mxu0 0
        %969 = vmatpush1.bf16.msra.mxu0 0
        %970 = vmatprep.subr.bf16.mxu0 0
        %971 = vmatpush1.bf16.msra.mxu0 0
        %972 = vmatprep.subr.bf16.mxu0 0
        %973 = vmatpush1.bf16.msra.mxu0 0
        %974 = vmatprep.subr.bf16.mxu0 0
        %975 = vmatpush1.bf16.msra.mxu0 0
        %976 = vmatprep.subr.bf16.mxu0 0
        %977 = vmatpush1.bf16.msra.mxu0 0
        %978 = vmatprep.subr.bf16.mxu0 0
        %979 = vmatpush1.bf16.msra.mxu0 0
        %980 = vmatprep.subr.bf16.mxu0 0
        %981 = vmatpush1.bf16.msra.mxu0 0
        %982 = vmatprep.subr.bf16.mxu0 0
        %983 = vmatpush1.bf16.msra.mxu0 0
        %984 = vmatprep.mubr.bf16.mxu0 0
        %985 = vmatmul.mubr.bf16.gmra.mrb[0].mxu0 %v736
        %v986 = vpop.f32.mrb[0].mxu0
        %v987 = vadd.f32 %v775, %v986
        %v988 = vpop.f32.mrb[0].mxu0
        %v989 = vadd.f32 %v779, %v988
        %v990 = vpop.f32.mrb[0].mxu0
        %v991 = vadd.f32 %v775, %v990
        %v992 = vpop.f32.mrb[0].mxu0
        %v993 = vadd.f32 %v779, %v992
        %994 = vmatprep.mubr.bf16.mxu0 0
        %995 = vmatmul.mubr.bf16.gmra.mrb[0].mxu0 %v737
        %v996 = vpop.f32.mrb[0].mxu0
        %v997 = vadd.f32 %v775, %v996
        %v998 = vpop.f32.mrb[0].mxu0
        %v999 = vadd.f32 %v779, %v998
        %v1000 = vpop.f32.mrb[0].mxu0
        %v1001 = vadd.f32 %v775, %v1000
        %v1002 = vpop.f32.mrb[0].mxu0
        %v1003 = vadd.f32 %v779, %v1002
        %1004 = vdwg.mxu0
        %1005 = vmatprep.subr.bf16.mxu0 %v891
        %1006 = vmatpush1.bf16.msra.mxu0 %v890
        %1007 = vmatprep.subr.bf16.mxu0 %v895
        %1008 = vmatpush1.bf16.msra.mxu0 %v894
        %1009 = vmatprep.subr.bf16.mxu0 %v899
        %1010 = vmatpush1.bf16.msra.mxu0 %v898
        %1011 = vmatprep.subr.bf16.mxu0 %v903
        %1012 = vmatpush1.bf16.msra.mxu0 %v902
        %1013 = vmatprep.subr.bf16.mxu0 %v907
        %1014 = vmatpush1.bf16.msra.mxu0 %v906
        %1015 = vmatprep.subr.bf16.mxu0 %v911
        %1016 = vmatpush1.bf16.msra.mxu0 %v910
        %1017 = vmatprep.subr.bf16.mxu0 %v915
        %1018 = vmatpush1.bf16.msra.mxu0 %v914
        %1019 = vmatprep.subr.bf16.mxu0 %v919
        %1020 = vmatpush1.bf16.msra.mxu0 %v918
        %1021 = vmatprep.subr.bf16.mxu0 0
        %1022 = vmatpush1.bf16.msra.mxu0 0
        %1023 = vmatprep.subr.bf16.mxu0 0
        %1024 = vmatpush1.bf16.msra.mxu0 0
        %1025 = vmatprep.subr.bf16.mxu0 0
        %1026 = vmatpush1.bf16.msra.mxu0 0
        %1027 = vmatprep.subr.bf16.mxu0 0
        %1028 = vmatpush1.bf16.msra.mxu0 0
        %1029 = vmatprep.subr.bf16.mxu0 0
        %1030 = vmatpush1.bf16.msra.mxu0 0
        %1031 = vmatprep.subr.bf16.mxu0 0
        %1032 = vmatpush1.bf16.msra.mxu0 0
        %1033 = vmatprep.subr.bf16.mxu0 0
        %1034 = vmatpush1.bf16.msra.mxu0 0
        %1035 = vmatprep.subr.bf16.mxu0 0
        %1036 = vmatpush1.bf16.msra.mxu0 0
        %1037 = vmatprep.mubr.bf16.mxu0 0
        %1038 = vmatmul.mubr.bf16.gmra.mrb[0].mxu0 %v736
        %v1039 = vpop.f32.mrb[0].mxu0
        %v1040 = vadd.f32 %v783, %v1039
        %v1041 = vpop.f32.mrb[0].mxu0
        %v1042 = vadd.f32 %v787, %v1041
        %v1043 = vpop.f32.mrb[0].mxu0
        %v1044 = vadd.f32 %v783, %v1043
        %v1045 = vpop.f32.mrb[0].mxu0
        %v1046 = vadd.f32 %v787, %v1045
        %1047 = vmatprep.mubr.bf16.mxu0 0
        %1048 = vmatmul.mubr.bf16.gmra.mrb[0].mxu0 %v737
        %v1049 = vpop.f32.mrb[0].mxu0
        %v1050 = vadd.f32 %v783, %v1049
        %v1051 = vpop.f32.mrb[0].mxu0
        %v1052 = vadd.f32 %v787, %v1051
        %v1053 = vpop.f32.mrb[0].mxu0
        %v1054 = vadd.f32 %v783, %v1053
        %v1055 = vpop.f32.mrb[0].mxu0
        %v1056 = vadd.f32 %v787, %v1055
        %1057 = vdwg.mxu0
        %v1058 = vmul.f32 %v987, 0.5
        %v1059 = vmul.f32 %v989, 0.5
        %v1060 = vmul.f32 %v1040, 0.5
        %v1061 = vmul.f32 %v1042, 0.5
        %v1062 = vmul.f32 %v991, 0.5
        %v1063 = vmul.f32 %v993, 0.5
        %v1064 = vmul.f32 %v1044, 0.5
        %v1065 = vmul.f32 %v1046, 0.5
        %v1066 = vmul.f32 %v997, 0.5
        %v1067 = vmul.f32 %v999, 0.5
        %v1068 = vmul.f32 %v1050, 0.5
        %v1069 = vmul.f32 %v1052, 0.5
        %v1070 = vmul.f32 %v1001, 0.5
        %v1071 = vmul.f32 %v1003, 0.5
        %v1072 = vmul.f32 %v1054, 0.5
        %v1073 = vmul.f32 %v1056, 0.5
        %v1074 = vmul.f32 %v987, 0.70710677
        %v1075 = vmul.f32 %v989, 0.70710677
        %v1076 = vmul.f32 %v1040, 0.70710677
        %v1077 = vmul.f32 %v1042, 0.70710677
        %v1078 = vmul.f32 %v991, 0.70710677
        %v1079 = vmul.f32 %v993, 0.70710677
        %v1080 = vmul.f32 %v1044, 0.70710677
        %v1081 = vmul.f32 %v1046, 0.70710677
        %v1082 = vmul.f32 %v997, 0.70710677
        %v1083 = vmul.f32 %v999, 0.70710677
        %v1084 = vmul.f32 %v1050, 0.70710677
        %v1085 = vmul.f32 %v1052, 0.70710677
        %v1086 = vmul.f32 %v1001, 0.70710677
        %v1087 = vmul.f32 %v1003, 0.70710677
        %v1088 = vmul.f32 %v1054, 0.70710677
        %v1089 = vmul.f32 %v1056, 0.70710677
        %v1090 = verf.f32.pop %v1074
        %v1091 = verf.f32.pop %v1075
        %v1092 = verf.f32.pop %v1076
        %v1093 = verf.f32.pop %v1077
        %v1094 = verf.f32.pop %v1078
        %v1095 = verf.f32.pop %v1079
        %v1096 = verf.f32.pop %v1080
        %v1097 = verf.f32.pop %v1081
        %v1098 = verf.f32.pop %v1082
        %v1099 = verf.f32.pop %v1083
        %v1100 = verf.f32.pop %v1084
        %v1101 = verf.f32.pop %v1085
        %v1102 = verf.f32.pop %v1086
        %v1103 = verf.f32.pop %v1087
        %v1104 = verf.f32.pop %v1088
        %v1105 = verf.f32.pop %v1089
        %v1106 = vadd.f32 %v1090, 1.0
        %v1107 = vadd.f32 %v1091, 1.0
        %v1108 = vadd.f32 %v1092, 1.0
        %v1109 = vadd.f32 %v1093, 1.0
        %v1110 = vadd.f32 %v1094, 1.0
        %v1111 = vadd.f32 %v1095, 1.0
        %v1112 = vadd.f32 %v1096, 1.0
        %v1113 = vadd.f32 %v1097, 1.0
        %v1114 = vadd.f32 %v1098, 1.0
        %v1115 = vadd.f32 %v1099, 1.0
        %v1116 = vadd.f32 %v1100, 1.0
        %v1117 = vadd.f32 %v1101, 1.0
        %v1118 = vadd.f32 %v1102, 1.0
        %v1119 = vadd.f32 %v1103, 1.0
        %v1120 = vadd.f32 %v1104, 1.0
        %v1121 = vadd.f32 %v1105, 1.0
        %v1122 = vmul.f32 %v1058, %v1106
        %v1123 = vmul.f32 %v1059, %v1107
        %v1124 = vmul.f32 %v1060, %v1108
        %v1125 = vmul.f32 %v1061, %v1109
        %v1126 = vmul.f32 %v1062, %v1110
        %v1127 = vmul.f32 %v1063, %v1111
        %v1128 = vmul.f32 %v1064, %v1112
        %v1129 = vmul.f32 %v1065, %v1113
        %v1130 = vmul.f32 %v1066, %v1114
        %v1131 = vmul.f32 %v1067, %v1115
        %v1132 = vmul.f32 %v1068, %v1116
        %v1133 = vmul.f32 %v1069, %v1117
        %v1134 = vmul.f32 %v1070, %v1118
        %v1135 = vmul.f32 %v1071, %v1119
        %v1136 = vmul.f32 %v1072, %v1120
        %v1137 = vmul.f32 %v1073, %v1121
        %v1138 = vpack.c.bf16 %v1126, %v1122
        %v1139 = vpack.c.bf16 %v1127, %v1123
        %v1140 = vpack.c.bf16 %v1128, %v1124
        %v1141 = vpack.c.bf16 %v1129, %v1125
        %v1142 = vpack.c.bf16 %v1134, %v1130
        %v1143 = vpack.c.bf16 %v1135, %v1131
        %v1144 = vpack.c.bf16 %v1136, %v1132
        %v1145 = vpack.c.bf16 %v1137, %v1133
        %v1146 = vld [vmem:[#allocation14] sm:$0xf]
        %v1147 = vld [vmem:[#allocation14 + $0x4] sm:$0xf]
        %v1148 = vld [vmem:[#allocation14 + $0x8] sm:$0xf]
        %v1149 = vld [vmem:[#allocation14 + $0xc] sm:$0xf]
        %v1150 = vld [vmem:[#allocation14 + $0x10] sm:$0xf]
        %v1151 = vld [vmem:[#allocation14 + $0x14] sm:$0xf]
        %v1152 = vld [vmem:[#allocation14 + $0x18] sm:$0xf]
        %v1153 = vld [vmem:[#allocation14 + $0x1c] sm:$0xf]
        %v1154 = vld [vmem:[#allocation14 + $0x20] sm:$0xf]
        %v1155 = vld [vmem:[#allocation14 + $0x24] sm:$0xf]
        %v1156 = vld [vmem:[#allocation14 + $0x28] sm:$0xf]
        %v1157 = vld [vmem:[#allocation14 + $0x2c] sm:$0xf]
        %v1158 = vld [vmem:[#allocation14 + $0x30] sm:$0xf]
        %v1159 = vld [vmem:[#allocation14 + $0x34] sm:$0xf]
        %v1160 = vld [vmem:[#allocation14 + $0x38] sm:$0xf]
        %v1161 = vld [vmem:[#allocation14 + $0x3c] sm:$0xf]
        %v1162 = vld [vmem:[#allocation14 + $0x40] sm:$0xf]
        %v1163 = vld [vmem:[#allocation14 + $0x44] sm:$0xf]
        %v1164 = vld [vmem:[#allocation14 + $0x48] sm:$0xf]
        %v1165 = vld [vmem:[#allocation14 + $0x4c] sm:$0xf]
        %v1166 = vld [vmem:[#allocation14 + $0x50] sm:$0xf]
        %v1167 = vld [vmem:[#allocation14 + $0x54] sm:$0xf]
        %v1168 = vld [vmem:[#allocation14 + $0x58] sm:$0xf]
        %v1169 = vld [vmem:[#allocation14 + $0x5c] sm:$0xf]
        %v1170 = vld [vmem:[#allocation14 + $0x60] sm:$0xf]
        %v1171 = vld [vmem:[#allocation14 + $0x64] sm:$0xf]
        %v1172 = vld [vmem:[#allocation14 + $0x68] sm:$0xf]
        %v1173 = vld [vmem:[#allocation14 + $0x6c] sm:$0xf]
        %v1174 = vld [vmem:[#allocation14 + $0x70] sm:$0xf]
        %v1175 = vld [vmem:[#allocation14 + $0x74] sm:$0xf]
        %v1176 = vld [vmem:[#allocation14 + $0x78] sm:$0xf]
        %v1177 = vld [vmem:[#allocation14 + $0x7c] sm:$0xf]
        %v1178 = vld [vmem:[#allocation14 + $0x80] sm:$0xf]
        %v1179 = vld [vmem:[#allocation14 + $0x84] sm:$0xf]
        %v1180 = vld [vmem:[#allocation14 + $0x88] sm:$0xf]
        %v1181 = vld [vmem:[#allocation14 + $0x8c] sm:$0xf]
        %v1182 = vld [vmem:[#allocation14 + $0x90] sm:$0xf]
        %v1183 = vld [vmem:[#allocation14 + $0x94] sm:$0xf]
        %v1184 = vld [vmem:[#allocation14 + $0x98] sm:$0xf]
        %v1185 = vld [vmem:[#allocation14 + $0x9c] sm:$0xf]
        %v1186 = vld [vmem:[#allocation14 + $0xa0] sm:$0xf]
        %v1187 = vld [vmem:[#allocation14 + $0xa4] sm:$0xf]
        %v1188 = vld [vmem:[#allocation14 + $0xa8] sm:$0xf]
        %v1189 = vld [vmem:[#allocation14 + $0xac] sm:$0xf]
        %v1190 = vld [vmem:[#allocation14 + $0xb0] sm:$0xf]
        %v1191 = vld [vmem:[#allocation14 + $0xb4] sm:$0xf]
        %v1192 = vld [vmem:[#allocation14 + $0xb8] sm:$0xf]
        %v1193 = vld [vmem:[#allocation14 + $0xbc] sm:$0xf]
        %v1194 = vld [vmem:[#allocation14 + $0xc0] sm:$0xf]
        %v1195 = vld [vmem:[#allocation14 + $0xc4] sm:$0xf]
        %v1196 = vld [vmem:[#allocation14 + $0xc8] sm:$0xf]
        %v1197 = vld [vmem:[#allocation14 + $0xcc] sm:$0xf]
        %v1198 = vld [vmem:[#allocation14 + $0xd0] sm:$0xf]
        %v1199 = vld [vmem:[#allocation14 + $0xd4] sm:$0xf]
        %v1200 = vld [vmem:[#allocation14 + $0xd8] sm:$0xf]
        %v1201 = vld [vmem:[#allocation14 + $0xdc] sm:$0xf]
        %v1202 = vld [vmem:[#allocation14 + $0xe0] sm:$0xf]
        %v1203 = vld [vmem:[#allocation14 + $0xe4] sm:$0xf]
        %v1204 = vld [vmem:[#allocation14 + $0xe8] sm:$0xf]
        %v1205 = vld [vmem:[#allocation14 + $0xec] sm:$0xf]
        %v1206 = vld [vmem:[#allocation14 + $0xf0] sm:$0xf]
        %v1207 = vld [vmem:[#allocation14 + $0xf4] sm:$0xf]
        %v1208 = vld [vmem:[#allocation14 + $0xf8] sm:$0xf]
        %v1209 = vld [vmem:[#allocation14 + $0xfc] sm:$0xf]
        %v1210 = vld [vmem:[#allocation16] sm:$0x1]
        %v1212 = vlaneseq
        %v1213 = vshrl.u32 %v1212, 7
        %v1214 = vsub.s32 0, %v1213
        %v1215 = vrot.slane %v1210, %v1214
        %v1281 = vunpack.c.l.b16 %v1146
        %v1282 = vunpack.c.l.b16 %v1147
        %v1283 = vunpack.c.l.b16 %v1148
        %v1284 = vunpack.c.l.b16 %v1149
        %v1285 = vunpack.c.l.b16 %v1150
        %v1286 = vunpack.c.l.b16 %v1151
        %v1287 = vunpack.c.l.b16 %v1152
        %v1288 = vunpack.c.l.b16 %v1153
        %v1289 = vunpack.c.l.b16 %v1154
        %v1290 = vunpack.c.l.b16 %v1155
        %v1291 = vunpack.c.l.b16 %v1156
        %v1292 = vunpack.c.l.b16 %v1157
        %v1293 = vunpack.c.l.b16 %v1158
        %v1294 = vunpack.c.l.b16 %v1159
        %v1295 = vunpack.c.l.b16 %v1160
        %v1296 = vunpack.c.l.b16 %v1161
        %v1297 = vunpack.c.l.b16 %v1162
        %v1298 = vunpack.c.l.b16 %v1163
        %v1299 = vunpack.c.l.b16 %v1164
        %v1300 = vunpack.c.l.b16 %v1165
        %v1301 = vunpack.c.l.b16 %v1166
        %v1302 = vunpack.c.l.b16 %v1167
        %v1303 = vunpack.c.l.b16 %v1168
        %v1304 = vunpack.c.l.b16 %v1169
        %v1305 = vunpack.c.l.b16 %v1170
        %v1306 = vunpack.c.l.b16 %v1171
        %v1307 = vunpack.c.l.b16 %v1172
        %v1308 = vunpack.c.l.b16 %v1173
        %v1309 = vunpack.c.l.b16 %v1174
        %v1310 = vunpack.c.l.b16 %v1175
        %v1311 = vunpack.c.l.b16 %v1176
        %v1312 = vunpack.c.l.b16 %v1177
        %v1313 = vunpack.c.l.b16 %v1178
        %v1314 = vunpack.c.l.b16 %v1179
        %v1315 = vunpack.c.l.b16 %v1180
        %v1316 = vunpack.c.l.b16 %v1181
        %v1317 = vunpack.c.l.b16 %v1182
        %v1318 = vunpack.c.l.b16 %v1183
        %v1319 = vunpack.c.l.b16 %v1184
        %v1320 = vunpack.c.l.b16 %v1185
        %v1321 = vunpack.c.l.b16 %v1186
        %v1322 = vunpack.c.l.b16 %v1187
        %v1323 = vunpack.c.l.b16 %v1188
        %v1324 = vunpack.c.l.b16 %v1189
        %v1325 = vunpack.c.l.b16 %v1190
        %v1326 = vunpack.c.l.b16 %v1191
        %v1327 = vunpack.c.l.b16 %v1192
        %v1328 = vunpack.c.l.b16 %v1193
        %v1329 = vunpack.c.l.b16 %v1194
        %v1330 = vunpack.c.l.b16 %v1195
        %v1331 = vunpack.c.l.b16 %v1196
        %v1332 = vunpack.c.l.b16 %v1197
        %v1333 = vunpack.c.l.b16 %v1198
        %v1334 = vunpack.c.l.b16 %v1199
        %v1335 = vunpack.c.l.b16 %v1200
        %v1336 = vunpack.c.l.b16 %v1201
        %v1337 = vunpack.c.l.b16 %v1202
        %v1338 = vunpack.c.l.b16 %v1203
        %v1339 = vunpack.c.l.b16 %v1204
        %v1340 = vunpack.c.l.b16 %v1205
        %v1341 = vunpack.c.l.b16 %v1206
        %v1342 = vunpack.c.l.b16 %v1207
        %v1343 = vunpack.c.l.b16 %v1208
        %v1344 = vunpack.c.l.b16 %v1209
        %v1345 = vpack.c.b16 %v1282, %v1281
        %v1346 = vpack.c.b16 %v1284, %v1283
        %v1347 = vpack.c.b16 %v1286, %v1285
        %v1348 = vpack.c.b16 %v1288, %v1287
        %v1349 = vpack.c.b16 %v1290, %v1289
        %v1350 = vpack.c.b16 %v1292, %v1291
        %v1351 = vpack.c.b16 %v1294, %v1293
        %v1352 = vpack.c.b16 %v1296, %v1295
        %v1353 = vpack.c.b16 %v1298, %v1297
        %v1354 = vpack.c.b16 %v1300, %v1299
        %v1355 = vpack.c.b16 %v1302, %v1301
        %v1356 = vpack.c.b16 %v1304, %v1303
        %v1357 = vpack.c.b16 %v1306, %v1305
        %v1358 = vpack.c.b16 %v1308, %v1307
        %v1359 = vpack.c.b16 %v1310, %v1309
        %v1360 = vpack.c.b16 %v1312, %v1311
        %v1361 = vpack.c.b16 %v1314, %v1313
        %v1362 = vpack.c.b16 %v1316, %v1315
        %v1363 = vpack.c.b16 %v1318, %v1317
        %v1364 = vpack.c.b16 %v1320, %v1319
        %v1365 = vpack.c.b16 %v1322, %v1321
        %v1366 = vpack.c.b16 %v1324, %v1323
        %v1367 = vpack.c.b16 %v1326, %v1325
        %v1368 = vpack.c.b16 %v1328, %v1327
        %v1369 = vpack.c.b16 %v1330, %v1329
        %v1370 = vpack.c.b16 %v1332, %v1331
        %v1371 = vpack.c.b16 %v1334, %v1333
        %v1372 = vpack.c.b16 %v1336, %v1335
        %v1373 = vpack.c.b16 %v1338, %v1337
        %v1374 = vpack.c.b16 %v1340, %v1339
        %v1375 = vpack.c.b16 %v1342, %v1341
        %v1376 = vpack.c.b16 %v1344, %v1343
        %1409 = vmatprep.subr.bf16.mxu0 0
        %1410 = vmatpush1.bf16.msra.mxu0 %v1345
        %1411 = vmatprep.subr.bf16.mxu0 0
        %1412 = vmatpush1.bf16.msra.mxu0 %v1346
        %1413 = vmatprep.subr.bf16.mxu0 0
        %1414 = vmatpush1.bf16.msra.mxu0 %v1347
        %1415 = vmatprep.subr.bf16.mxu0 0
        %1416 = vmatpush1.bf16.msra.mxu0 %v1348
        %1417 = vmatprep.subr.bf16.mxu0 0
        %1418 = vmatpush1.bf16.msra.mxu0 %v1349
        %1419 = vmatprep.subr.bf16.mxu0 0
        %1420 = vmatpush1.bf16.msra.mxu0 %v1350
        %1421 = vmatprep.subr.bf16.mxu0 0
        %1422 = vmatpush1.bf16.msra.mxu0 %v1351
        %1423 = vmatprep.subr.bf16.mxu0 0
        %1424 = vmatpush1.bf16.msra.mxu0 %v1352
        %1425 = vmatprep.subr.bf16.mxu0 0
        %1426 = vmatpush1.bf16.msra.mxu0 %v1353
        %1427 = vmatprep.subr.bf16.mxu0 0
        %1428 = vmatpush1.bf16.msra.mxu0 %v1354
        %1429 = vmatprep.subr.bf16.mxu0 0
        %1430 = vmatpush1.bf16.msra.mxu0 %v1355
        %1431 = vmatprep.subr.bf16.mxu0 0
        %1432 = vmatpush1.bf16.msra.mxu0 %v1356
        %1433 = vmatprep.subr.bf16.mxu0 0
        %1434 = vmatpush1.bf16.msra.mxu0 %v1357
        %1435 = vmatprep.subr.bf16.mxu0 0
        %1436 = vmatpush1.bf16.msra.mxu0 %v1358
        %1437 = vmatprep.subr.bf16.mxu0 0
        %1438 = vmatpush1.bf16.msra.mxu0 %v1359
        %1439 = vmatprep.subr.bf16.mxu0 0
        %1440 = vmatpush1.bf16.msra.mxu0 %v1360
        %1441 = vmatprep.mubr.bf16.mxu0 %v1139
        %1442 = vmatmul.mubr.bf16.gmra.mrb[0].mxu0 %v1138
        %v1443 = vpop.f32.mrb[0].mxu0
        %v1444 = vadd.f32 %v1215, %v1443
        %v1445 = vpop.f32.mrb[0].mxu0
        %v1446 = vpop.f32.mrb[0].mxu0
        %v1447 = vadd.f32 %v1215, %v1446
        %v1448 = vpop.f32.mrb[0].mxu0
        %1449 = vmatprep.mubr.bf16.mxu0 %v1143
        %1450 = vmatmul.mubr.bf16.gmra.mrb[0].mxu0 %v1142
        %v1451 = vpop.f32.mrb[0].mxu0
        %v1452 = vadd.f32 %v1215, %v1451
        %v1453 = vpop.f32.mrb[0].mxu0
        %v1454 = vpop.f32.mrb[0].mxu0
        %v1455 = vadd.f32 %v1215, %v1454
        %v1456 = vpop.f32.mrb[0].mxu0
        %1457 = vdwg.mxu0
        %1458 = vmatprep.subr.bf16.mxu0 0
        %1459 = vmatpush1.bf16.msra.mxu0 %v1361
        %1460 = vmatprep.subr.bf16.mxu0 0
        %1461 = vmatpush1.bf16.msra.mxu0 %v1362
        %1462 = vmatprep.subr.bf16.mxu0 0
        %1463 = vmatpush1.bf16.msra.mxu0 %v1363
        %1464 = vmatprep.subr.bf16.mxu0 0
        %1465 = vmatpush1.bf16.msra.mxu0 %v1364
        %1466 = vmatprep.subr.bf16.mxu0 0
        %1467 = vmatpush1.bf16.msra.mxu0 %v1365
        %1468 = vmatprep.subr.bf16.mxu0 0
        %1469 = vmatpush1.bf16.msra.mxu0 %v1366
        %1470 = vmatprep.subr.bf16.mxu0 0
        %1471 = vmatpush1.bf16.msra.mxu0 %v1367
        %1472 = vmatprep.subr.bf16.mxu0 0
        %1473 = vmatpush1.bf16.msra.mxu0 %v1368
        %1474 = vmatprep.subr.bf16.mxu0 0
        %1475 = vmatpush1.bf16.msra.mxu0 %v1369
        %1476 = vmatprep.subr.bf16.mxu0 0
        %1477 = vmatpush1.bf16.msra.mxu0 %v1370
        %1478 = vmatprep.subr.bf16.mxu0 0
        %1479 = vmatpush1.bf16.msra.mxu0 %v1371
        %1480 = vmatprep.subr.bf16.mxu0 0
        %1481 = vmatpush1.bf16.msra.mxu0 %v1372
        %1482 = vmatprep.subr.bf16.mxu0 0
        %1483 = vmatpush1.bf16.msra.mxu0 %v1373
        %1484 = vmatprep.subr.bf16.mxu0 0
        %1485 = vmatpush1.bf16.msra.mxu0 %v1374
        %1486 = vmatprep.subr.bf16.mxu0 0
        %1487 = vmatpush1.bf16.msra.mxu0 %v1375
        %1488 = vmatprep.subr.bf16.mxu0 0
        %1489 = vmatpush1.bf16.msra.mxu0 %v1376
        %1490 = vmatprep.mubr.bf16.mxu0 %v1141
        %1491 = vmatmul.mubr.bf16.gmra.mrb[0].mxu0 %v1140
        %v1492 = vpop.f32.mrb[0].mxu0
        %v1493 = vadd.f32 %v1444, %v1492
        %v1494 = vpop.f32.mrb[0].mxu0
        %v1495 = vpop.f32.mrb[0].mxu0
        %v1496 = vadd.f32 %v1447, %v1495
        %v1497 = vpop.f32.mrb[0].mxu0
        %1498 = vmatprep.mubr.bf16.mxu0 %v1145
        %1499 = vmatmul.mubr.bf16.gmra.mrb[0].mxu0 %v1144
        %v1500 = vpop.f32.mrb[0].mxu0
        %v1501 = vadd.f32 %v1452, %v1500
        %v1502 = vpop.f32.mrb[0].mxu0
        %v1503 = vpop.f32.mrb[0].mxu0
        %v1504 = vadd.f32 %v1455, %v1503
        %v1505 = vpop.f32.mrb[0].mxu0
        %1506 = vdwg.mxu0
        %v1507 = vadd.f32 %v496, %v1493
        %v1508 = vadd.f32 %v497, %v1496
        %v1509 = vadd.f32 %v498, %v1501
        %v1510 = vadd.f32 %v499, %v1504
        %1511 = vst [vmem:[%s483] sm:$0xff] %v1507
        %1512 = vst [vmem:[%s483 + $0x8] sm:$0xff] %v1508
        %1513 = vst [vmem:[%s483 + $0x10] sm:$0xff] %v1509
        %1514 = vst [vmem:[%s483 + $0x18] sm:$0xff] %v1510
        %s1515 = sand.u32 %s239, 1
        %s1516 = scalar_lea.sflag [#allocation4], %s1515
        %s1517 = sand.u32 %s239, 1
        %s1518 = smul.addr %s1517, 32
        %s1519 = scalar_lea.vmem [#allocation17], %s1518
        // Predicated region
        $region93: #{block_forward.3} parent=55 // pred_check
          %p1520 = pneg %p249
        $region94: #{block_forward.3} parent=55 // pred_check_branch
          %1522 = sbr.rel (%p1520) target = $region96
        $region95: #{block_forward.3} parent=55 // pred_region
          %s1523 = smul.u32 4, %s32
          %s1525 = ssub.s32 512, 512
          %1526 = vsyncadd %s1516, %s1525
          %s1527 = smul.addr %s1523, 128
          %s1528 = scalar_lea.hbm %s9, %s1527
          %s1529 = sshll.u32 %s1519, 4
          %s1530 = int_to_ptr.vmem [resolvable:$true] %s1529
          %1535 = dma.vmem_to_hbm [thread:$0]  %s1530, 512, %s1528, %s1516, 128, 128, 8
        $region96: #{block_forward.3} parent=55 // pred_fallthru
          _
      $region56: #{block_forward.3} parent=5 // pred_fallthru
        _
      %p1536 = scmp.le.s32.totalorder 2, %s27
      // Predicated region
      $region97: #{block_forward.3} parent=5 // pred_check
        %p1537 = pneg %p1536
      $region98: #{block_forward.3} parent=5 // pred_check_branch
        %1539 = sbr.rel (%p1537) target = $region100
      $region99: #{block_forward.3} parent=5 // pred_region
        %s1540 = ssub.s32 %s27, 2
        // Predicated region
        $region101: #{block_forward.3} parent=99 // pred_check
          %p1541 = pneg %p255
        $region102: #{block_forward.3} parent=99 // pred_check_branch
          %1543 = sbr.rel (%p1541) target = $region104
        $region103: #{block_forward.3} parent=99 // pred_region
          %s1544 = sand.u32 %s240, 1
          %s1545 = scalar_lea.sflag [#allocation4], %s1544
          %s1546 = sand.u32 %s240, 1
          %s1547 = smul.addr %s1546, 32
          %s1548 = scalar_lea.vmem [#allocation17], %s1547
          %1549 = dma.done %s1545, 512
        $region104: #{block_forward.3} parent=99 // pred_fallthru
          _
      $region100: #{block_forward.3} parent=5 // pred_fallthru
        _
    $region6: #{block_forward.3} parent=1 // loop_footer
      %s31 = sadd.s32 1, %s27
    $region7: #{block_forward.3} parent=1 // loop_footer_branch
      %26 = sbr.rel target = $region3
    $region8: #{block_forward.3} parent=1 // loop_exit
      _
    %1550 = vsyncpa [#allocation3], 1
    %s1551 = scalar_lea.sflag [#allocation3], 1
    %1552 = vsyncpa %s1551, 1
    %1553 = vsyncpa [#allocation6], 1
    %s1554 = scalar_lea.sflag [#allocation6], 1
    %1555 = vsyncpa %s1554, 1
    %1556 = vsyncpa [#allocation9], 1
    %1557 = vsyncpa [#allocation12], 1
    %1558 = vsyncpa [#allocation15], 1
    %1559 = vsyncpa [#allocation4], 1
    %s1560 = scalar_lea.sflag [#allocation4], 1
    %1561 = vsyncpa %s1560, 1

// kernel: block_forward.2
$region0: #{block_forward.2}
  #allocation0 [shape = 'u32[]', space=smem, size = 0x4, offset = 0x4, fixed_abs, tag = 'smem constant byte address 0x4 - core index']
  #allocation1 [shape = 'u32[144,128]{1,0:T(1,128)}', space=vmem, size = 0x12000, scoped, tag = 'internal scratch']
  %s0 = inlined_call_operand.hbm [shape: f32[72,128], index: 0, kind: input, shape index: {}]
  %s1 = inlined_call_operand.hbm [shape: f32[72,128], index: 1, kind: input, shape index: {}]
  %s2 = inlined_call_operand.hbm [shape: bf16[256,256], index: 2, kind: input, shape index: {}]
  %s3 = inlined_call_operand.hbm [shape: bf16[256,256], index: 3, kind: input, shape index: {}]
  %s4 = inlined_call_operand.hbm [shape: f32[72,256], index: 4, kind: output, shape index: {}]
  %s5 = sld [smem:[#allocation0]]
  $region65: #{block_forward.2} parent=0
    _
  %s7 = ssub.s32 1, %s5
  %s8 = scalar_select 0, %s7, %s5
  $region1: #{block_forward.2} parent=0
    #allocation2 [shape = 'u8[8192]{0}', space=vmem, size = 0x2000, scoped, tag = 'input window, operand 0']
    #allocation3 [shape = 's32[2]{0}', space=sflag, size = 0x8, scoped, tag = 'scoped memory for block_forward.2']
    #allocation4 [shape = 's32[2]{0}', space=sflag, size = 0x8, scoped, tag = 'scoped memory for block_forward.2']
    #allocation5 [shape = 'u8[8192]{0}', space=vmem, size = 0x2000, scoped, tag = 'input window, operand 1']
    #allocation6 [shape = 's32[2]{0}', space=sflag, size = 0x8, scoped, tag = 'scoped memory for block_forward.2']
    #allocation7 [shape = 'u8[131072]{0}', space=vmem, size = 0x20000, scoped, tag = 'input window, operand 2, single buffered']
    #allocation8 [shape = 'u8[131072]{0}', space=vmem, size = 0x20000, scoped, tag = 'input window, operand 3, single buffered']
    #allocation9 [shape = 's32[1]{0}', space=sflag, size = 0x4, scoped, tag = 'scoped memory for block_forward.2']
    #allocation10 [shape = 'u8[16384]{0}', space=vmem, size = 0x4000, scoped, tag = 'output window, operand 0']
    %9 = vsyncpa [#allocation3], 0
    %s10 = scalar_lea.sflag [#allocation3], 1
    %11 = vsyncpa %s10, 0
    %12 = vsyncpa [#allocation6], 0
    %s13 = scalar_lea.sflag [#allocation6], 1
    %14 = vsyncpa %s13, 0
    %15 = vsyncpa [#allocation9], 0
    %16 = vsyncpa [#allocation4], 0
    %s17 = scalar_lea.sflag [#allocation4], 1
    %18 = vsyncpa %s17, 0
    loop: start=0, step=1, limit=11
    $region2: #{block_forward.2} parent=1 // loop_pre_header
      _
    $region3: #{block_forward.2} parent=1 // loop_header
      %s20 = sphi 0, %s24
      %p21 = scmp.ge.s32.totalorder %s20, 11
      %s30 = sphi 0, %s32
      %s33 = sphi 0, %s30
      %s34 = sphi 0, %s33
      %s50 = sphi 0, %s34
      %s56 = sphi 0, %s58
      %s59 = sphi 0, %s56
      %s60 = sphi 0, %s59
      %s76 = sphi 0, %s60
      %s80 = sphi 0, %s80
      %s82 = sphi 0, %s80
      %s83 = sphi 0, %s82
      %s97 = sphi 0, %s83
      %s101 = sphi 0, %s101
      %s103 = sphi 0, %s101
      %s104 = sphi 0, %s103
      %s118 = sphi 0, %s104
      %s124 = sphi 0, %s126
      %s127 = sphi 0, %s124
      %s128 = sphi 0, %s127
      %s144 = sphi 0, %s128
    $region4: #{block_forward.2} parent=1 // loop_header_branch
      %23 = sbr.rel (%p21) target = $region8
    $region5: #{block_forward.2} parent=1 // loop_body
      %s25 = ssub.s32 %s20, 1
      %s26 = ssub.s32 %s20, 2
      %s27 = sadd.s32 %s20, 1
      %s28 = ssub.s32 %s20, %s27
      %p29 = scmp.eq.s32.totalorder %s28, 0
      %s31 = sadd.s32 %s30, 1
      %s32 = scalar_select %p29, %s30, %s31
      %p35 = pneg %p29
      %p36 = scmp.eq.s32.totalorder %s20, 8
      %p37 = por %p35, %p36
      %p38 = scmp.ne.s32.totalorder %s30, %s33
      %p39 = scmp.eq.s32.totalorder %s20, 0
      %p40 = por %p38, %p39
      %p41 = scmp.ne.s32.totalorder %s30, %s33
      %p42 = scmp.eq.s32.totalorder %s25, 8
      %p43 = por %p41, %p42
      %p44 = scmp.ne.s32.totalorder %s33, %s34
      %p45 = scmp.eq.s32.totalorder %s25, 0
      %p46 = por %p44, %p45
      %p47 = scmp.ne.s32.totalorder %s33, %s34
      %p48 = scmp.eq.s32.totalorder %s26, 8
      %p49 = por %p47, %p48
      %p51 = scmp.ne.s32.totalorder %s34, %s50
      %p52 = scmp.eq.s32.totalorder %s26, 0
      %p53 = por %p51, %p52
      %s54 = ssub.s32 %s20, %s27
      %p55 = scmp.eq.s32.totalorder %s54, 0
      %s57 = sadd.s32 %s56, 1
      %s58 = scalar_select %p55, %s56, %s57
      %p61 = pneg %p55
      %p62 = scmp.eq.s32.totalorder %s20, 8
      %p63 = por %p61, %p62
      %p64 = scmp.ne.s32.totalorder %s56, %s59
      %p65 = scmp.eq.s32.totalorder %s20, 0
      %p66 = por %p64, %p65
      %p67 = scmp.ne.s32.totalorder %s56, %s59
      %p68 = scmp.eq.s32.totalorder %s25, 8
      %p69 = por %p67, %p68
      %p70 = scmp.ne.s32.totalorder %s59, %s60
      %p71 = scmp.eq.s32.totalorder %s25, 0
      %p72 = por %p70, %p71
      %p73 = scmp.ne.s32.totalorder %s59, %s60
      %p74 = scmp.eq.s32.totalorder %s26, 8
      %p75 = por %p73, %p74
      %p77 = scmp.ne.s32.totalorder %s60, %s76
      %p78 = scmp.eq.s32.totalorder %s26, 0
      %p79 = por %p77, %p78
      %s81 = sadd.s32 %s80, 1
      %p84 = scmp.eq.s32.totalorder %s20, 8
      %p85 = scmp.ne.s32.totalorder %s80, %s82
      %p86 = scmp.eq.s32.totalorder %s20, 0
      %p87 = por %p85, %p86
      %p88 = scmp.ne.s32.totalorder %s80, %s82
      %p89 = scmp.eq.s32.totalorder %s25, 8
      %p90 = por %p88, %p89
      %p91 = scmp.ne.s32.totalorder %s82, %s83
      %p92 = scmp.eq.s32.totalorder %s25, 0
      %p93 = por %p91, %p92
      %p94 = scmp.ne.s32.totalorder %s82, %s83
      %p95 = scmp.eq.s32.totalorder %s26, 8
      %p96 = por %p94, %p95
      %p98 = scmp.ne.s32.totalorder %s83, %s97
      %p99 = scmp.eq.s32.totalorder %s26, 0
      %p100 = por %p98, %p99
      %s102 = sadd.s32 %s101, 1
      %p105 = scmp.eq.s32.totalorder %s20, 8
      %p106 = scmp.ne.s32.totalorder %s101, %s103
      %p107 = scmp.eq.s32.totalorder %s20, 0
      %p108 = por %p106, %p107
      %p109 = scmp.ne.s32.totalorder %s101, %s103
      %p110 = scmp.eq.s32.totalorder %s25, 8
      %p111 = por %p109, %p110
      %p112 = scmp.ne.s32.totalorder %s103, %s104
      %p113 = scmp.eq.s32.totalorder %s25, 0
      %p114 = por %p112, %p113
      %p115 = scmp.ne.s32.totalorder %s103, %s104
      %p116 = scmp.eq.s32.totalorder %s26, 8
      %p117 = por %p115, %p116
      %p119 = scmp.ne.s32.totalorder %s104, %s118
      %p120 = scmp.eq.s32.totalorder %s26, 0
      %p121 = por %p119, %p120
      %s122 = ssub.s32 %s20, %s27
      %p123 = scmp.eq.s32.totalorder %s122, 0
      %s125 = sadd.s32 %s124, 1
      %s126 = scalar_select %p123, %s124, %s125
      %p129 = pneg %p123
      %p130 = scmp.eq.s32.totalorder %s20, 8
      %p131 = por %p129, %p130
      %p132 = scmp.ne.s32.totalorder %s124, %s127
      %p133 = scmp.eq.s32.totalorder %s20, 0
      %p134 = por %p132, %p133
      %p135 = scmp.ne.s32.totalorder %s124, %s127
      %p136 = scmp.eq.s32.totalorder %s25, 8
      %p137 = por %p135, %p136
      %p138 = scmp.ne.s32.totalorder %s127, %s128
      %p139 = scmp.eq.s32.totalorder %s25, 0
      %p140 = por %p138, %p139
      %p141 = scmp.ne.s32.totalorder %s127, %s128
      %p142 = scmp.eq.s32.totalorder %s26, 8
      %p143 = por %p141, %p142
      %p145 = scmp.ne.s32.totalorder %s128, %s144
      %p146 = scmp.eq.s32.totalorder %s26, 0
      %p147 = por %p145, %p146
      %p148 = scmp.le.s32.totalorder 1, %s20
      %p149 = scmp.lt.s32.totalorder %s20, 10
      %p150 = pnand %p148, %p149
      %p151 = pneg %p150
      // Predicated region
      $region9: #{block_forward.2} parent=5 // pred_check
        _
      $region10: #{block_forward.2} parent=5 // pred_check_branch
        %153 = sbr.rel (%p150) target = $region12
      $region11: #{block_forward.2} parent=5 // pred_region
        %s154 = ssub.s32 %s20, 1
        // Predicated region
        $region13: #{block_forward.2} parent=11 // pred_check
          %p155 = pneg %p93
        $region14: #{block_forward.2} parent=11 // pred_check_branch
          %157 = sbr.rel (%p155) target = $region16
        $region15: #{block_forward.2} parent=11 // pred_region
          %s159 = ssub.s32 4096, 4096
          %160 = vsyncadd [#allocation6], %s159
          %s161 = sshll.u32 [#allocation7], 4
          %s162 = int_to_ptr.vmem [resolvable:$true] %s161
          %167 = dma.hbm_to_vmem [thread:$0]  %s2, 4096, %s162, [#allocation6], 128, 128, 8
        $region16: #{block_forward.2} parent=11 // pred_fallthru
          _
        // Predicated region
        $region17: #{block_forward.2} parent=11 // pred_check
          %p168 = pneg %p114
        $region18: #{block_forward.2} parent=11 // pred_check_branch
          %170 = sbr.rel (%p168) target = $region20
        $region19: #{block_forward.2} parent=11 // pred_region
          %s172 = ssub.s32 4096, 4096
          %173 = vsyncadd [#allocation9], %s172
          %s174 = sshll.u32 [#allocation8], 4
          %s175 = int_to_ptr.vmem [resolvable:$true] %s174
          %180 = dma.hbm_to_vmem [thread:$0]  %s3, 4096, %s175, [#allocation9], 128, 128, 8
        $region20: #{block_forward.2} parent=11 // pred_fallthru
          _
      $region12: #{block_forward.2} parent=5 // pred_fallthru
        _
      %p181 = scmp.lt.s32.totalorder %s20, 9
      // Predicated region
      $region21: #{block_forward.2} parent=5 // pred_check
        %p182 = pneg %p181
      $region22: #{block_forward.2} parent=5 // pred_check_branch
        %184 = sbr.rel (%p182) target = $region24
      $region23: #{block_forward.2} parent=5 // pred_region
        // Predicated region
        $region25: #{block_forward.2} parent=23 // pred_check
          %p185 = pneg %p40
        $region26: #{block_forward.2} parent=23 // pred_check_branch
          %187 = sbr.rel (%p185) target = $region28
        $region27: #{block_forward.2} parent=23 // pred_region
          %s188 = sand.u32 %s30, 1
          %s189 = scalar_lea.sflag [#allocation3], %s188
          %s190 = sand.u32 %s30, 1
          %s191 = smul.addr %s190, 8
          %s192 = scalar_lea.vmem [#allocation2], %s191
          %s194 = ssub.s32 128, 128
          %195 = vsyncadd %s189, %s194
          %s196 = smul.addr %s20, 128
          %s197 = scalar_lea.hbm %s0, %s196
          %s199 = sshll.u32 %s192, 4
          %s200 = int_to_ptr.vmem [resolvable:$true] %s199
          %202 = dma.hbm_to_vmem [thread:$0]  %s197, 128, %s200, %s189
        $region28: #{block_forward.2} parent=23 // pred_fallthru
          _
        // Predicated region
        $region29: #{block_forward.2} parent=23 // pred_check
          %p203 = pneg %p66
        $region30: #{block_forward.2} parent=23 // pred_check_branch
          %205 = sbr.rel (%p203) target = $region32
        $region31: #{block_forward.2} parent=23 // pred_region
          %s206 = sand.u32 %s20, 1
          %s207 = scalar_lea.sflag [#allocation6], %s206
          %s208 = sand.u32 %s56, 1
          %s209 = smul.addr %s208, 8
          %s210 = scalar_lea.vmem [#allocation5], %s209
          %s212 = ssub.s32 128, 128
          %213 = vsyncadd %s207, %s212
          %s214 = smul.addr %s20, 128
          %s215 = scalar_lea.hbm %s1, %s214
          %s217 = sshll.u32 %s210, 4
          %s218 = int_to_ptr.vmem [resolvable:$true] %s217
          %220 = dma.hbm_to_vmem [thread:$0]  %s215, 128, %s218, %s207
        $region32: #{block_forward.2} parent=23 // pred_fallthru
          _
      $region24: #{block_forward.2} parent=5 // pred_fallthru
        _
      %p221 = scmp.le.s32.totalorder 1, %s20
      %p222 = scmp.lt.s32.totalorder %s20, 10
      %p223 = pnand %p221, %p222
      %p224 = pneg %p223
      // Predicated region
      $region33: #{block_forward.2} parent=5 // pred_check
        _
      $region34: #{block_forward.2} parent=5 // pred_check_branch
        %226 = sbr.rel (%p223) target = $region36
      $region35: #{block_forward.2} parent=5 // pred_region
        %s227 = ssub.s32 %s20, 1
        %s228 = sand.u32 %s33, 1
        %s229 = scalar_lea.sflag [#allocation3], %s228
        %s230 = sand.u32 %s33, 1
        %s231 = smul.addr %s230, 8
        %s232 = scalar_lea.vmem [#allocation2], %s231
        // Predicated region
        $region37: #{block_forward.2} parent=35 // pred_check
          %p233 = pneg %p46
        $region38: #{block_forward.2} parent=35 // pred_check_branch
          %235 = sbr.rel (%p233) target = $region40
        $region39: #{block_forward.2} parent=35 // pred_region
          %236 = dma.done %s229, 128
        $region40: #{block_forward.2} parent=35 // pred_fallthru
          _
        %s237 = sand.u32 %s25, 1
        %s238 = scalar_lea.sflag [#allocation6], %s237
        %s239 = sand.u32 %s59, 1
        %s240 = smul.addr %s239, 8
        %s241 = scalar_lea.vmem [#allocation5], %s240
        // Predicated region
        $region41: #{block_forward.2} parent=35 // pred_check
          %p242 = pneg %p72
        $region42: #{block_forward.2} parent=35 // pred_check_branch
          %244 = sbr.rel (%p242) target = $region44
        $region43: #{block_forward.2} parent=35 // pred_region
          %245 = dma.done %s238, 128
        $region44: #{block_forward.2} parent=35 // pred_fallthru
          _
        // Predicated region
        $region45: #{block_forward.2} parent=35 // pred_check
          %p246 = pneg %p93
        $region46: #{block_forward.2} parent=35 // pred_check_branch
          %248 = sbr.rel (%p246) target = $region48
        $region47: #{block_forward.2} parent=35 // pred_region
          %249 = dma.done [#allocation6], 4096
        $region48: #{block_forward.2} parent=35 // pred_fallthru
          _
        // Predicated region
        $region49: #{block_forward.2} parent=35 // pred_check
          %p250 = pneg %p114
        $region50: #{block_forward.2} parent=35 // pred_check_branch
          %252 = sbr.rel (%p250) target = $region52
        $region51: #{block_forward.2} parent=35 // pred_region
          %253 = dma.done [#allocation9], 4096
        $region52: #{block_forward.2} parent=35 // pred_fallthru
          _
        %s254 = sand.u32 %s33, 1
        %s255 = scalar_lea.sflag [#allocation3], %s254
        %s256 = sand.u32 %s33, 1
        %s257 = smul.addr %s256, 8
        %s258 = scalar_lea.vmem [#allocation2], %s257
        %p259 = pneg %p46
        %p260 = pneg %p43
        %s261 = sand.u32 %s25, 1
        %s262 = scalar_lea.sflag [#allocation6], %s261
        %s263 = sand.u32 %s59, 1
        %s264 = smul.addr %s263, 8
        %s265 = scalar_lea.vmem [#allocation5], %s264
        %p266 = pneg %p72
        %p267 = pneg %p69
        %p268 = pneg %p93
        %p269 = pneg %p90
        %p270 = pneg %p114
        %p271 = pneg %p111
        %p272 = pneg %p140
        %p273 = pneg %p137
        %s274 = sand.u32 %s127, 1
        %s275 = scalar_lea.sflag [#allocation4], %s274
        %s276 = sand.u32 %s127, 1
        %s277 = smul.addr %s276, 16
        %s278 = scalar_lea.vmem [#allocation10], %s277
        %v279 = vld [vmem:[%s232] sm:$0xff]
        %v280 = vld [vmem:[%s241] sm:$0xff]
        %v281 = vpack.c.bf16 %v279, %v279
        %v282 = vpack.c.bf16 %v280, %v280
        %v283 = vld [vmem:[#allocation7] sm:$0xff]
        %v284 = vld [vmem:[#allocation7 + $0x8] sm:$0xff]
        %v285 = vld [vmem:[#allocation7 + $0x10] sm:$0xff]
        %v286 = vld [vmem:[#allocation7 + $0x18] sm:$0xff]
        %v287 = vld [vmem:[#allocation7 + $0x20] sm:$0xff]
        %v288 = vld [vmem:[#allocation7 + $0x28] sm:$0xff]
        %v289 = vld [vmem:[#allocation7 + $0x30] sm:$0xff]
        %v290 = vld [vmem:[#allocation7 + $0x38] sm:$0xff]
        %v291 = vld [vmem:[#allocation7 + $0x40] sm:$0xff]
        %v292 = vld [vmem:[#allocation7 + $0x48] sm:$0xff]
        %v293 = vld [vmem:[#allocation7 + $0x50] sm:$0xff]
        %v294 = vld [vmem:[#allocation7 + $0x58] sm:$0xff]
        %v295 = vld [vmem:[#allocation7 + $0x60] sm:$0xff]
        %v296 = vld [vmem:[#allocation7 + $0x68] sm:$0xff]
        %v297 = vld [vmem:[#allocation7 + $0x70] sm:$0xff]
        %v298 = vld [vmem:[#allocation7 + $0x78] sm:$0xff]
        %v299 = vld [vmem:[#allocation7 + $0x80] sm:$0xff]
        %v300 = vld [vmem:[#allocation7 + $0x88] sm:$0xff]
        %v301 = vld [vmem:[#allocation7 + $0x90] sm:$0xff]
        %v302 = vld [vmem:[#allocation7 + $0x98] sm:$0xff]
        %v303 = vld [vmem:[#allocation7 + $0xa0] sm:$0xff]
        %v304 = vld [vmem:[#allocation7 + $0xa8] sm:$0xff]
        %v305 = vld [vmem:[#allocation7 + $0xb0] sm:$0xff]
        %v306 = vld [vmem:[#allocation7 + $0xb8] sm:$0xff]
        %v307 = vld [vmem:[#allocation7 + $0xc0] sm:$0xff]
        %v308 = vld [vmem:[#allocation7 + $0xc8] sm:$0xff]
        %v309 = vld [vmem:[#allocation7 + $0xd0] sm:$0xff]
        %v310 = vld [vmem:[#allocation7 + $0xd8] sm:$0xff]
        %v311 = vld [vmem:[#allocation7 + $0xe0] sm:$0xff]
        %v312 = vld [vmem:[#allocation7 + $0xe8] sm:$0xff]
        %v313 = vld [vmem:[#allocation7 + $0xf0] sm:$0xff]
        %v314 = vld [vmem:[#allocation7 + $0xf8] sm:$0xff]
        %v347 = vunpack.c.l.b16 %v283
        %v348 = vunpack.c.h.b16 %v283
        %v349 = vunpack.c.l.b16 %v284
        %v350 = vunpack.c.h.b16 %v284
        %v351 = vunpack.c.l.b16 %v285
        %v352 = vunpack.c.h.b16 %v285
        %v353 = vunpack.c.l.b16 %v286
        %v354 = vunpack.c.h.b16 %v286
        %v355 = vunpack.c.l.b16 %v287
        %v356 = vunpack.c.h.b16 %v287
        %v357 = vunpack.c.l.b16 %v288
        %v358 = vunpack.c.h.b16 %v288
        %v359 = vunpack.c.l.b16 %v289
        %v360 = vunpack.c.h.b16 %v289
        %v361 = vunpack.c.l.b16 %v290
        %v362 = vunpack.c.h.b16 %v290
        %v363 = vunpack.c.l.b16 %v291
        %v364 = vunpack.c.h.b16 %v291
        %v365 = vunpack.c.l.b16 %v292
        %v366 = vunpack.c.h.b16 %v292
        %v367 = vunpack.c.l.b16 %v293
        %v368 = vunpack.c.h.b16 %v293
        %v369 = vunpack.c.l.b16 %v294
        %v370 = vunpack.c.h.b16 %v294
        %v371 = vunpack.c.l.b16 %v295
        %v372 = vunpack.c.h.b16 %v295
        %v373 = vunpack.c.l.b16 %v296
        %v374 = vunpack.c.h.b16 %v296
        %v375 = vunpack.c.l.b16 %v297
        %v376 = vunpack.c.h.b16 %v297
        %v377 = vunpack.c.l.b16 %v298
        %v378 = vunpack.c.h.b16 %v298
        %v379 = vunpack.c.l.b16 %v299
        %v380 = vunpack.c.h.b16 %v299
        %v381 = vunpack.c.l.b16 %v300
        %v382 = vunpack.c.h.b16 %v300
        %v383 = vunpack.c.l.b16 %v301
        %v384 = vunpack.c.h.b16 %v301
        %v385 = vunpack.c.l.b16 %v302
        %v386 = vunpack.c.h.b16 %v302
        %v387 = vunpack.c.l.b16 %v303
        %v388 = vunpack.c.h.b16 %v303
        %v389 = vunpack.c.l.b16 %v304
        %v390 = vunpack.c.h.b16 %v304
        %v391 = vunpack.c.l.b16 %v305
        %v392 = vunpack.c.h.b16 %v305
        %v393 = vunpack.c.l.b16 %v306
        %v394 = vunpack.c.h.b16 %v306
        %v395 = vunpack.c.l.b16 %v307
        %v396 = vunpack.c.h.b16 %v307
        %v397 = vunpack.c.l.b16 %v308
        %v398 = vunpack.c.h.b16 %v308
        %v399 = vunpack.c.l.b16 %v309
        %v400 = vunpack.c.h.b16 %v309
        %v401 = vunpack.c.l.b16 %v310
        %v402 = vunpack.c.h.b16 %v310
        %v403 = vunpack.c.l.b16 %v311
        %v404 = vunpack.c.h.b16 %v311
        %v405 = vunpack.c.l.b16 %v312
        %v406 = vunpack.c.h.b16 %v312
        %v407 = vunpack.c.l.b16 %v313
        %v408 = vunpack.c.h.b16 %v313
        %v409 = vunpack.c.l.b16 %v314
        %v410 = vunpack.c.h.b16 %v314
        %v411 = vpack.c.b16 %v349, %v347
        %v412 = vpack.c.b16 %v350, %v348
        %v413 = vpack.c.b16 %v353, %v351
        %v414 = vpack.c.b16 %v354, %v352
        %v415 = vpack.c.b16 %v357, %v355
        %v416 = vpack.c.b16 %v358, %v356
        %v417 = vpack.c.b16 %v361, %v359
        %v418 = vpack.c.b16 %v362, %v360
        %v419 = vpack.c.b16 %v365, %v363
        %v420 = vpack.c.b16 %v366, %v364
        %v421 = vpack.c.b16 %v369, %v367
        %v422 = vpack.c.b16 %v370, %v368
        %v423 = vpack.c.b16 %v373, %v371
        %v424 = vpack.c.b16 %v374, %v372
        %v425 = vpack.c.b16 %v377, %v375
        %v426 = vpack.c.b16 %v378, %v376
        %v427 = vpack.c.b16 %v381, %v379
        %v428 = vpack.c.b16 %v382, %v380
        %v429 = vpack.c.b16 %v385, %v383
        %v430 = vpack.c.b16 %v386, %v384
        %v431 = vpack.c.b16 %v389, %v387
        %v432 = vpack.c.b16 %v390, %v388
        %v433 = vpack.c.b16 %v393, %v391
        %v434 = vpack.c.b16 %v394, %v392
        %v435 = vpack.c.b16 %v397, %v395
        %v436 = vpack.c.b16 %v398, %v396
        %v437 = vpack.c.b16 %v401, %v399
        %v438 = vpack.c.b16 %v402, %v400
        %v439 = vpack.c.b16 %v405, %v403
        %v440 = vpack.c.b16 %v406, %v404
        %v441 = vpack.c.b16 %v409, %v407
        %v442 = vpack.c.b16 %v410, %v408
        %475 = vmatprep.subr.bf16.mxu0 %v412
        %476 = vmatpush1.bf16.msra.mxu0 %v411
        %477 = vmatprep.subr.bf16.mxu0 %v414
        %478 = vmatpush1.bf16.msra.mxu0 %v413
        %479 = vmatprep.subr.bf16.mxu0 %v416
        %480 = vmatpush1.bf16.msra.mxu0 %v415
        %481 = vmatprep.subr.bf16.mxu0 %v418
        %482 = vmatpush1.bf16.msra.mxu0 %v417
        %483 = vmatprep.subr.bf16.mxu0 %v420
        %484 = vmatpush1.bf16.msra.mxu0 %v419
        %485 = vmatprep.subr.bf16.mxu0 %v422
        %486 = vmatpush1.bf16.msra.mxu0 %v421
        %487 = vmatprep.subr.bf16.mxu0 %v424
        %488 = vmatpush1.bf16.msra.mxu0 %v423
        %489 = vmatprep.subr.bf16.mxu0 %v426
        %490 = vmatpush1.bf16.msra.mxu0 %v425
        %491 = vmatprep.subr.bf16.mxu0 %v428
        %492 = vmatpush1.bf16.msra.mxu0 %v427
        %493 = vmatprep.subr.bf16.mxu0 %v430
        %494 = vmatpush1.bf16.msra.mxu0 %v429
        %495 = vmatprep.subr.bf16.mxu0 %v432
        %496 = vmatpush1.bf16.msra.mxu0 %v431
        %497 = vmatprep.subr.bf16.mxu0 %v434
        %498 = vmatpush1.bf16.msra.mxu0 %v433
        %499 = vmatprep.subr.bf16.mxu0 %v436
        %500 = vmatpush1.bf16.msra.mxu0 %v435
        %501 = vmatprep.subr.bf16.mxu0 %v438
        %502 = vmatpush1.bf16.msra.mxu0 %v437
        %503 = vmatprep.subr.bf16.mxu0 %v440
        %504 = vmatpush1.bf16.msra.mxu0 %v439
        %505 = vmatprep.subr.bf16.mxu0 %v442
        %506 = vmatpush1.bf16.msra.mxu0 %v441
        %507 = vmatprep.mubr.bf16.mxu0 %v282
        %508 = vmatmul.mubr.bf16.gmra.mrb[0].mxu0 %v281
        %v509 = vpop.f32.mrb[0].mxu0
        %v510 = vadd.f32 0.0, %v509
        %v511 = vpop.f32.mrb[0].mxu0
        %v512 = vadd.f32 0.0, %v511
        %v513 = vpop.f32.mrb[0].mxu0
        %v514 = vpop.f32.mrb[0].mxu0
        %515 = vdwg.mxu0
        %v516 = vmul.f32 %v510, 0.5
        %v517 = vmul.f32 %v512, 0.5
        %v518 = vmul.f32 %v510, 0.70710677
        %v519 = vmul.f32 %v512, 0.70710677
        %v520 = verf.f32.pop %v518
        %v521 = verf.f32.pop %v519
        %v522 = vadd.f32 %v520, 1.0
        %v523 = vadd.f32 %v521, 1.0
        %v524 = vmul.f32 %v516, %v522
        %v525 = vmul.f32 %v517, %v523
        %v526 = vpack.c.bf16 %v524, %v524
        %v527 = vpack.c.bf16 %v525, %v525
        %v528 = vld [vmem:[#allocation8] sm:$0xff]
        %v529 = vld [vmem:[#allocation8 + $0x8] sm:$0xff]
        %v530 = vld [vmem:[#allocation8 + $0x10] sm:$0xff]
        %v531 = vld [vmem:[#allocation8 + $0x18] sm:$0xff]
        %v532 = vld [vmem:[#allocation8 + $0x20] sm:$0xff]
        %v533 = vld [vmem:[#allocation8 + $0x28] sm:$0xff]
        %v534 = vld [vmem:[#allocation8 + $0x30] sm:$0xff]
        %v535 = vld [vmem:[#allocation8 + $0x38] sm:$0xff]
        %v536 = vld [vmem:[#allocation8 + $0x40] sm:$0xff]
        %v537 = vld [vmem:[#allocation8 + $0x48] sm:$0xff]
        %v538 = vld [vmem:[#allocation8 + $0x50] sm:$0xff]
        %v539 = vld [vmem:[#allocation8 + $0x58] sm:$0xff]
        %v540 = vld [vmem:[#allocation8 + $0x60] sm:$0xff]
        %v541 = vld [vmem:[#allocation8 + $0x68] sm:$0xff]
        %v542 = vld [vmem:[#allocation8 + $0x70] sm:$0xff]
        %v543 = vld [vmem:[#allocation8 + $0x78] sm:$0xff]
        %v544 = vld [vmem:[#allocation8 + $0x80] sm:$0xff]
        %v545 = vld [vmem:[#allocation8 + $0x88] sm:$0xff]
        %v546 = vld [vmem:[#allocation8 + $0x90] sm:$0xff]
        %v547 = vld [vmem:[#allocation8 + $0x98] sm:$0xff]
        %v548 = vld [vmem:[#allocation8 + $0xa0] sm:$0xff]
        %v549 = vld [vmem:[#allocation8 + $0xa8] sm:$0xff]
        %v550 = vld [vmem:[#allocation8 + $0xb0] sm:$0xff]
        %v551 = vld [vmem:[#allocation8 + $0xb8] sm:$0xff]
        %v552 = vld [vmem:[#allocation8 + $0xc0] sm:$0xff]
        %v553 = vld [vmem:[#allocation8 + $0xc8] sm:$0xff]
        %v554 = vld [vmem:[#allocation8 + $0xd0] sm:$0xff]
        %v555 = vld [vmem:[#allocation8 + $0xd8] sm:$0xff]
        %v556 = vld [vmem:[#allocation8 + $0xe0] sm:$0xff]
        %v557 = vld [vmem:[#allocation8 + $0xe8] sm:$0xff]
        %v558 = vld [vmem:[#allocation8 + $0xf0] sm:$0xff]
        %v559 = vld [vmem:[#allocation8 + $0xf8] sm:$0xff]
        %v592 = vunpack.c.l.b16 %v528
        %v593 = vunpack.c.h.b16 %v528
        %v594 = vunpack.c.l.b16 %v529
        %v595 = vunpack.c.h.b16 %v529
        %v596 = vunpack.c.l.b16 %v530
        %v597 = vunpack.c.h.b16 %v530
        %v598 = vunpack.c.l.b16 %v531
        %v599 = vunpack.c.h.b16 %v531
        %v600 = vunpack.c.l.b16 %v532
        %v601 = vunpack.c.h.b16 %v532
        %v602 = vunpack.c.l.b16 %v533
        %v603 = vunpack.c.h.b16 %v533
        %v604 = vunpack.c.l.b16 %v534
        %v605 = vunpack.c.h.b16 %v534
        %v606 = vunpack.c.l.b16 %v535
        %v607 = vunpack.c.h.b16 %v535
        %v608 = vunpack.c.l.b16 %v536
        %v609 = vunpack.c.h.b16 %v536
        %v610 = vunpack.c.l.b16 %v537
        %v611 = vunpack.c.h.b16 %v537
        %v612 = vunpack.c.l.b16 %v538
        %v613 = vunpack.c.h.b16 %v538
        %v614 = vunpack.c.l.b16 %v539
        %v615 = vunpack.c.h.b16 %v539
        %v616 = vunpack.c.l.b16 %v540
        %v617 = vunpack.c.h.b16 %v540
        %v618 = vunpack.c.l.b16 %v541
        %v619 = vunpack.c.h.b16 %v541
        %v620 = vunpack.c.l.b16 %v542
        %v621 = vunpack.c.h.b16 %v542
        %v622 = vunpack.c.l.b16 %v543
        %v623 = vunpack.c.h.b16 %v543
        %v624 = vunpack.c.l.b16 %v544
        %v625 = vunpack.c.h.b16 %v544
        %v626 = vunpack.c.l.b16 %v545
        %v627 = vunpack.c.h.b16 %v545
        %v628 = vunpack.c.l.b16 %v546
        %v629 = vunpack.c.h.b16 %v546
        %v630 = vunpack.c.l.b16 %v547
        %v631 = vunpack.c.h.b16 %v547
        %v632 = vunpack.c.l.b16 %v548
        %v633 = vunpack.c.h.b16 %v548
        %v634 = vunpack.c.l.b16 %v549
        %v635 = vunpack.c.h.b16 %v549
        %v636 = vunpack.c.l.b16 %v550
        %v637 = vunpack.c.h.b16 %v550
        %v638 = vunpack.c.l.b16 %v551
        %v639 = vunpack.c.h.b16 %v551
        %v640 = vunpack.c.l.b16 %v552
        %v641 = vunpack.c.h.b16 %v552
        %v642 = vunpack.c.l.b16 %v553
        %v643 = vunpack.c.h.b16 %v553
        %v644 = vunpack.c.l.b16 %v554
        %v645 = vunpack.c.h.b16 %v554
        %v646 = vunpack.c.l.b16 %v555
        %v647 = vunpack.c.h.b16 %v555
        %v648 = vunpack.c.l.b16 %v556
        %v649 = vunpack.c.h.b16 %v556
        %v650 = vunpack.c.l.b16 %v557
        %v651 = vunpack.c.h.b16 %v557
        %v652 = vunpack.c.l.b16 %v558
        %v653 = vunpack.c.h.b16 %v558
        %v654 = vunpack.c.l.b16 %v559
        %v655 = vunpack.c.h.b16 %v559
        %v656 = vpack.c.b16 %v594, %v592
        %v657 = vpack.c.b16 %v595, %v593
        %v658 = vpack.c.b16 %v598, %v596
        %v659 = vpack.c.b16 %v599, %v597
        %v660 = vpack.c.b16 %v602, %v600
        %v661 = vpack.c.b16 %v603, %v601
        %v662 = vpack.c.b16 %v606, %v604
        %v663 = vpack.c.b16 %v607, %v605
        %v664 = vpack.c.b16 %v610, %v608
        %v665 = vpack.c.b16 %v611, %v609
        %v666 = vpack.c.b16 %v614, %v612
        %v667 = vpack.c.b16 %v615, %v613
        %v668 = vpack.c.b16 %v618, %v616
        %v669 = vpack.c.b16 %v619, %v617
        %v670 = vpack.c.b16 %v622, %v620
        %v671 = vpack.c.b16 %v623, %v621
        %v672 = vpack.c.b16 %v626, %v624
        %v673 = vpack.c.b16 %v627, %v625
        %v674 = vpack.c.b16 %v630, %v628
        %v675 = vpack.c.b16 %v631, %v629
        %v676 = vpack.c.b16 %v634, %v632
        %v677 = vpack.c.b16 %v635, %v633
        %v678 = vpack.c.b16 %v638, %v636
        %v679 = vpack.c.b16 %v639, %v637
        %v680 = vpack.c.b16 %v642, %v640
        %v681 = vpack.c.b16 %v643, %v641
        %v682 = vpack.c.b16 %v646, %v644
        %v683 = vpack.c.b16 %v647, %v645
        %v684 = vpack.c.b16 %v650, %v648
        %v685 = vpack.c.b16 %v651, %v649
        %v686 = vpack.c.b16 %v654, %v652
        %v687 = vpack.c.b16 %v655, %v653
        %720 = vmatprep.subr.bf16.mxu0 %v657
        %721 = vmatpush1.bf16.msra.mxu0 %v656
        %722 = vmatprep.subr.bf16.mxu0 %v659
        %723 = vmatpush1.bf16.msra.mxu0 %v658
        %724 = vmatprep.subr.bf16.mxu0 %v661
        %725 = vmatpush1.bf16.msra.mxu0 %v660
        %726 = vmatprep.subr.bf16.mxu0 %v663
        %727 = vmatpush1.bf16.msra.mxu0 %v662
        %728 = vmatprep.subr.bf16.mxu0 %v665
        %729 = vmatpush1.bf16.msra.mxu0 %v664
        %730 = vmatprep.subr.bf16.mxu0 %v667
        %731 = vmatpush1.bf16.msra.mxu0 %v666
        %732 = vmatprep.subr.bf16.mxu0 %v669
        %733 = vmatpush1.bf16.msra.mxu0 %v668
        %734 = vmatprep.subr.bf16.mxu0 %v671
        %735 = vmatpush1.bf16.msra.mxu0 %v670
        %736 = vmatprep.subr.bf16.mxu0 %v673
        %737 = vmatpush1.bf16.msra.mxu0 %v672
        %738 = vmatprep.subr.bf16.mxu0 %v675
        %739 = vmatpush1.bf16.msra.mxu0 %v674
        %740 = vmatprep.subr.bf16.mxu0 %v677
        %741 = vmatpush1.bf16.msra.mxu0 %v676
        %742 = vmatprep.subr.bf16.mxu0 %v679
        %743 = vmatpush1.bf16.msra.mxu0 %v678
        %744 = vmatprep.subr.bf16.mxu0 %v681
        %745 = vmatpush1.bf16.msra.mxu0 %v680
        %746 = vmatprep.subr.bf16.mxu0 %v683
        %747 = vmatpush1.bf16.msra.mxu0 %v682
        %748 = vmatprep.subr.bf16.mxu0 %v685
        %749 = vmatpush1.bf16.msra.mxu0 %v684
        %750 = vmatprep.subr.bf16.mxu0 %v687
        %751 = vmatpush1.bf16.msra.mxu0 %v686
        %752 = vmatprep.mubr.bf16.mxu0 %v527
        %753 = vmatmul.mubr.bf16.gmra.mrb[0].mxu0 %v526
        %v754 = vpop.f32.mrb[0].mxu0
        %v755 = vadd.f32 0.0, %v754
        %v756 = vpop.f32.mrb[0].mxu0
        %v757 = vadd.f32 0.0, %v756
        %v758 = vpop.f32.mrb[0].mxu0
        %v759 = vpop.f32.mrb[0].mxu0
        %760 = vdwg.mxu0
        %vm761 = vcmp.gt.f32.partialorder %v755, 0.01
        %vm762 = vcmp.gt.f32.partialorder %v757, 0.01
        %v763 = vsub.f32 %v755, 0.01
        %v764 = vsub.f32 %v757, 0.01
        %vm765 = vcmp.lt.f32.partialorder %v755, -0.01
        %vm766 = vcmp.lt.f32.partialorder %v757, -0.01
        %v767 = vadd.f32 %v755, 0.01
        %v768 = vadd.f32 %v757, 0.01
        %v769 = vsel %vm765, %v767, 0.0
        %v770 = vsel %vm766, %v768, 0.0
        %v771 = vsel %vm761, %v763, %v769
        %v772 = vsel %vm762, %v764, %v770
        %773 = vst [vmem:[%s278] sm:$0xff] %v771
        %774 = vst [vmem:[%s278 + $0x8] sm:$0xff] %v772
        %s775 = sand.u32 %s127, 1
        %s776 = scalar_lea.sflag [#allocation4], %s775
        %s777 = sand.u32 %s127, 1
        %s778 = smul.addr %s777, 16
        %s779 = scalar_lea.vmem [#allocation10], %s778
        // Predicated region
        $region53: #{block_forward.2} parent=35 // pred_check
          %p780 = pneg %p137
        $region54: #{block_forward.2} parent=35 // pred_check_branch
          %782 = sbr.rel (%p780) target = $region56
        $region55: #{block_forward.2} parent=35 // pred_region
          %s784 = ssub.s32 256, 256
          %785 = vsyncadd %s776, %s784
          %s786 = smul.addr %s25, 2
          %s787 = smul.addr %s786, 128
          %s788 = scalar_lea.hbm %s4, %s787
          %s790 = sshll.u32 %s779, 4
          %s791 = int_to_ptr.vmem [resolvable:$true] %s790
          %793 = dma.vmem_to_hbm [thread:$0]  %s791, 256, %s788, %s776
        $region56: #{block_forward.2} parent=35 // pred_fallthru
          _
      $region36: #{block_forward.2} parent=5 // pred_fallthru
        _
      %p794 = scmp.le.s32.totalorder 2, %s20
      // Predicated region
      $region57: #{block_forward.2} parent=5 // pred_check
        %p795 = pneg %p794
      $region58: #{block_forward.2} parent=5 // pred_check_branch
        %797 = sbr.rel (%p795) target = $region60
      $region59: #{block_forward.2} parent=5 // pred_region
        %s798 = ssub.s32 %s20, 2
        // Predicated region
        $region61: #{block_forward.2} parent=59 // pred_check
          %p799 = pneg %p143
        $region62: #{block_forward.2} parent=59 // pred_check_branch
          %801 = sbr.rel (%p799) target = $region64
        $region63: #{block_forward.2} parent=59 // pred_region
          %s802 = sand.u32 %s128, 1
          %s803 = scalar_lea.sflag [#allocation4], %s802
          %s804 = sand.u32 %s128, 1
          %s805 = smul.addr %s804, 16
          %s806 = scalar_lea.vmem [#allocation10], %s805
          %807 = dma.done %s803, 256
        $region64: #{block_forward.2} parent=59 // pred_fallthru
          _
      $region60: #{block_forward.2} parent=5 // pred_fallthru
        _
    $region6: #{block_forward.2} parent=1 // loop_footer
      %s24 = sadd.s32 1, %s20
    $region7: #{block_forward.2} parent=1 // loop_footer_branch
      %19 = sbr.rel target = $region3
    $region8: #{block_forward.2} parent=1 // loop_exit
      _
    %808 = vsyncpa [#allocation3], 1
    %s809 = scalar_lea.sflag [#allocation3], 1
    %810 = vsyncpa %s809, 1
    %811 = vsyncpa [#allocation6], 1
    %s812 = scalar_lea.sflag [#allocation6], 1
    %813 = vsyncpa %s812, 1
    %814 = vsyncpa [#allocation9], 1
    %815 = vsyncpa [#allocation4], 1
    %s816 = scalar_lea.sflag [#allocation4], 1
    %817 = vsyncpa %s816, 1

// kernel: reverse.1
$region0: #{reverse.1}
  #allocation0 [shape = 's32[1]{0}', space=sflag, size = 0x4, scoped, tag = 'scoped memory for reverse.1']
  %s0 = inlined_call_operand.vmem [shape: f32[2,32,16,7], index: 0, kind: input, shape index: {}]
  %s1 = inlined_call_operand.vmem [shape: f32[2,32,16,7], index: 1, kind: output, shape index: {}]
  %s2 = scalar_lea.vmem %s0, 96
  %v3 = vld [vmem:[%s2] sm:$0xff]
  %4 = vst [vmem:[%s1] sm:$0xff] %v3
  %s5 = scalar_lea.vmem %s0, 208
  %v6 = vld [vmem:[%s5] sm:$0xff]
  %s7 = scalar_lea.vmem %s1, 112
  %8 = vst [vmem:[%s7] sm:$0xff] %v6
  %s9 = scalar_lea.vmem %s0, 80
  %v10 = vld [vmem:[%s9] sm:$0xff]
  %s11 = scalar_lea.vmem %s1, 16
  %12 = vst [vmem:[%s11] sm:$0xff] %v10
  %s13 = scalar_lea.vmem %s0, 192
  %v14 = vld [vmem:[%s13] sm:$0xff]
  %s15 = scalar_lea.vmem %s1, 128
  %16 = vst [vmem:[%s15] sm:$0xff] %v14
  %s17 = scalar_lea.vmem %s0, 64
  %v18 = vld [vmem:[%s17] sm:$0xff]
  %s19 = scalar_lea.vmem %s1, 32
  %20 = vst [vmem:[%s19] sm:$0xff] %v18
  %s21 = scalar_lea.vmem %s0, 176
  %v22 = vld [vmem:[%s21] sm:$0xff]
  %s23 = scalar_lea.vmem %s1, 144
  %24 = vst [vmem:[%s23] sm:$0xff] %v22
  %s25 = scalar_lea.vmem %s0, 48
  %v26 = vld [vmem:[%s25] sm:$0xff]
  %s27 = scalar_lea.vmem %s1, 48
  %28 = vst [vmem:[%s27] sm:$0xff] %v26
  %s29 = scalar_lea.vmem %s0, 160
  %v30 = vld [vmem:[%s29] sm:$0xff]
  %s31 = scalar_lea.vmem %s1, 160
  %32 = vst [vmem:[%s31] sm:$0xff] %v30
  %s33 = scalar_lea.vmem %s0, 32
  %v34 = vld [vmem:[%s33] sm:$0xff]
  %s35 = scalar_lea.vmem %s1, 64
  %36 = vst [vmem:[%s35] sm:$0xff] %v34
  %s37 = scalar_lea.vmem %s0, 144
  %v38 = vld [vmem:[%s37] sm:$0xff]
  %s39 = scalar_lea.vmem %s1, 176
  %40 = vst [vmem:[%s39] sm:$0xff] %v38
  %s41 = scalar_lea.vmem %s0, 16
  %v42 = vld [vmem:[%s41] sm:$0xff]
  %s43 = scalar_lea.vmem %s1, 80
  %44 = vst [vmem:[%s43] sm:$0xff] %v42
  %s45 = scalar_lea.vmem %s0, 128
  %v46 = vld [vmem:[%s45] sm:$0xff]
  %s47 = scalar_lea.vmem %s1, 192
  %48 = vst [vmem:[%s47] sm:$0xff] %v46
  %v49 = vld [vmem:[%s0] sm:$0xff]
  %s50 = scalar_lea.vmem %s1, 96
  %51 = vst [vmem:[%s50] sm:$0xff] %v49
  %s52 = scalar_lea.vmem %s0, 112
  %v53 = vld [vmem:[%s52] sm:$0xff]
  %s54 = scalar_lea.vmem %s1, 208
  %55 = vst [vmem:[%s54] sm:$0xff] %v53
  %s56 = scalar_lea.vmem %s0, 104
  %v57 = vld [vmem:[%s56] sm:$0xff]
  %s58 = scalar_lea.vmem %s1, 8
  %59 = vst [vmem:[%s58] sm:$0xff] %v57
  %s60 = scalar_lea.vmem %s0, 216
  %v61 = vld [vmem:[%s60] sm:$0xff]
  %s62 = scalar_lea.vmem %s1, 120
  %63 = vst [vmem:[%s62] sm:$0xff] %v61
  %s64 = scalar_lea.vmem %s0, 88
  %v65 = vld [vmem:[%s64] sm:$0xff]
  %s66 = scalar_lea.vmem %s1, 24
  %67 = vst [vmem:[%s66] sm:$0xff] %v65
  %s68 = scalar_lea.vmem %s0, 200
  %v69 = vld [vmem:[%s68] sm:$0xff]
  %s70 = scalar_lea.vmem %s1, 136
  %71 = vst [vmem:[%s70] sm:$0xff] %v69
  %s72 = scalar_lea.vmem %s0, 72
  %v73 = vld [vmem:[%s72] sm:$0xff]
  %s74 = scalar_lea.vmem %s1, 40
  %75 = vst [vmem:[%s74] sm:$0xff] %v73
  %s76 = scalar_lea.vmem %s0, 184
  %v77 = vld [vmem:[%s76] sm:$0xff]
  %s78 = scalar_lea.vmem %s1, 152
  %79 = vst [vmem:[%s78] sm:$0xff] %v77
  %s80 = scalar_lea.vmem %s0, 56
  %v81 = vld [vmem:[%s80] sm:$0xff]
  %s82 = scalar_lea.vmem %s1, 56
  %83 = vst [vmem:[%s82] sm:$0xff] %v81
  %s84 = scalar_lea.vmem %s0, 168
  %v85 = vld [vmem:[%s84] sm:$0xff]
  %s86 = scalar_lea.vmem %s1, 168
  %87 = vst [vmem:[%s86] sm:$0xff] %v85
  %s88 = scalar_lea.vmem %s0, 40
  %v89 = vld [vmem:[%s88] sm:$0xff]
  %s90 = scalar_lea.vmem %s1, 72
  %91 = vst [vmem:[%s90] sm:$0xff] %v89
  %s92 = scalar_lea.vmem %s0, 152
  %v93 = vld [vmem:[%s92] sm:$0xff]
  %s94 = scalar_lea.vmem %s1, 184
  %95 = vst [vmem:[%s94] sm:$0xff] %v93
  %s96 = scalar_lea.vmem %s0, 24
  %v97 = vld [vmem:[%s96] sm:$0xff]
  %s98 = scalar_lea.vmem %s1, 88
  %99 = vst [vmem:[%s98] sm:$0xff] %v97
  %s100 = scalar_lea.vmem %s0, 136
  %v101 = vld [vmem:[%s100] sm:$0xff]
  %s102 = scalar_lea.vmem %s1, 200
  %103 = vst [vmem:[%s102] sm:$0xff] %v101
  %s104 = scalar_lea.vmem %s0, 8
  %v105 = vld [vmem:[%s104] sm:$0xff]
  %s106 = scalar_lea.vmem %s1, 104
  %107 = vst [vmem:[%s106] sm:$0xff] %v105
  %s108 = scalar_lea.vmem %s0, 120
  %v109 = vld [vmem:[%s108] sm:$0xff]
  %s110 = scalar_lea.vmem %s1, 216
  %111 = vst [vmem:[%s110] sm:$0xff] %v109

// kernel: block_forward.3
$region0: #{block_forward.3}
  #allocation0 [shape = 'u32[]', space=smem, size = 0x4, offset = 0x4, fixed_abs, tag = 'smem constant byte address 0x4 - core index']
  #allocation1 [shape = 'u32[144,128]{1,0:T(1,128)}', space=vmem, size = 0x12000, scoped, tag = 'internal scratch']
  %s0 = inlined_call_operand.hbm [shape: f32[128,128], index: 0, kind: input, shape index: {}, may-alias: {0,9}]
  %s1 = inlined_call_operand.hbm [shape: f32[128,128], index: 1, kind: input, shape index: {}]
  %s2 = inlined_call_operand.hbm [shape: f32[128,128], index: 2, kind: input, shape index: {}]
  %s3 = inlined_call_operand.hbm [shape: f32[1,128], index: 3, kind: input, shape index: {}]
  %s4 = inlined_call_operand.hbm [shape: f32[1,128], index: 4, kind: input, shape index: {}]
  %s5 = inlined_call_operand.hbm [shape: bf16[128,512], index: 5, kind: input, shape index: {}]
  %s6 = inlined_call_operand.hbm [shape: f32[1,512], index: 6, kind: input, shape index: {}]
  %s7 = inlined_call_operand.hbm [shape: bf16[512,128], index: 7, kind: input, shape index: {}]
  %s8 = inlined_call_operand.hbm [shape: f32[1,128], index: 8, kind: input, shape index: {}]
  %s9 = inlined_call_operand.hbm [shape: f32[128,128], index: 9, kind: output, shape index: {}, may-alias: {0,9}]
  %s10 = sld [smem:[#allocation0]]
  $region105: #{block_forward.3} parent=0
    _
  %s12 = ssub.s32 1, %s10
  %s13 = scalar_select 0, %s12, %s10
  $region1: #{block_forward.3} parent=0
    #allocation2 [shape = 'u8[32768]{0}', space=vmem, size = 0x8000, scoped, tag = 'input window, operand 0']
    #allocation3 [shape = 's32[2]{0}', space=sflag, size = 0x8, scoped, tag = 'scoped memory for block_forward.3']
    #allocation4 [shape = 's32[2]{0}', space=sflag, size = 0x8, scoped, tag = 'scoped memory for block_forward.3']
    #allocation5 [shape = 'u8[32768]{0}', space=vmem, size = 0x8000, scoped, tag = 'input window, operand 1']
    #allocation6 [shape = 's32[2]{0}', space=sflag, size = 0x8, scoped, tag = 'scoped memory for block_forward.3']
    #allocation7 [shape = 'u8[65536]{0}', space=vmem, size = 0x10000, scoped, tag = 'input window, operand 2, single buffered']
    #allocation8 [shape = 'u8[512]{0}', space=vmem, size = 0x400, scoped, tag = 'input window, operand 3, single buffered']
    #allocation9 [shape = 's32[1]{0}', space=sflag, size = 0x4, scoped, tag = 'scoped memory for block_forward.3']
    #allocation10 [shape = 'u8[512]{0}', space=vmem, size = 0x400, scoped, tag = 'input window, operand 4, single buffered']
    #allocation11 [shape = 'u8[131072]{0}', space=vmem, size = 0x20000, scoped, tag = 'input window, operand 5, single buffered']
    #allocation12 [shape = 's32[1]{0}', space=sflag, size = 0x4, scoped, tag = 'scoped memory for block_forward.3']
    #allocation13 [shape = 'u8[2048]{0}', space=vmem, size = 0x800, scoped, tag = 'input window, operand 6, single buffered']
    #allocation14 [shape = 'u8[131072]{0}', space=vmem, size = 0x20000, scoped, tag = 'input window, operand 7, single buffered']
    #allocation15 [shape = 's32[1]{0}', space=sflag, size = 0x4, scoped, tag = 'scoped memory for block_forward.3']
    #allocation16 [shape = 'u8[512]{0}', space=vmem, size = 0x400, scoped, tag = 'input window, operand 8, single buffered']
    #allocation17 [shape = 'u8[32768]{0}', space=vmem, size = 0x8000, scoped, tag = 'output window, operand 0']
    %14 = vsyncpa [#allocation3], 0
    %s15 = scalar_lea.sflag [#allocation3], 1
    %16 = vsyncpa %s15, 0
    %17 = vsyncpa [#allocation6], 0
    %s18 = scalar_lea.sflag [#allocation6], 1
    %19 = vsyncpa %s18, 0
    %20 = vsyncpa [#allocation9], 0
    %21 = vsyncpa [#allocation12], 0
    %22 = vsyncpa [#allocation15], 0
    %23 = vsyncpa [#allocation4], 0
    %s24 = scalar_lea.sflag [#allocation4], 1
    %25 = vsyncpa %s24, 0
    loop: start=0, step=1, limit=6
    $region2: #{block_forward.3} parent=1 // loop_pre_header
      _
    $region3: #{block_forward.3} parent=1 // loop_header
      %s27 = sphi 0, %s31
      %p28 = scmp.ge.s32.totalorder %s27, 6
      %s37 = sphi 0, %s39
      %s40 = sphi 0, %s37
      %s41 = sphi 0, %s40
      %s57 = sphi 0, %s41
      %s63 = sphi 0, %s65
      %s66 = sphi 0, %s63
      %s67 = sphi 0, %s66
      %s83 = sphi 0, %s67
      %s87 = sphi 0, %s87
      %s89 = sphi 0, %s87
      %s90 = sphi 0, %s89
      %s104 = sphi 0, %s90
      %s108 = sphi 0, %s108
      %s110 = sphi 0, %s108
      %s111 = sphi 0, %s110
      %s125 = sphi 0, %s111
      %s129 = sphi 0, %s129
      %s131 = sphi 0, %s129
      %s132 = sphi 0, %s131
      %s146 = sphi 0, %s132
      %s150 = sphi 0, %s150
      %s152 = sphi 0, %s150
      %s153 = sphi 0, %s152
      %s167 = sphi 0, %s153
      %s171 = sphi 0, %s171
      %s173 = sphi 0, %s171
      %s174 = sphi 0, %s173
      %s188 = sphi 0, %s174
      %s192 = sphi 0, %s192
      %s194 = sphi 0, %s192
      %s195 = sphi 0, %s194
      %s209 = sphi 0, %s195
      %s213 = sphi 0, %s213
      %s215 = sphi 0, %s213
      %s216 = sphi 0, %s215
      %s230 = sphi 0, %s216
      %s236 = sphi 0, %s238
      %s239 = sphi 0, %s236
      %s240 = sphi 0, %s239
      %s256 = sphi 0, %s240
    $region4: #{block_forward.3} parent=1 // loop_header_branch
      %30 = sbr.rel (%p28) target = $region8
    $region5: #{block_forward.3} parent=1 // loop_body
      %s32 = ssub.s32 %s27, 1
      %s33 = ssub.s32 %s27, 2
      %s34 = sadd.s32 %s27, 1
      %s35 = ssub.s32 %s27, %s34
      %p36 = scmp.eq.s32.totalorder %s35, 0
      %s38 = sadd.s32 %s37, 1
      %s39 = scalar_select %p36, %s37, %s38
      %p42 = pneg %p36
      %p43 = scmp.eq.s32.totalorder %s27, 3
      %p44 = por %p42, %p43
      %p45 = scmp.ne.s32.totalorder %s37, %s40
      %p46 = scmp.eq.s32.totalorder %s27, 0
      %p47 = por %p45, %p46
      %p48 = scmp.ne.s32.totalorder %s37, %s40
      %p49 = scmp.eq.s32.totalorder %s32, 3
      %p50 = por %p48, %p49
      %p51 = scmp.ne.s32.totalorder %s40, %s41
      %p52 = scmp.eq.s32.totalorder %s32, 0
      %p53 = por %p51, %p52
      %p54 = scmp.ne.s32.totalorder %s40, %s41
      %p55 = scmp.eq.s32.totalorder %s33, 3
      %p56 = por %p54, %p55
      %p58 = scmp.ne.s32.totalorder %s41, %s57
      %p59 = scmp.eq.s32.totalorder %s33, 0
      %p60 = por %p58, %p59
      %s61 = ssub.s32 %s27, %s34
      %p62 = scmp.eq.s32.totalorder %s61, 0
      %s64 = sadd.s32 %s63, 1
      %s65 = scalar_select %p62, %s63, %s64
      %p68 = pneg %p62
      %p69 = scmp.eq.s32.totalorder %s27, 3
      %p70 = por %p68, %p69
      %p71 = scmp.ne.s32.totalorder %s63, %s66
      %p72 = scmp.eq.s32.totalorder %s27, 0
      %p73 = por %p71, %p72
      %p74 = scmp.ne.s32.totalorder %s63, %s66
      %p75 = scmp.eq.s32.totalorder %s32, 3
      %p76 = por %p74, %p75
      %p77 = scmp.ne.s32.totalorder %s66, %s67
      %p78 = scmp.eq.s32.totalorder %s32, 0
      %p79 = por %p77, %p78
      %p80 = scmp.ne.s32.totalorder %s66, %s67
      %p81 = scmp.eq.s32.totalorder %s33, 3
      %p82 = por %p80, %p81
      %p84 = scmp.ne.s32.totalorder %s67, %s83
      %p85 = scmp.eq.s32.totalorder %s33, 0
      %p86 = por %p84, %p85
      %s88 = sadd.s32 %s87, 1
      %p91 = scmp.eq.s32.totalorder %s27, 3
      %p92 = scmp.ne.s32.totalorder %s87, %s89
      %p93 = scmp.eq.s32.totalorder %s27, 0
      %p94 = por %p92, %p93
      %p95 = scmp.ne.s32.totalorder %s87, %s89
      %p96 = scmp.eq.s32.totalorder %s32, 3
      %p97 = por %p95, %p96
      %p98 = scmp.ne.s32.totalorder %s89, %s90
      %p99 = scmp.eq.s32.totalorder %s32, 0
      %p100 = por %p98, %p99
      %p101 = scmp.ne.s32.totalorder %s89, %s90
      %p102 = scmp.eq.s32.totalorder %s33, 3
      %p103 = por %p101, %p102
      %p105 = scmp.ne.s32.totalorder %s90, %s104
      %p106 = scmp.eq.s32.totalorder %s33, 0
      %p107 = por %p105, %p106
      %s109 = sadd.s32 %s108, 1
      %p112 = scmp.eq.s32.totalorder %s27, 3
      %p113 = scmp.ne.s32.totalorder %s108, %s110
      %p114 = scmp.eq.s32.totalorder %s27, 0
      %p115 = por %p113, %p114
      %p116 = scmp.ne.s32.totalorder %s108, %s110
      %p117 = scmp.eq.s32.totalorder %s32, 3
      %p118 = por %p116, %p117
      %p119 = scmp.ne.s32.totalorder %s110, %s111
      %p120 = scmp.eq.s32.totalorder %s32, 0
      %p121 = por %p119, %p120
      %p122 = scmp.ne.s32.totalorder %s110, %s111
      %p123 = scmp.eq.s32.totalorder %s33, 3
      %p124 = por %p122, %p123
      %p126 = scmp.ne.s32.totalorder %s111, %s125
      %p127 = scmp.eq.s32.totalorder %s33, 0
      %p128 = por %p126, %p127
      %s130 = sadd.s32 %s129, 1
      %p133 = scmp.eq.s32.totalorder %s27, 3
      %p134 = scmp.ne.s32.totalorder %s129, %s131
      %p135 = scmp.eq.s32.totalorder %s27, 0
      %p136 = por %p134, %p135
      %p137 = scmp.ne.s32.totalorder %s129, %s131
      %p138 = scmp.eq.s32.totalorder %s32, 3
      %p139 = por %p137, %p138
      %p140 = scmp.ne.s32.totalorder %s131, %s132
      %p141 = scmp.eq.s32.totalorder %s32, 0
      %p142 = por %p140, %p141
      %p143 = scmp.ne.s32.totalorder %s131, %s132
      %p144 = scmp.eq.s32.totalorder %s33, 3
      %p145 = por %p143, %p144
      %p147 = scmp.ne.s32.totalorder %s132, %s146
      %p148 = scmp.eq.s32.totalorder %s33, 0
      %p149 = por %p147, %p148
      %s151 = sadd.s32 %s150, 1
      %p154 = scmp.eq.s32.totalorder %s27, 3
      %p155 = scmp.ne.s32.totalorder %s150, %s152
      %p156 = scmp.eq.s32.totalorder %s27, 0
      %p157 = por %p155, %p156
      %p158 = scmp.ne.s32.totalorder %s150, %s152
      %p159 = scmp.eq.s32.totalorder %s32, 3
      %p160 = por %p158, %p159
      %p161 = scmp.ne.s32.totalorder %s152, %s153
      %p162 = scmp.eq.s32.totalorder %s32, 0
      %p163 = por %p161, %p162
      %p164 = scmp.ne.s32.totalorder %s152, %s153
      %p165 = scmp.eq.s32.totalorder %s33, 3
      %p166 = por %p164, %p165
      %p168 = scmp.ne.s32.totalorder %s153, %s167
      %p169 = scmp.eq.s32.totalorder %s33, 0
      %p170 = por %p168, %p169
      %s172 = sadd.s32 %s171, 1
      %p175 = scmp.eq.s32.totalorder %s27, 3
      %p176 = scmp.ne.s32.totalorder %s171, %s173
      %p177 = scmp.eq.s32.totalorder %s27, 0
      %p178 = por %p176, %p177
      %p179 = scmp.ne.s32.totalorder %s171, %s173
      %p180 = scmp.eq.s32.totalorder %s32, 3
      %p181 = por %p179, %p180
      %p182 = scmp.ne.s32.totalorder %s173, %s174
      %p183 = scmp.eq.s32.totalorder %s32, 0
      %p184 = por %p182, %p183
      %p185 = scmp.ne.s32.totalorder %s173, %s174
      %p186 = scmp.eq.s32.totalorder %s33, 3
      %p187 = por %p185, %p186
      %p189 = scmp.ne.s32.totalorder %s174, %s188
      %p190 = scmp.eq.s32.totalorder %s33, 0
      %p191 = por %p189, %p190
      %s193 = sadd.s32 %s192, 1
      %p196 = scmp.eq.s32.totalorder %s27, 3
      %p197 = scmp.ne.s32.totalorder %s192, %s194
      %p198 = scmp.eq.s32.totalorder %s27, 0
      %p199 = por %p197, %p198
      %p200 = scmp.ne.s32.totalorder %s192, %s194
      %p201 = scmp.eq.s32.totalorder %s32, 3
      %p202 = por %p200, %p201
      %p203 = scmp.ne.s32.totalorder %s194, %s195
      %p204 = scmp.eq.s32.totalorder %s32, 0
      %p205 = por %p203, %p204
      %p206 = scmp.ne.s32.totalorder %s194, %s195
      %p207 = scmp.eq.s32.totalorder %s33, 3
      %p208 = por %p206, %p207
      %p210 = scmp.ne.s32.totalorder %s195, %s209
      %p211 = scmp.eq.s32.totalorder %s33, 0
      %p212 = por %p210, %p211
      %s214 = sadd.s32 %s213, 1
      %p217 = scmp.eq.s32.totalorder %s27, 3
      %p218 = scmp.ne.s32.totalorder %s213, %s215
      %p219 = scmp.eq.s32.totalorder %s27, 0
      %p220 = por %p218, %p219
      %p221 = scmp.ne.s32.totalorder %s213, %s215
      %p222 = scmp.eq.s32.totalorder %s32, 3
      %p223 = por %p221, %p222
      %p224 = scmp.ne.s32.totalorder %s215, %s216
      %p225 = scmp.eq.s32.totalorder %s32, 0
      %p226 = por %p224, %p225
      %p227 = scmp.ne.s32.totalorder %s215, %s216
      %p228 = scmp.eq.s32.totalorder %s33, 3
      %p229 = por %p227, %p228
      %p231 = scmp.ne.s32.totalorder %s216, %s230
      %p232 = scmp.eq.s32.totalorder %s33, 0
      %p233 = por %p231, %p232
      %s234 = ssub.s32 %s27, %s34
      %p235 = scmp.eq.s32.totalorder %s234, 0
      %s237 = sadd.s32 %s236, 1
      %s238 = scalar_select %p235, %s236, %s237
      %p241 = pneg %p235
      %p242 = scmp.eq.s32.totalorder %s27, 3
      %p243 = por %p241, %p242
      %p244 = scmp.ne.s32.totalorder %s236, %s239
      %p245 = scmp.eq.s32.totalorder %s27, 0
      %p246 = por %p244, %p245
      %p247 = scmp.ne.s32.totalorder %s236, %s239
      %p248 = scmp.eq.s32.totalorder %s32, 3
      %p249 = por %p247, %p248
      %p250 = scmp.ne.s32.totalorder %s239, %s240
      %p251 = scmp.eq.s32.totalorder %s32, 0
      %p252 = por %p250, %p251
      %p253 = scmp.ne.s32.totalorder %s239, %s240
      %p254 = scmp.eq.s32.totalorder %s33, 3
      %p255 = por %p253, %p254
      %p257 = scmp.ne.s32.totalorder %s240, %s256
      %p258 = scmp.eq.s32.totalorder %s33, 0
      %p259 = por %p257, %p258
      %p260 = scmp.le.s32.totalorder 1, %s27
      %p261 = scmp.lt.s32.totalorder %s27, 5
      %p262 = pnand %p260, %p261
      %p263 = pneg %p262
      // Predicated region
      $region9: #{block_forward.3} parent=5 // pred_check
        _
      $region10: #{block_forward.3} parent=5 // pred_check_branch
        %265 = sbr.rel (%p262) target = $region12
      $region11: #{block_forward.3} parent=5 // pred_region
        %s266 = ssub.s32 %s27, 1
        // Predicated region
        $region13: #{block_forward.3} parent=11 // pred_check
          %p267 = pneg %p100
        $region14: #{block_forward.3} parent=11 // pred_check_branch
          %269 = sbr.rel (%p267) target = $region16
        $region15: #{block_forward.3} parent=11 // pred_region
          %s271 = ssub.s32 2048, 2048
          %272 = vsyncadd [#allocation6], %s271
          %s273 = sshll.u32 [#allocation7], 4
          %s274 = int_to_ptr.vmem [resolvable:$true] %s273
          %279 = dma.hbm_to_vmem [thread:$0]  %s2, 2048, %s274, [#allocation6], 128, 128, 8
        $region16: #{block_forward.3} parent=11 // pred_fallthru
          _
        // Predicated region
        $region17: #{block_forward.3} parent=11 // pred_check
          %p280 = pneg %p121
        $region18: #{block_forward.3} parent=11 // pred_check_branch
          %282 = sbr.rel (%p280) target = $region20
        $region19: #{block_forward.3} parent=11 // pred_region
          %s284 = ssub.s32 16, 16
          %285 = vsyncadd [#allocation9], %s284
          %s287 = sshll.u32 [#allocation8], 4
          %s288 = int_to_ptr.vmem [resolvable:$true] %s287
          %290 = dma.hbm_to_vmem [thread:$0]  %s3, 16, %s288, [#allocation9]
        $region20: #{block_forward.3} parent=11 // pred_fallthru
          _
        // Predicated region
        $region21: #{block_forward.3} parent=11 // pred_check
          %p291 = pneg %p142
        $region22: #{block_forward.3} parent=11 // pred_check_branch
          %293 = sbr.rel (%p291) target = $region24
        $region23: #{block_forward.3} parent=11 // pred_region
          %s295 = ssub.s32 16, 16
          %296 = vsyncadd [#allocation9], %s295
          %s298 = sshll.u32 [#allocation10], 4
          %s299 = int_to_ptr.vmem [resolvable:$true] %s298
          %301 = dma.hbm_to_vmem [thread:$0]  %s4, 16, %s299, [#allocation9]
        $region24: #{block_forward.3} parent=11 // pred_fallthru
          _
        // Predicated region
        $region25: #{block_forward.3} parent=11 // pred_check
          %p302 = pneg %p163
        $region26: #{block_forward.3} parent=11 // pred_check_branch
          %304 = sbr.rel (%p302) target = $region28
        $region27: #{block_forward.3} parent=11 // pred_region
          %s306 = ssub.s32 4096, 4096
          %307 = vsyncadd [#allocation12], %s306
          %s308 = sshll.u32 [#allocation11], 4
          %s309 = int_to_ptr.vmem [resolvable:$true] %s308
          %314 = dma.hbm_to_vmem [thread:$0]  %s5, 4096, %s309, [#allocation12], 256, 256, 16
        $region28: #{block_forward.3} parent=11 // pred_fallthru
          _
        // Predicated region
        $region29: #{block_forward.3} parent=11 // pred_check
          %p315 = pneg %p184
        $region30: #{block_forward.3} parent=11 // pred_check_branch
          %317 = sbr.rel (%p315) target = $region32
        $region31: #{block_forward.3} parent=11 // pred_region
          %s319 = ssub.s32 64, 64
          %320 = vsyncadd [#allocation12], %s319
          %s322 = sshll.u32 [#allocation13], 4
          %s323 = int_to_ptr.vmem [resolvable:$true] %s322
          %325 = dma.hbm_to_vmem [thread:$0]  %s6, 64, %s323, [#allocation12]
        $region32: #{block_forward.3} parent=11 // pred_fallthru
          _
        // Predicated region
        $region33: #{block_forward.3} parent=11 // pred_check
          %p326 = pneg %p205
        $region34: #{block_forward.3} parent=11 // pred_check_branch
          %328 = sbr.rel (%p326) target = $region36
        $region35: #{block_forward.3} parent=11 // pred_region
          %s330 = ssub.s32 4096, 4096
          %331 = vsyncadd [#allocation15], %s330
          %s332 = sshll.u32 [#allocation14], 4
          %s333 = int_to_ptr.vmem [resolvable:$true] %s332
          %338 = dma.hbm_to_vmem [thread:$0]  %s7, 4096, %s333, [#allocation15], 64, 64, 4
        $region36: #{block_forward.3} parent=11 // pred_fallthru
          _
        // Predicated region
        $region37: #{block_forward.3} parent=11 // pred_check
          %p339 = pneg %p226
        $region38: #{block_forward.3} parent=11 // pred_check_branch
          %341 = sbr.rel (%p339) target = $region40
        $region39: #{block_forward.3} parent=11 // pred_region
          %s343 = ssub.s32 16, 16
          %344 = vsyncadd [#allocation15], %s343
          %s346 = sshll.u32 [#allocation16], 4
          %s347 = int_to_ptr.vmem [resolvable:$true] %s346
          %349 = dma.hbm_to_vmem [thread:$0]  %s8, 16, %s347, [#allocation15]
        $region40: #{block_forward.3} parent=11 // pred_fallthru
          _
      $region12: #{block_forward.3} parent=5 // pred_fallthru
        _
      %p350 = scmp.lt.s32.totalorder %s27, 4
      // Predicated region
      $region41: #{block_forward.3} parent=5 // pred_check
        %p351 = pneg %p350
      $region42: #{block_forward.3} parent=5 // pred_check_branch
        %353 = sbr.rel (%p351) target = $region44
      $region43: #{block_forward.3} parent=5 // pred_region
        // Predicated region
        $region45: #{block_forward.3} parent=43 // pred_check
          %p354 = pneg %p47
        $region46: #{block_forward.3} parent=43 // pred_check_branch
          %356 = sbr.rel (%p354) target = $region48
        $region47: #{block_forward.3} parent=43 // pred_region
          %s357 = sand.u32 %s37, 1
          %s358 = scalar_lea.sflag [#allocation3], %s357
          %s359 = sand.u32 %s37, 1
          %s360 = smul.addr %s359, 32
          %s361 = scalar_lea.vmem [#allocation2], %s360
          %s362 = smul.u32 4, %s27
          %s364 = ssub.s32 512, 512
          %365 = vsyncadd %s358, %s364
          %s366 = smul.addr %s362, 128
          %s367 = scalar_lea.hbm %s0, %s366
          %s368 = sshll.u32 %s361, 4
          %s369 = int_to_ptr.vmem [resolvable:$true] %s368
          %374 = dma.hbm_to_vmem [thread:$0]  %s367, 512, %s369, %s358, 128, 128, 8
        $region48: #{block_forward.3} parent=43 // pred_fallthru
          _
        // Predicated region
        $region49: #{block_forward.3} parent=43 // pred_check
          %p375 = pneg %p73
        $region50: #{block_forward.3} parent=43 // pred_check_branch
          %377 = sbr.rel (%p375) target = $region52
        $region51: #{block_forward.3} parent=43 // pred_region
          %s378 = sand.u32 %s27, 1
          %s379 = scalar_lea.sflag [#allocation6], %s378
          %s380 = sand.u32 %s63, 1
          %s381 = smul.addr %s380, 32
          %s382 = scalar_lea.vmem [#allocation5], %s381
          %s383 = smul.u32 4, %s27
          %s385 = ssub.s32 512, 512
          %386 = vsyncadd %s379, %s385
          %s387 = smul.addr %s383, 128
          %s388 = scalar_lea.hbm %s1, %s387
          %s389 = sshll.u32 %s382, 4
          %s390 = int_to_ptr.vmem [resolvable:$true] %s389
          %395 = dma.hbm_to_vmem [thread:$0]  %s388, 512, %s390, %s379, 128, 128, 8
        $region52: #{block_forward.3} parent=43 // pred_fallthru
          _
      $region44: #{block_forward.3} parent=5 // pred_fallthru
        _
      %p396 = scmp.le.s32.totalorder 1, %s27
      %p397 = scmp.lt.s32.totalorder %s27, 5
      %p398 = pnand %p396, %p397
      %p399 = pneg %p398
      // Predicated region
      $region53: #{block_forward.3} parent=5 // pred_check
        _
      $region54: #{block_forward.3} parent=5 // pred_check_branch
        %401 = sbr.rel (%p398) target = $region56
      $region55: #{block_forward.3} parent=5 // pred_region
        %s402 = ssub.s32 %s27, 1
        %s403 = sand.u32 %s40, 1
        %s404 = scalar_lea.sflag [#allocation3], %s403
        %s405 = sand.u32 %s40, 1
        %s406 = smul.addr %s405, 32
        %s407 = scalar_lea.vmem [#allocation2], %s406
        // Predicated region
        $region57: #{block_forward.3} parent=55 // pred_check
          %p408 = pneg %p53
        $region58: #{block_forward.3} parent=55 // pred_check_branch
          %410 = sbr.rel (%p408) target = $region60
        $region59: #{block_forward.3} parent=55 // pred_region
          %411 = dma.done %s404, 512
        $region60: #{block_forward.3} parent=55 // pred_fallthru
          _
        %s412 = sand.u32 %s32, 1
        %s413 = scalar_lea.sflag [#allocation6], %s412
        %s414 = sand.u32 %s66, 1
        %s415 = smul.addr %s414, 32
        %s416 = scalar_lea.vmem [#allocation5], %s415
        // Predicated region
        $region61: #{block_forward.3} parent=55 // pred_check
          %p417 = pneg %p79
        $region62: #{block_forward.3} parent=55 // pred_check_branch
          %419 = sbr.rel (%p417) target = $region64
        $region63: #{block_forward.3} parent=55 // pred_region
          %420 = dma.done %s413, 512
        $region64: #{block_forward.3} parent=55 // pred_fallthru
          _
        // Predicated region
        $region65: #{block_forward.3} parent=55 // pred_check
          %p421 = pneg %p100
        $region66: #{block_forward.3} parent=55 // pred_check_branch
          %423 = sbr.rel (%p421) target = $region68
        $region67: #{block_forward.3} parent=55 // pred_region
          %424 = dma.done [#allocation6], 2048
        $region68: #{block_forward.3} parent=55 // pred_fallthru
          _
        // Predicated region
        $region69: #{block_forward.3} parent=55 // pred_check
          %p425 = pneg %p121
        $region70: #{block_forward.3} parent=55 // pred_check_branch
          %427 = sbr.rel (%p425) target = $region72
        $region71: #{block_forward.3} parent=55 // pred_region
          %428 = dma.done [#allocation9], 16
        $region72: #{block_forward.3} parent=55 // pred_fallthru
          _
        // Predicated region
        $region73: #{block_forward.3} parent=55 // pred_check
          %p429 = pneg %p142
        $region74: #{block_forward.3} parent=55 // pred_check_branch
          %431 = sbr.rel (%p429) target = $region76
        $region75: #{block_forward.3} parent=55 // pred_region
          %432 = dma.done [#allocation9], 16
        $region76: #{block_forward.3} parent=55 // pred_fallthru
          _
        // Predicated region
        $region77: #{block_forward.3} parent=55 // pred_check
          %p433 = pneg %p163
        $region78: #{block_forward.3} parent=55 // pred_check_branch
          %435 = sbr.rel (%p433) target = $region80
        $region79: #{block_forward.3} parent=55 // pred_region
          %436 = dma.done [#allocation12], 4096
        $region80: #{block_forward.3} parent=55 // pred_fallthru
          _
        // Predicated region
        $region81: #{block_forward.3} parent=55 // pred_check
          %p437 = pneg %p184
        $region82: #{block_forward.3} parent=55 // pred_check_branch
          %439 = sbr.rel (%p437) target = $region84
        $region83: #{block_forward.3} parent=55 // pred_region
          %440 = dma.done [#allocation12], 64
        $region84: #{block_forward.3} parent=55 // pred_fallthru
          _
        // Predicated region
        $region85: #{block_forward.3} parent=55 // pred_check
          %p441 = pneg %p205
        $region86: #{block_forward.3} parent=55 // pred_check_branch
          %443 = sbr.rel (%p441) target = $region88
        $region87: #{block_forward.3} parent=55 // pred_region
          %444 = dma.done [#allocation15], 4096
        $region88: #{block_forward.3} parent=55 // pred_fallthru
          _
        // Predicated region
        $region89: #{block_forward.3} parent=55 // pred_check
          %p445 = pneg %p226
        $region90: #{block_forward.3} parent=55 // pred_check_branch
          %447 = sbr.rel (%p445) target = $region92
        $region91: #{block_forward.3} parent=55 // pred_region
          %448 = dma.done [#allocation15], 16
        $region92: #{block_forward.3} parent=55 // pred_fallthru
          _
        %s449 = sand.u32 %s40, 1
        %s450 = scalar_lea.sflag [#allocation3], %s449
        %s451 = sand.u32 %s40, 1
        %s452 = smul.addr %s451, 32
        %s453 = scalar_lea.vmem [#allocation2], %s452
        %p454 = pneg %p53
        %p455 = pneg %p50
        %s456 = sand.u32 %s32, 1
        %s457 = scalar_lea.sflag [#allocation6], %s456
        %s458 = sand.u32 %s66, 1
        %s459 = smul.addr %s458, 32
        %s460 = scalar_lea.vmem [#allocation5], %s459
        %p461 = pneg %p79
        %p462 = pneg %p76
        %p463 = pneg %p100
        %p464 = pneg %p97
        %p465 = pneg %p121
        %p466 = pneg %p118
        %p467 = pneg %p142
        %p468 = pneg %p139
        %p469 = pneg %p163
        %p470 = pneg %p160
        %p471 = pneg %p184
        %p472 = pneg %p181
        %p473 = pneg %p205
        %p474 = pneg %p202
        %p475 = pneg %p226
        %p476 = pneg %p223
        %p477 = pneg %p252
        %p478 = pneg %p249
        %s479 = sand.u32 %s239, 1
        %s480 = scalar_lea.sflag [#allocation4], %s479
        %s481 = sand.u32 %s239, 1
        %s482 = smul.addr %s481, 32
        %s483 = scalar_lea.vmem [#allocation17], %s482
        %s484 = smul.u32 4, %s32
        %s485 = smul.u32 4, %s32
        %s486 = smul.u32 4, %s32
        %v488 = vld [vmem:[%s407] sm:$0xff]
        %v489 = vld [vmem:[%s407 + $0x8] sm:$0xff]
        %v490 = vld [vmem:[%s407 + $0x10] sm:$0xff]
        %v491 = vld [vmem:[%s407 + $0x18] sm:$0xff]
        %v492 = vld [vmem:[%s416] sm:$0xff]
        %v493 = vld [vmem:[%s416 + $0x8] sm:$0xff]
        %v494 = vld [vmem:[%s416 + $0x10] sm:$0xff]
        %v495 = vld [vmem:[%s416 + $0x18] sm:$0xff]
        %v496 = vadd.f32 %v488, %v492
        %v497 = vadd.f32 %v489, %v493
        %v498 = vadd.f32 %v490, %v494
        %v499 = vadd.f32 %v491, %v495
        %v500 = vld [vmem:[#allocation7] sm:$0xff]
        %v501 = vld [vmem:[#allocation7 + $0x8] sm:$0xff]
        %v502 = vld [vmem:[#allocation7 + $0x10] sm:$0xff]
        %v503 = vld [vmem:[#allocation7 + $0x18] sm:$0xff]
        %v504 = vld [vmem:[#allocation7 + $0x20] sm:$0xff]
        %v505 = vld [vmem:[#allocation7 + $0x28] sm:$0xff]
        %v506 = vld [vmem:[#allocation7 + $0x30] sm:$0xff]
        %v507 = vld [vmem:[#allocation7 + $0x38] sm:$0xff]
        %v508 = vld [vmem:[#allocation7 + $0x40] sm:$0xff]
        %v509 = vld [vmem:[#allocation7 + $0x48] sm:$0xff]
        %v510 = vld [vmem:[#allocation7 + $0x50] sm:$0xff]
        %v511 = vld [vmem:[#allocation7 + $0x58] sm:$0xff]
        %v512 = vld [vmem:[#allocation7 + $0x60] sm:$0xff]
        %v513 = vld [vmem:[#allocation7 + $0x68] sm:$0xff]
        %v514 = vld [vmem:[#allocation7 + $0x70] sm:$0xff]
        %v515 = vld [vmem:[#allocation7 + $0x78] sm:$0xff]
        %516 = vmatprep.subr.mxu0 0.0
        %517 = vmatpush1.msra.mxu0 %v500
        %518 = vmatprep.subr.mxu0 0.0
        %519 = vmatpush1.msra.mxu0 %v501
        %520 = vmatprep.subr.mxu0 0.0
        %521 = vmatpush1.msra.mxu0 %v502
        %522 = vmatprep.subr.mxu0 0.0
        %523 = vmatpush1.msra.mxu0 %v503
        %524 = vmatprep.subr.mxu0 0.0
        %525 = vmatpush1.msra.mxu0 %v504
        %526 = vmatprep.subr.mxu0 0.0
        %527 = vmatpush1.msra.mxu0 %v505
        %528 = vmatprep.subr.mxu0 0.0
        %529 = vmatpush1.msra.mxu0 %v506
        %530 = vmatprep.subr.mxu0 0.0
        %531 = vmatpush1.msra.mxu0 %v507
        %532 = vmatprep.subr.mxu0 0.0
        %533 = vmatpush1.msra.mxu0 %v508
        %534 = vmatprep.subr.mxu0 0.0
        %535 = vmatpush1.msra.mxu0 %v509
        %536 = vmatprep.subr.mxu0 0.0
        %537 = vmatpush1.msra.mxu0 %v510
        %538 = vmatprep.subr.mxu0 0.0
        %539 = vmatpush1.msra.mxu0 %v511
        %540 = vmatprep.subr.mxu0 0.0
        %541 = vmatpush1.msra.mxu0 %v512
        %542 = vmatprep.subr.mxu0 0.0
        %543 = vmatpush1.msra.mxu0 %v513
        %544 = vmatprep.subr.mxu0 0.0
        %545 = vmatpush1.msra.mxu0 %v514
        %546 = vmatprep.subr.mxu0 0.0
        %547 = vmatpush1.msra.mxu0 %v515
        %548 = vmatprep.subr.mxu0 0.0
        %549 = vmatpush1.msra.mxu0 0.0
        %550 = vmatprep.subr.mxu0 0.0
        %551 = vmatpush1.msra.mxu0 0.0
        %552 = vmatprep.subr.mxu0 0.0
        %553 = vmatpush1.msra.mxu0 0.0
        %554 = vmatprep.subr.mxu0 0.0
        %555 = vmatpush1.msra.mxu0 0.0
        %556 = vmatprep.subr.mxu0 0.0
        %557 = vmatpush1.msra.mxu0 0.0
        %558 = vmatprep.subr.mxu0 0.0
        %559 = vmatpush1.msra.mxu0 0.0
        %560 = vmatprep.subr.mxu0 0.0
        %561 = vmatpush1.msra.mxu0 0.0
        %562 = vmatprep.subr.mxu0 0.0
        %563 = vmatpush1.msra.mxu0 0.0
        %564 = vmatprep.subr.mxu0 0.0
        %565 = vmatpush1.msra.mxu0 0.0
        %566 = vmatprep.subr.mxu0 0.0
        %567 = vmatpush1.msra.mxu0 0.0
        %568 = vmatprep.subr.mxu0 0.0
        %569 = vmatpush1.msra.mxu0 0.0
        %570 = vmatprep.subr.mxu0 0.0
        %571 = vmatpush1.msra.mxu0 0.0
        %572 = vmatprep.subr.mxu0 0.0
        %573 = vmatpush1.msra.mxu0 0.0
        %574 = vmatprep.subr.mxu0 0.0
        %575 = vmatpush1.msra.mxu0 0.0
        %576 = vmatprep.subr.mxu0 0.0
        %577 = vmatpush1.msra.mxu0 0.0
        %578 = vmatprep.subr.mxu0 0.0
        %579 = vmatpush1.msra.mxu0 0.0
        %580 = vmatprep.mubr.f32.mxu0 0.0
        %581 = vmatmul.mubr.f32.gmra.mrb[0].mxu0 %v496
        %v582 = vpop.f32.mrb[0].mxu0
        %v583 = vadd.f32 0.0, %v582
        %v584 = vpop.f32.mrb[0].mxu0
        %585 = vmatprep.mubr.f32.mxu0 0.0
        %586 = vmatmul.mubr.f32.gmra.mrb[0].mxu0 %v497
        %v587 = vpop.f32.mrb[0].mxu0
        %v588 = vadd.f32 0.0, %v587
        %v589 = vpop.f32.mrb[0].mxu0
        %590 = vmatprep.mubr.f32.mxu0 0.0
        %591 = vmatmul.mubr.f32.gmra.mrb[0].mxu0 %v498
        %v592 = vpop.f32.mrb[0].mxu0
        %v593 = vadd.f32 0.0, %v592
        %v594 = vpop.f32.mrb[0].mxu0
        %595 = vmatprep.mubr.f32.mxu0 0.0
        %596 = vmatmul.mubr.f32.gmra.mrb[0].mxu0 %v499
        %v597 = vpop.f32.mrb[0].mxu0
        %v598 = vadd.f32 0.0, %v597
        %v599 = vpop.f32.mrb[0].mxu0
        %600 = vdwg.mxu0
        %v601 = vmul.f32 %v496, %v496
        %v602 = vmul.f32 %v497, %v497
        %v603 = vmul.f32 %v498, %v498
        %v604 = vmul.f32 %v499, %v499
        %605 = vmatprep.subr.mxu0 0.0
        %606 = vmatpush1.msra.mxu0 %v500
        %607 = vmatprep.subr.mxu0 0.0
        %608 = vmatpush1.msra.mxu0 %v501
        %609 = vmatprep.subr.mxu0 0.0
        %610 = vmatpush1.msra.mxu0 %v502
        %611 = vmatprep.subr.mxu0 0.0
        %612 = vmatpush1.msra.mxu0 %v503
        %613 = vmatprep.subr.mxu0 0.0
        %614 = vmatpush1.msra.mxu0 %v504
        %615 = vmatprep.subr.mxu0 0.0
        %616 = vmatpush1.msra.mxu0 %v505
        %617 = vmatprep.subr.mxu0 0.0
        %618 = vmatpush1.msra.mxu0 %v506
        %619 = vmatprep.subr.mxu0 0.0
        %620 = vmatpush1.msra.mxu0 %v507
        %621 = vmatprep.subr.mxu0 0.0
        %622 = vmatpush1.msra.mxu0 %v508
        %623 = vmatprep.subr.mxu0 0.0
        %624 = vmatpush1.msra.mxu0 %v509
        %625 = vmatprep.subr.mxu0 0.0
        %626 = vmatpush1.msra.mxu0 %v510
        %627 = vmatprep.subr.mxu0 0.0
        %628 = vmatpush1.msra.mxu0 %v511
        %629 = vmatprep.subr.mxu0 0.0
        %630 = vmatpush1.msra.mxu0 %v512
        %631 = vmatprep.subr.mxu0 0.0
        %632 = vmatpush1.msra.mxu0 %v513
        %633 = vmatprep.subr.mxu0 0.0
        %634 = vmatpush1.msra.mxu0 %v514
        %635 = vmatprep.subr.mxu0 0.0
        %636 = vmatpush1.msra.mxu0 %v515
        %637 = vmatprep.subr.mxu0 0.0
        %638 = vmatpush1.msra.mxu0 0.0
        %639 = vmatprep.subr.mxu0 0.0
        %640 = vmatpush1.msra.mxu0 0.0
        %641 = vmatprep.subr.mxu0 0.0
        %642 = vmatpush1.msra.mxu0 0.0
        %643 = vmatprep.subr.mxu0 0.0
        %644 = vmatpush1.msra.mxu0 0.0
        %645 = vmatprep.subr.mxu0 0.0
        %646 = vmatpush1.msra.mxu0 0.0
        %647 = vmatprep.subr.mxu0 0.0
        %648 = vmatpush1.msra.mxu0 0.0
        %649 = vmatprep.subr.mxu0 0.0
        %650 = vmatpush1.msra.mxu0 0.0
        %651 = vmatprep.subr.mxu0 0.0
        %652 = vmatpush1.msra.mxu0 0.0
        %653 = vmatprep.subr.mxu0 0.0
        %654 = vmatpush1.msra.mxu0 0.0
        %655 = vmatprep.subr.mxu0 0.0
        %656 = vmatpush1.msra.mxu0 0.0
        %657 = vmatprep.subr.mxu0 0.0
        %658 = vmatpush1.msra.mxu0 0.0
        %659 = vmatprep.subr.mxu0 0.0
        %660 = vmatpush1.msra.mxu0 0.0
        %661 = vmatprep.subr.mxu0 0.0
        %662 = vmatpush1.msra.mxu0 0.0
        %663 = vmatprep.subr.mxu0 0.0
        %664 = vmatpush1.msra.mxu0 0.0
        %665 = vmatprep.subr.mxu0 0.0
        %666 = vmatpush1.msra.mxu0 0.0
        %667 = vmatprep.subr.mxu0 0.0
        %668 = vmatpush1.msra.mxu0 0.0
        %669 = vmatprep.mubr.f32.mxu0 0.0
        %670 = vmatmul.mubr.f32.gmra.mrb[0].mxu0 %v601
        %v671 = vpop.f32.mrb[0].mxu0
        %v672 = vadd.f32 0.0, %v671
        %v673 = vpop.f32.mrb[0].mxu0
        %674 = vmatprep.mubr.f32.mxu0 0.0
        %675 = vmatmul.mubr.f32.gmra.mrb[0].mxu0 %v602
        %v676 = vpop.f32.mrb[0].mxu0
        %v677 = vadd.f32 0.0, %v676
        %v678 = vpop.f32.mrb[0].mxu0
        %679 = vmatprep.mubr.f32.mxu0 0.0
        %680 = vmatmul.mubr.f32.gmra.mrb[0].mxu0 %v603
        %v681 = vpop.f32.mrb[0].mxu0
        %v682 = vadd.f32 0.0, %v681
        %v683 = vpop.f32.mrb[0].mxu0
        %684 = vmatprep.mubr.f32.mxu0 0.0
        %685 = vmatmul.mubr.f32.gmra.mrb[0].mxu0 %v604
        %v686 = vpop.f32.mrb[0].mxu0
        %v687 = vadd.f32 0.0, %v686
        %v688 = vpop.f32.mrb[0].mxu0
        %689 = vdwg.mxu0
        %v690 = vmul.f32 %v583, %v583
        %v691 = vmul.f32 %v588, %v588
        %v692 = vmul.f32 %v593, %v593
        %v693 = vmul.f32 %v598, %v598
        %v694 = vsub.f32 %v672, %v690
        %v695 = vsub.f32 %v677, %v691
        %v696 = vsub.f32 %v682, %v692
        %v697 = vsub.f32 %v687, %v693
        %v698 = vsub.f32 %v496, %v583
        %v699 = vsub.f32 %v497, %v588
        %v700 = vsub.f32 %v498, %v593
        %v701 = vsub.f32 %v499, %v598
        %v702 = vadd.f32 %v694, 1e-05
        %v703 = vadd.f32 %v695, 1e-05
        %v704 = vadd.f32 %v696, 1e-05
        %v705 = vadd.f32 %v697, 1e-05
        %v706 = vrsqrt.pop %v702
        %v707 = vrsqrt.pop %v703
        %v708 = vrsqrt.pop %v704
        %v709 = vrsqrt.pop %v705
        %v710 = vmul.f32 %v698, %v706
        %v711 = vmul.f32 %v699, %v707
        %v712 = vmul.f32 %v700, %v708
        %v713 = vmul.f32 %v701, %v709
        %v714 = vld [vmem:[#allocation8] sm:$0x1]
        %v716 = vlaneseq
        %v717 = vshrl.u32 %v716, 7
        %v718 = vsub.s32 0, %v717
        %v719 = vrot.slane %v714, %v718
        %v721 = vmul.f32 %v710, %v719
        %v722 = vmul.f32 %v711, %v719
        %v723 = vmul.f32 %v712, %v719
        %v724 = vmul.f32 %v713, %v719
        %v725 = vld [vmem:[#allocation10] sm:$0x1]
        %v727 = vlaneseq
        %v728 = vshrl.u32 %v727, 7
        %v729 = vsub.s32 0, %v728
        %v730 = vrot.slane %v725, %v729
        %v732 = vadd.f32 %v721, %v730
        %v733 = vadd.f32 %v722, %v730
        %v734 = vadd.f32 %v723, %v730
        %v735 = vadd.f32 %v724, %v730
        %v736 = vpack.c.bf16 %v733, %v732
        %v737 = vpack.c.bf16 %v735, %v734
        %v738 = vld [vmem:[#allocation11] sm:$0xff]
        %v739 = vld [vmem:[#allocation11 + $0x8] sm:$0xff]
        %v740 = vld [vmem:[#allocation11 + $0x10] sm:$0xff]
        %v741 = vld [vmem:[#allocation11 + $0x18] sm:$0xff]
        %v742 = vld [vmem:[#allocation11 + $0x20] sm:$0xff]
        %v743 = vld [vmem:[#allocation11 + $0x28] sm:$0xff]
        %v744 = vld [vmem:[#allocation11 + $0x30] sm:$0xff]
        %v745 = vld [vmem:[#allocation11 + $0x38] sm:$0xff]
        %v746 = vld [vmem:[#allocation11 + $0x40] sm:$0xff]
        %v747 = vld [vmem:[#allocation11 + $0x48] sm:$0xff]
        %v748 = vld [vmem:[#allocation11 + $0x50] sm:$0xff]
        %v749 = vld [vmem:[#allocation11 + $0x58] sm:$0xff]
        %v750 = vld [vmem:[#allocation11 + $0x60] sm:$0xff]
        %v751 = vld [vmem:[#allocation11 + $0x68] sm:$0xff]
        %v752 = vld [vmem:[#allocation11 + $0x70] sm:$0xff]
        %v753 = vld [vmem:[#allocation11 + $0x78] sm:$0xff]
        %v754 = vld [vmem:[#allocation11 + $0x80] sm:$0xff]
        %v755 = vld [vmem:[#allocation11 + $0x88] sm:$0xff]
        %v756 = vld [vmem:[#allocation11 + $0x90] sm:$0xff]
        %v757 = vld [vmem:[#allocation11 + $0x98] sm:$0xff]
        %v758 = vld [vmem:[#allocation11 + $0xa0] sm:$0xff]
        %v759 = vld [vmem:[#allocation11 + $0xa8] sm:$0xff]
        %v760 = vld [vmem:[#allocation11 + $0xb0] sm:$0xff]
        %v761 = vld [vmem:[#allocation11 + $0xb8] sm:$0xff]
        %v762 = vld [vmem:[#allocation11 + $0xc0] sm:$0xff]
        %v763 = vld [vmem:[#allocation11 + $0xc8] sm:$0xff]
        %v764 = vld [vmem:[#allocation11 + $0xd0] sm:$0xff]
        %v765 = vld [vmem:[#allocation11 + $0xd8] sm:$0xff]
        %v766 = vld [vmem:[#allocation11 + $0xe0] sm:$0xff]
        %v767 = vld [vmem:[#allocation11 + $0xe8] sm:$0xff]
        %v768 = vld [vmem:[#allocation11 + $0xf0] sm:$0xff]
        %v769 = vld [vmem:[#allocation11 + $0xf8] sm:$0xff]
        %v770 = vld [vmem:[#allocation13] sm:$0xf]
        %v772 = vlaneseq
        %v773 = vshrl.u32 %v772, 7
        %v774 = vsub.s32 0, %v773
        %v775 = vrot.slane %v770, %v774
        %v776 = vlaneseq
        %v777 = vshrl.u32 %v776, 7
        %v778 = vsub.s32 1, %v777
        %v779 = vrot.slane %v770, %v778
        %v780 = vlaneseq
        %v781 = vshrl.u32 %v780, 7
        %v782 = vsub.s32 2, %v781
        %v783 = vrot.slane %v770, %v782
        %v784 = vlaneseq
        %v785 = vshrl.u32 %v784, 7
        %v786 = vsub.s32 3, %v785
        %v787 = vrot.slane %v770, %v786
        %v824 = vunpack.c.l.b16 %v738
        %v825 = vunpack.c.h.b16 %v738
        %v826 = vunpack.c.l.b16 %v739
        %v827 = vunpack.c.h.b16 %v739
        %v828 = vunpack.c.l.b16 %v740
        %v829 = vunpack.c.h.b16 %v740
        %v830 = vunpack.c.l.b16 %v741
        %v831 = vunpack.c.h.b16 %v741
        %v832 = vunpack.c.l.b16 %v742
        %v833 = vunpack.c.h.b16 %v742
        %v834 = vunpack.c.l.b16 %v743
        %v835 = vunpack.c.h.b16 %v743
        %v836 = vunpack.c.l.b16 %v744
        %v837 = vunpack.c.h.b16 %v744
        %v838 = vunpack.c.l.b16 %v745
        %v839 = vunpack.c.h.b16 %v745
        %v840 = vunpack.c.l.b16 %v746
        %v841 = vunpack.c.h.b16 %v746
        %v842 = vunpack.c.l.b16 %v747
        %v843 = vunpack.c.h.b16 %v747
        %v844 = vunpack.c.l.b16 %v748
        %v845 = vunpack.c.h.b16 %v748
        %v846 = vunpack.c.l.b16 %v749
        %v847 = vunpack.c.h.b16 %v749
        %v848 = vunpack.c.l.b16 %v750
        %v849 = vunpack.c.h.b16 %v750
        %v850 = vunpack.c.l.b16 %v751
        %v851 = vunpack.c.h.b16 %v751
        %v852 = vunpack.c.l.b16 %v752
        %v853 = vunpack.c.h.b16 %v752
        %v854 = vunpack.c.l.b16 %v753
        %v855 = vunpack.c.h.b16 %v753
        %v856 = vunpack.c.l.b16 %v754
        %v857 = vunpack.c.h.b16 %v754
        %v858 = vunpack.c.l.b16 %v755
        %v859 = vunpack.c.h.b16 %v755
        %v860 = vunpack.c.l.b16 %v756
        %v861 = vunpack.c.h.b16 %v756
        %v862 = vunpack.c.l.b16 %v757
        %v863 = vunpack.c.h.b16 %v757
        %v864 = vunpack.c.l.b16 %v758
        %v865 = vunpack.c.h.b16 %v758
        %v866 = vunpack.c.l.b16 %v759
        %v867 = vunpack.c.h.b16 %v759
        %v868 = vunpack.c.l.b16 %v760
        %v869 = vunpack.c.h.b16 %v760
        %v870 = vunpack.c.l.b16 %v761
        %v871 = vunpack.c.h.b16 %v761
        %v872 = vunpack.c.l.b16 %v762
        %v873 = vunpack.c.h.b16 %v762
        %v874 = vunpack.c.l.b16 %v763
        %v875 = vunpack.c.h.b16 %v763
        %v876 = vunpack.c.l.b16 %v764
        %v877 = vunpack.c.h.b16 %v764
        %v878 = vunpack.c.l.b16 %v765
        %v879 = vunpack.c.h.b16 %v765
        %v880 = vunpack.c.l.b16 %v766
        %v881 = vunpack.c.h.b16 %v766
        %v882 = vunpack.c.l.b16 %v767
        %v883 = vunpack.c.h.b16 %v767
        %v884 = vunpack.c.l.b16 %v768
        %v885 = vunpack.c.h.b16 %v768
        %v886 = vunpack.c.l.b16 %v769
        %v887 = vunpack.c.h.b16 %v769
        %v888 = vpack.c.b16 %v828, %v824
        %v889 = vpack.c.b16 %v829, %v825
        %v890 = vpack.c.b16 %v830, %v826
        %v891 = vpack.c.b16 %v831, %v827
        %v892 = vpack.c.b16 %v836, %v832
        %v893 = vpack.c.b16 %v837, %v833
        %v894 = vpack.c.b16 %v838, %v834
        %v895 = vpack.c.b16 %v839, %v835
        %v896 = vpack.c.b16 %v844, %v840
        %v897 = vpack.c.b16 %v845, %v841
        %v898 = vpack.c.b16 %v846, %v842
        %v899 = vpack.c.b16 %v847, %v843
        %v900 = vpack.c.b16 %v852, %v848
        %v901 = vpack.c.b16 %v853, %v849
        %v902 = vpack.c.b16 %v854, %v850
        %v903 = vpack.c.b16 %v855, %v851
        %v904 = vpack.c.b16 %v860, %v856
        %v905 = vpack.c.b16 %v861, %v857
        %v906 = vpack.c.b16 %v862, %v858
        %v907 = vpack.c.b16 %v863, %v859
        %v908 = vpack.c.b16 %v868, %v864
        %v909 = vpack.c.b16 %v869, %v865
        %v910 = vpack.c.b16 %v870, %v866
        %v911 = vpack.c.b16 %v871, %v867
        %v912 = vpack.c.b16 %v876, %v872
        %v913 = vpack.c.b16 %v877, %v873
        %v914 = vpack.c.b16 %v878, %v874
        %v915 = vpack.c.b16 %v879, %v875
        %v916 = vpack.c.b16 %v884, %v880
        %v917 = vpack.c.b16 %v885, %v881
        %v918 = vpack.c.b16 %v886, %v882
        %v919 = vpack.c.b16 %v887, %v883
        %952 = vmatprep.subr.bf16.mxu0 %v889
        %953 = vmatpush1.bf16.msra.mxu0 %v888
        %954 = vmatprep.subr.bf16.mxu0 %v893
        %955 = vmatpush1.bf16.msra.mxu0 %v892
        %956 = vmatprep.subr.bf16.mxu0 %v897
        %957 = vmatpush1.bf16.msra.mxu0 %v896
        %958 = vmatprep.subr.bf16.mxu0 %v901
        %959 = vmatpush1.bf16.msra.mxu0 %v900
        %960 = vmatprep.subr.bf16.mxu0 %v905
        %961 = vmatpush1.bf16.msra.mxu0 %v904
        %962 = vmatprep.subr.bf16.mxu0 %v909
        %963 = vmatpush1.bf16.msra.mxu0 %v908
        %964 = vmatprep.subr.bf16.mxu0 %v913
        %965 = vmatpush1.bf16.msra.mxu0 %v912
        %966 = vmatprep.subr.bf16.mxu0 %v917
        %967 = vmatpush1.bf16.msra.mxu0 %v916
        %968 = vmatprep.subr.bf16.mxu0 0
        %969 = vmatpush1.bf16.msra.mxu0 0
        %970 = vmatprep.subr.bf16.mxu0 0
        %971 = vmatpush1.bf16.msra.mxu0 0
        %972 = vmatprep.subr.bf16.mxu0 0
        %973 = vmatpush1.bf16.msra.mxu0 0
        %974 = vmatprep.subr.bf16.mxu0 0
        %975 = vmatpush1.bf16.msra.mxu0 0
        %976 = vmatprep.subr.bf16.mxu0 0
        %977 = vmatpush1.bf16.msra.mxu0 0
        %978 = vmatprep.subr.bf16.mxu0 0
        %979 = vmatpush1.bf16.msra.mxu0 0
        %980 = vmatprep.subr.bf16.mxu0 0
        %981 = vmatpush1.bf16.msra.mxu0 0
        %982 = vmatprep.subr.bf16.mxu0 0
        %983 = vmatpush1.bf16.msra.mxu0 0
        %984 = vmatprep.mubr.bf16.mxu0 0
        %985 = vmatmul.mubr.bf16.gmra.mrb[0].mxu0 %v736
        %v986 = vpop.f32.mrb[0].mxu0
        %v987 = vadd.f32 %v775, %v986
        %v988 = vpop.f32.mrb[0].mxu0
        %v989 = vadd.f32 %v779, %v988
        %v990 = vpop.f32.mrb[0].mxu0
        %v991 = vadd.f32 %v775, %v990
        %v992 = vpop.f32.mrb[0].mxu0
        %v993 = vadd.f32 %v779, %v992
        %994 = vmatprep.mubr.bf16.mxu0 0
        %995 = vmatmul.mubr.bf16.gmra.mrb[0].mxu0 %v737
        %v996 = vpop.f32.mrb[0].mxu0
        %v997 = vadd.f32 %v775, %v996
        %v998 = vpop.f32.mrb[0].mxu0
        %v999 = vadd.f32 %v779, %v998
        %v1000 = vpop.f32.mrb[0].mxu0
        %v1001 = vadd.f32 %v775, %v1000
        %v1002 = vpop.f32.mrb[0].mxu0
        %v1003 = vadd.f32 %v779, %v1002
        %1004 = vdwg.mxu0
        %1005 = vmatprep.subr.bf16.mxu0 %v891
        %1006 = vmatpush1.bf16.msra.mxu0 %v890
        %1007 = vmatprep.subr.bf16.mxu0 %v895
        %1008 = vmatpush1.bf16.msra.mxu0 %v894
        %1009 = vmatprep.subr.bf16.mxu0 %v899
        %1010 = vmatpush1.bf16.msra.mxu0 %v898
        %1011 = vmatprep.subr.bf16.mxu0 %v903
        %1012 = vmatpush1.bf16.msra.mxu0 %v902
        %1013 = vmatprep.subr.bf16.mxu0 %v907
        %1014 = vmatpush1.bf16.msra.mxu0 %v906
        %1015 = vmatprep.subr.bf16.mxu0 %v911
        %1016 = vmatpush1.bf16.msra.mxu0 %v910
        %1017 = vmatprep.subr.bf16.mxu0 %v915
        %1018 = vmatpush1.bf16.msra.mxu0 %v914
        %1019 = vmatprep.subr.bf16.mxu0 %v919
        %1020 = vmatpush1.bf16.msra.mxu0 %v918
        %1021 = vmatprep.subr.bf16.mxu0 0
        %1022 = vmatpush1.bf16.msra.mxu0 0
        %1023 = vmatprep.subr.bf16.mxu0 0
        %1024 = vmatpush1.bf16.msra.mxu0 0
        %1025 = vmatprep.subr.bf16.mxu0 0
        %1026 = vmatpush1.bf16.msra.mxu0 0
        %1027 = vmatprep.subr.bf16.mxu0 0
        %1028 = vmatpush1.bf16.msra.mxu0 0
        %1029 = vmatprep.subr.bf16.mxu0 0
        %1030 = vmatpush1.bf16.msra.mxu0 0
        %1031 = vmatprep.subr.bf16.mxu0 0
        %1032 = vmatpush1.bf16.msra.mxu0 0
        %1033 = vmatprep.subr.bf16.mxu0 0
        %1034 = vmatpush1.bf16.msra.mxu0 0
        %1035 = vmatprep.subr.bf16.mxu0 0
        %1036 = vmatpush1.bf16.msra.mxu0 0
        %1037 = vmatprep.mubr.bf16.mxu0 0
        %1038 = vmatmul.mubr.bf16.gmra.mrb[0].mxu0 %v736
        %v1039 = vpop.f32.mrb[0].mxu0
        %v1040 = vadd.f32 %v783, %v1039
        %v1041 = vpop.f32.mrb[0].mxu0
        %v1042 = vadd.f32 %v787, %v1041
        %v1043 = vpop.f32.mrb[0].mxu0
        %v1044 = vadd.f32 %v783, %v1043
        %v1045 = vpop.f32.mrb[0].mxu0
        %v1046 = vadd.f32 %v787, %v1045
        %1047 = vmatprep.mubr.bf16.mxu0 0
        %1048 = vmatmul.mubr.bf16.gmra.mrb[0].mxu0 %v737
        %v1049 = vpop.f32.mrb[0].mxu0
        %v1050 = vadd.f32 %v783, %v1049
        %v1051 = vpop.f32.mrb[0].mxu0
        %v1052 = vadd.f32 %v787, %v1051
        %v1053 = vpop.f32.mrb[0].mxu0
        %v1054 = vadd.f32 %v783, %v1053
        %v1055 = vpop.f32.mrb[0].mxu0
        %v1056 = vadd.f32 %v787, %v1055
        %1057 = vdwg.mxu0
        %v1058 = vmul.f32 %v987, 0.5
        %v1059 = vmul.f32 %v989, 0.5
        %v1060 = vmul.f32 %v1040, 0.5
        %v1061 = vmul.f32 %v1042, 0.5
        %v1062 = vmul.f32 %v991, 0.5
        %v1063 = vmul.f32 %v993, 0.5
        %v1064 = vmul.f32 %v1044, 0.5
        %v1065 = vmul.f32 %v1046, 0.5
        %v1066 = vmul.f32 %v997, 0.5
        %v1067 = vmul.f32 %v999, 0.5
        %v1068 = vmul.f32 %v1050, 0.5
        %v1069 = vmul.f32 %v1052, 0.5
        %v1070 = vmul.f32 %v1001, 0.5
        %v1071 = vmul.f32 %v1003, 0.5
        %v1072 = vmul.f32 %v1054, 0.5
        %v1073 = vmul.f32 %v1056, 0.5
        %v1074 = vmul.f32 %v987, 0.70710677
        %v1075 = vmul.f32 %v989, 0.70710677
        %v1076 = vmul.f32 %v1040, 0.70710677
        %v1077 = vmul.f32 %v1042, 0.70710677
        %v1078 = vmul.f32 %v991, 0.70710677
        %v1079 = vmul.f32 %v993, 0.70710677
        %v1080 = vmul.f32 %v1044, 0.70710677
        %v1081 = vmul.f32 %v1046, 0.70710677
        %v1082 = vmul.f32 %v997, 0.70710677
        %v1083 = vmul.f32 %v999, 0.70710677
        %v1084 = vmul.f32 %v1050, 0.70710677
        %v1085 = vmul.f32 %v1052, 0.70710677
        %v1086 = vmul.f32 %v1001, 0.70710677
        %v1087 = vmul.f32 %v1003, 0.70710677
        %v1088 = vmul.f32 %v1054, 0.70710677
        %v1089 = vmul.f32 %v1056, 0.70710677
        %v1090 = verf.f32.pop %v1074
        %v1091 = verf.f32.pop %v1075
        %v1092 = verf.f32.pop %v1076
        %v1093 = verf.f32.pop %v1077
        %v1094 = verf.f32.pop %v1078
        %v1095 = verf.f32.pop %v1079
        %v1096 = verf.f32.pop %v1080
        %v1097 = verf.f32.pop %v1081
        %v1098 = verf.f32.pop %v1082
        %v1099 = verf.f32.pop %v1083
        %v1100 = verf.f32.pop %v1084
        %v1101 = verf.f32.pop %v1085
        %v1102 = verf.f32.pop %v1086
        %v1103 = verf.f32.pop %v1087
        %v1104 = verf.f32.pop %v1088
        %v1105 = verf.f32.pop %v1089
        %v1106 = vadd.f32 %v1090, 1.0
        %v1107 = vadd.f32 %v1091, 1.0
        %v1108 = vadd.f32 %v1092, 1.0
        %v1109 = vadd.f32 %v1093, 1.0
        %v1110 = vadd.f32 %v1094, 1.0
        %v1111 = vadd.f32 %v1095, 1.0
        %v1112 = vadd.f32 %v1096, 1.0
        %v1113 = vadd.f32 %v1097, 1.0
        %v1114 = vadd.f32 %v1098, 1.0
        %v1115 = vadd.f32 %v1099, 1.0
        %v1116 = vadd.f32 %v1100, 1.0
        %v1117 = vadd.f32 %v1101, 1.0
        %v1118 = vadd.f32 %v1102, 1.0
        %v1119 = vadd.f32 %v1103, 1.0
        %v1120 = vadd.f32 %v1104, 1.0
        %v1121 = vadd.f32 %v1105, 1.0
        %v1122 = vmul.f32 %v1058, %v1106
        %v1123 = vmul.f32 %v1059, %v1107
        %v1124 = vmul.f32 %v1060, %v1108
        %v1125 = vmul.f32 %v1061, %v1109
        %v1126 = vmul.f32 %v1062, %v1110
        %v1127 = vmul.f32 %v1063, %v1111
        %v1128 = vmul.f32 %v1064, %v1112
        %v1129 = vmul.f32 %v1065, %v1113
        %v1130 = vmul.f32 %v1066, %v1114
        %v1131 = vmul.f32 %v1067, %v1115
        %v1132 = vmul.f32 %v1068, %v1116
        %v1133 = vmul.f32 %v1069, %v1117
        %v1134 = vmul.f32 %v1070, %v1118
        %v1135 = vmul.f32 %v1071, %v1119
        %v1136 = vmul.f32 %v1072, %v1120
        %v1137 = vmul.f32 %v1073, %v1121
        %v1138 = vpack.c.bf16 %v1126, %v1122
        %v1139 = vpack.c.bf16 %v1127, %v1123
        %v1140 = vpack.c.bf16 %v1128, %v1124
        %v1141 = vpack.c.bf16 %v1129, %v1125
        %v1142 = vpack.c.bf16 %v1134, %v1130
        %v1143 = vpack.c.bf16 %v1135, %v1131
        %v1144 = vpack.c.bf16 %v1136, %v1132
        %v1145 = vpack.c.bf16 %v1137, %v1133
        %v1146 = vld [vmem:[#allocation14] sm:$0xf]
        %v1147 = vld [vmem:[#allocation14 + $0x4] sm:$0xf]
        %v1148 = vld [vmem:[#allocation14 + $0x8] sm:$0xf]
        %v1149 = vld [vmem:[#allocation14 + $0xc] sm:$0xf]
        %v1150 = vld [vmem:[#allocation14 + $0x10] sm:$0xf]
        %v1151 = vld [vmem:[#allocation14 + $0x14] sm:$0xf]
        %v1152 = vld [vmem:[#allocation14 + $0x18] sm:$0xf]
        %v1153 = vld [vmem:[#allocation14 + $0x1c] sm:$0xf]
        %v1154 = vld [vmem:[#allocation14 + $0x20] sm:$0xf]
        %v1155 = vld [vmem:[#allocation14 + $0x24] sm:$0xf]
        %v1156 = vld [vmem:[#allocation14 + $0x28] sm:$0xf]
        %v1157 = vld [vmem:[#allocation14 + $0x2c] sm:$0xf]
        %v1158 = vld [vmem:[#allocation14 + $0x30] sm:$0xf]
        %v1159 = vld [vmem:[#allocation14 + $0x34] sm:$0xf]
        %v1160 = vld [vmem:[#allocation14 + $0x38] sm:$0xf]
        %v1161 = vld [vmem:[#allocation14 + $0x3c] sm:$0xf]
        %v1162 = vld [vmem:[#allocation14 + $0x40] sm:$0xf]
        %v1163 = vld [vmem:[#allocation14 + $0x44] sm:$0xf]
        %v1164 = vld [vmem:[#allocation14 + $0x48] sm:$0xf]
        %v1165 = vld [vmem:[#allocation14 + $0x4c] sm:$0xf]
        %v1166 = vld [vmem:[#allocation14 + $0x50] sm:$0xf]
        %v1167 = vld [vmem:[#allocation14 + $0x54] sm:$0xf]
        %v1168 = vld [vmem:[#allocation14 + $0x58] sm:$0xf]
        %v1169 = vld [vmem:[#allocation14 + $0x5c] sm:$0xf]
        %v1170 = vld [vmem:[#allocation14 + $0x60] sm:$0xf]
        %v1171 = vld [vmem:[#allocation14 + $0x64] sm:$0xf]
        %v1172 = vld [vmem:[#allocation14 + $0x68] sm:$0xf]
        %v1173 = vld [vmem:[#allocation14 + $0x6c] sm:$0xf]
        %v1174 = vld [vmem:[#allocation14 + $0x70] sm:$0xf]
        %v1175 = vld [vmem:[#allocation14 + $0x74] sm:$0xf]
        %v1176 = vld [vmem:[#allocation14 + $0x78] sm:$0xf]
        %v1177 = vld [vmem:[#allocation14 + $0x7c] sm:$0xf]
        %v1178 = vld [vmem:[#allocation14 + $0x80] sm:$0xf]
        %v1179 = vld [vmem:[#allocation14 + $0x84] sm:$0xf]
        %v1180 = vld [vmem:[#allocation14 + $0x88] sm:$0xf]
        %v1181 = vld [vmem:[#allocation14 + $0x8c] sm:$0xf]
        %v1182 = vld [vmem:[#allocation14 + $0x90] sm:$0xf]
        %v1183 = vld [vmem:[#allocation14 + $0x94] sm:$0xf]
        %v1184 = vld [vmem:[#allocation14 + $0x98] sm:$0xf]
        %v1185 = vld [vmem:[#allocation14 + $0x9c] sm:$0xf]
        %v1186 = vld [vmem:[#allocation14 + $0xa0] sm:$0xf]
        %v1187 = vld [vmem:[#allocation14 + $0xa4] sm:$0xf]
        %v1188 = vld [vmem:[#allocation14 + $0xa8] sm:$0xf]
        %v1189 = vld [vmem:[#allocation14 + $0xac] sm:$0xf]
        %v1190 = vld [vmem:[#allocation14 + $0xb0] sm:$0xf]
        %v1191 = vld [vmem:[#allocation14 + $0xb4] sm:$0xf]
        %v1192 = vld [vmem:[#allocation14 + $0xb8] sm:$0xf]
        %v1193 = vld [vmem:[#allocation14 + $0xbc] sm:$0xf]
        %v1194 = vld [vmem:[#allocation14 + $0xc0] sm:$0xf]
        %v1195 = vld [vmem:[#allocation14 + $0xc4] sm:$0xf]
        %v1196 = vld [vmem:[#allocation14 + $0xc8] sm:$0xf]
        %v1197 = vld [vmem:[#allocation14 + $0xcc] sm:$0xf]
        %v1198 = vld [vmem:[#allocation14 + $0xd0] sm:$0xf]
        %v1199 = vld [vmem:[#allocation14 + $0xd4] sm:$0xf]
        %v1200 = vld [vmem:[#allocation14 + $0xd8] sm:$0xf]
        %v1201 = vld [vmem:[#allocation14 + $0xdc] sm:$0xf]
        %v1202 = vld [vmem:[#allocation14 + $0xe0] sm:$0xf]
        %v1203 = vld [vmem:[#allocation14 + $0xe4] sm:$0xf]
        %v1204 = vld [vmem:[#allocation14 + $0xe8] sm:$0xf]
        %v1205 = vld [vmem:[#allocation14 + $0xec] sm:$0xf]
        %v1206 = vld [vmem:[#allocation14 + $0xf0] sm:$0xf]
        %v1207 = vld [vmem:[#allocation14 + $0xf4] sm:$0xf]
        %v1208 = vld [vmem:[#allocation14 + $0xf8] sm:$0xf]
        %v1209 = vld [vmem:[#allocation14 + $0xfc] sm:$0xf]
        %v1210 = vld [vmem:[#allocation16] sm:$0x1]
        %v1212 = vlaneseq
        %v1213 = vshrl.u32 %v1212, 7
        %v1214 = vsub.s32 0, %v1213
        %v1215 = vrot.slane %v1210, %v1214
        %v1281 = vunpack.c.l.b16 %v1146
        %v1282 = vunpack.c.l.b16 %v1147
        %v1283 = vunpack.c.l.b16 %v1148
        %v1284 = vunpack.c.l.b16 %v1149
        %v1285 = vunpack.c.l.b16 %v1150
        %v1286 = vunpack.c.l.b16 %v1151
        %v1287 = vunpack.c.l.b16 %v1152
        %v1288 = vunpack.c.l.b16 %v1153
        %v1289 = vunpack.c.l.b16 %v1154
        %v1290 = vunpack.c.l.b16 %v1155
        %v1291 = vunpack.c.l.b16 %v1156
        %v1292 = vunpack.c.l.b16 %v1157
        %v1293 = vunpack.c.l.b16 %v1158
        %v1294 = vunpack.c.l.b16 %v1159
        %v1295 = vunpack.c.l.b16 %v1160
        %v1296 = vunpack.c.l.b16 %v1161
        %v1297 = vunpack.c.l.b16 %v1162
        %v1298 = vunpack.c.l.b16 %v1163
        %v1299 = vunpack.c.l.b16 %v1164
        %v1300 = vunpack.c.l.b16 %v1165
        %v1301 = vunpack.c.l.b16 %v1166
        %v1302 = vunpack.c.l.b16 %v1167
        %v1303 = vunpack.c.l.b16 %v1168
        %v1304 = vunpack.c.l.b16 %v1169
        %v1305 = vunpack.c.l.b16 %v1170
        %v1306 = vunpack.c.l.b16 %v1171
        %v1307 = vunpack.c.l.b16 %v1172
        %v1308 = vunpack.c.l.b16 %v1173
        %v1309 = vunpack.c.l.b16 %v1174
        %v1310 = vunpack.c.l.b16 %v1175
        %v1311 = vunpack.c.l.b16 %v1176
        %v1312 = vunpack.c.l.b16 %v1177
        %v1313 = vunpack.c.l.b16 %v1178
        %v1314 = vunpack.c.l.b16 %v1179
        %v1315 = vunpack.c.l.b16 %v1180
        %v1316 = vunpack.c.l.b16 %v1181
        %v1317 = vunpack.c.l.b16 %v1182
        %v1318 = vunpack.c.l.b16 %v1183
        %v1319 = vunpack.c.l.b16 %v1184
        %v1320 = vunpack.c.l.b16 %v1185
        %v1321 = vunpack.c.l.b16 %v1186
        %v1322 = vunpack.c.l.b16 %v1187
        %v1323 = vunpack.c.l.b16 %v1188
        %v1324 = vunpack.c.l.b16 %v1189
        %v1325 = vunpack.c.l.b16 %v1190
        %v1326 = vunpack.c.l.b16 %v1191
        %v1327 = vunpack.c.l.b16 %v1192
        %v1328 = vunpack.c.l.b16 %v1193
        %v1329 = vunpack.c.l.b16 %v1194
        %v1330 = vunpack.c.l.b16 %v1195
        %v1331 = vunpack.c.l.b16 %v1196
        %v1332 = vunpack.c.l.b16 %v1197
        %v1333 = vunpack.c.l.b16 %v1198
        %v1334 = vunpack.c.l.b16 %v1199
        %v1335 = vunpack.c.l.b16 %v1200
        %v1336 = vunpack.c.l.b16 %v1201
        %v1337 = vunpack.c.l.b16 %v1202
        %v1338 = vunpack.c.l.b16 %v1203
        %v1339 = vunpack.c.l.b16 %v1204
        %v1340 = vunpack.c.l.b16 %v1205
        %v1341 = vunpack.c.l.b16 %v1206
        %v1342 = vunpack.c.l.b16 %v1207
        %v1343 = vunpack.c.l.b16 %v1208
        %v1344 = vunpack.c.l.b16 %v1209
        %v1345 = vpack.c.b16 %v1282, %v1281
        %v1346 = vpack.c.b16 %v1284, %v1283
        %v1347 = vpack.c.b16 %v1286, %v1285
        %v1348 = vpack.c.b16 %v1288, %v1287
        %v1349 = vpack.c.b16 %v1290, %v1289
        %v1350 = vpack.c.b16 %v1292, %v1291
        %v1351 = vpack.c.b16 %v1294, %v1293
        %v1352 = vpack.c.b16 %v1296, %v1295
        %v1353 = vpack.c.b16 %v1298, %v1297
        %v1354 = vpack.c.b16 %v1300, %v1299
        %v1355 = vpack.c.b16 %v1302, %v1301
        %v1356 = vpack.c.b16 %v1304, %v1303
        %v1357 = vpack.c.b16 %v1306, %v1305
        %v1358 = vpack.c.b16 %v1308, %v1307
        %v1359 = vpack.c.b16 %v1310, %v1309
        %v1360 = vpack.c.b16 %v1312, %v1311
        %v1361 = vpack.c.b16 %v1314, %v1313
        %v1362 = vpack.c.b16 %v1316, %v1315
        %v1363 = vpack.c.b16 %v1318, %v1317
        %v1364 = vpack.c.b16 %v1320, %v1319
        %v1365 = vpack.c.b16 %v1322, %v1321
        %v1366 = vpack.c.b16 %v1324, %v1323
        %v1367 = vpack.c.b16 %v1326, %v1325
        %v1368 = vpack.c.b16 %v1328, %v1327
        %v1369 = vpack.c.b16 %v1330, %v1329
        %v1370 = vpack.c.b16 %v1332, %v1331
        %v1371 = vpack.c.b16 %v1334, %v1333
        %v1372 = vpack.c.b16 %v1336, %v1335
        %v1373 = vpack.c.b16 %v1338, %v1337
        %v1374 = vpack.c.b16 %v1340, %v1339
        %v1375 = vpack.c.b16 %v1342, %v1341
        %v1376 = vpack.c.b16 %v1344, %v1343
        %1409 = vmatprep.subr.bf16.mxu0 0
        %1410 = vmatpush1.bf16.msra.mxu0 %v1345
        %1411 = vmatprep.subr.bf16.mxu0 0
        %1412 = vmatpush1.bf16.msra.mxu0 %v1346
        %1413 = vmatprep.subr.bf16.mxu0 0
        %1414 = vmatpush1.bf16.msra.mxu0 %v1347
        %1415 = vmatprep.subr.bf16.mxu0 0
        %1416 = vmatpush1.bf16.msra.mxu0 %v1348
        %1417 = vmatprep.subr.bf16.mxu0 0
        %1418 = vmatpush1.bf16.msra.mxu0 %v1349
        %1419 = vmatprep.subr.bf16.mxu0 0
        %1420 = vmatpush1.bf16.msra.mxu0 %v1350
        %1421 = vmatprep.subr.bf16.mxu0 0
        %1422 = vmatpush1.bf16.msra.mxu0 %v1351
        %1423 = vmatprep.subr.bf16.mxu0 0
        %1424 = vmatpush1.bf16.msra.mxu0 %v1352
        %1425 = vmatprep.subr.bf16.mxu0 0
        %1426 = vmatpush1.bf16.msra.mxu0 %v1353
        %1427 = vmatprep.subr.bf16.mxu0 0
        %1428 = vmatpush1.bf16.msra.mxu0 %v1354
        %1429 = vmatprep.subr.bf16.mxu0 0
        %1430 = vmatpush1.bf16.msra.mxu0 %v1355
        %1431 = vmatprep.subr.bf16.mxu0 0
        %1432 = vmatpush1.bf16.msra.mxu0 %v1356
        %1433 = vmatprep.subr.bf16.mxu0 0
        %1434 = vmatpush1.bf16.msra.mxu0 %v1357
        %1435 = vmatprep.subr.bf16.mxu0 0
        %1436 = vmatpush1.bf16.msra.mxu0 %v1358
        %1437 = vmatprep.subr.bf16.mxu0 0
        %1438 = vmatpush1.bf16.msra.mxu0 %v1359
        %1439 = vmatprep.subr.bf16.mxu0 0
        %1440 = vmatpush1.bf16.msra.mxu0 %v1360
        %1441 = vmatprep.mubr.bf16.mxu0 %v1139
        %1442 = vmatmul.mubr.bf16.gmra.mrb[0].mxu0 %v1138
        %v1443 = vpop.f32.mrb[0].mxu0
        %v1444 = vadd.f32 %v1215, %v1443
        %v1445 = vpop.f32.mrb[0].mxu0
        %v1446 = vpop.f32.mrb[0].mxu0
        %v1447 = vadd.f32 %v1215, %v1446
        %v1448 = vpop.f32.mrb[0].mxu0
        %1449 = vmatprep.mubr.bf16.mxu0 %v1143
        %1450 = vmatmul.mubr.bf16.gmra.mrb[0].mxu0 %v1142
        %v1451 = vpop.f32.mrb[0].mxu0
        %v1452 = vadd.f32 %v1215, %v1451
        %v1453 = vpop.f32.mrb[0].mxu0
        %v1454 = vpop.f32.mrb[0].mxu0
        %v1455 = vadd.f32 %v1215, %v1454
        %v1456 = vpop.f32.mrb[0].mxu0
        %1457 = vdwg.mxu0
        %1458 = vmatprep.subr.bf16.mxu0 0
        %1459 = vmatpush1.bf16.msra.mxu0 %v1361
        %1460 = vmatprep.subr.bf16.mxu0 0
        %1461 = vmatpush1.bf16.msra.mxu0 %v1362
        %1462 = vmatprep.subr.bf16.mxu0 0
        %1463 = vmatpush1.bf16.msra.mxu0 %v1363
        %1464 = vmatprep.subr.bf16.mxu0 0
        %1465 = vmatpush1.bf16.msra.mxu0 %v1364
        %1466 = vmatprep.subr.bf16.mxu0 0
        %1467 = vmatpush1.bf16.msra.mxu0 %v1365
        %1468 = vmatprep.subr.bf16.mxu0 0
        %1469 = vmatpush1.bf16.msra.mxu0 %v1366
        %1470 = vmatprep.subr.bf16.mxu0 0
        %1471 = vmatpush1.bf16.msra.mxu0 %v1367
        %1472 = vmatprep.subr.bf16.mxu0 0
        %1473 = vmatpush1.bf16.msra.mxu0 %v1368
        %1474 = vmatprep.subr.bf16.mxu0 0
        %1475 = vmatpush1.bf16.msra.mxu0 %v1369
        %1476 = vmatprep.subr.bf16.mxu0 0
        %1477 = vmatpush1.bf16.msra.mxu0 %v1370
        %1478 = vmatprep.subr.bf16.mxu0 0
        %1479 = vmatpush1.bf16.msra.mxu0 %v1371
        %1480 = vmatprep.subr.bf16.mxu0 0
        %1481 = vmatpush1.bf16.msra.mxu0 %v1372
        %1482 = vmatprep.subr.bf16.mxu0 0
        %1483 = vmatpush1.bf16.msra.mxu0 %v1373
        %1484 = vmatprep.subr.bf16.mxu0 0
        %1485 = vmatpush1.bf16.msra.mxu0 %v1374
        %1486 = vmatprep.subr.bf16.mxu0 0
        %1487 = vmatpush1.bf16.msra.mxu0 %v1375
        %1488 = vmatprep.subr.bf16.mxu0 0
        %1489 = vmatpush1.bf16.msra.mxu0 %v1376
        %1490 = vmatprep.mubr.bf16.mxu0 %v1141
        %1491 = vmatmul.mubr.bf16.gmra.mrb[0].mxu0 %v1140
        %v1492 = vpop.f32.mrb[0].mxu0
        %v1493 = vadd.f32 %v1444, %v1492
        %v1494 = vpop.f32.mrb[0].mxu0
        %v1495 = vpop.f32.mrb[0].mxu0
        %v1496 = vadd.f32 %v1447, %v1495
        %v1497 = vpop.f32.mrb[0].mxu0
        %1498 = vmatprep.mubr.bf16.mxu0 %v1145
        %1499 = vmatmul.mubr.bf16.gmra.mrb[0].mxu0 %v1144
        %v1500 = vpop.f32.mrb[0].mxu0
        %v1501 = vadd.f32 %v1452, %v1500
        %v1502 = vpop.f32.mrb[0].mxu0
        %v1503 = vpop.f32.mrb[0].mxu0
        %v1504 = vadd.f32 %v1455, %v1503
        %v1505 = vpop.f32.mrb[0].mxu0
        %1506 = vdwg.mxu0
        %v1507 = vadd.f32 %v496, %v1493
        %v1508 = vadd.f32 %v497, %v1496
        %v1509 = vadd.f32 %v498, %v1501
        %v1510 = vadd.f32 %v499, %v1504
        %1511 = vst [vmem:[%s483] sm:$0xff] %v1507
        %1512 = vst [vmem:[%s483 + $0x8] sm:$0xff] %v1508
        %1513 = vst [vmem:[%s483 + $0x10] sm:$0xff] %v1509
        %1514 = vst [vmem:[%s483 + $0x18] sm:$0xff] %v1510
        %s1515 = sand.u32 %s239, 1
        %s1516 = scalar_lea.sflag [#allocation4], %s1515
        %s1517 = sand.u32 %s239, 1
        %s1518 = smul.addr %s1517, 32
        %s1519 = scalar_lea.vmem [#allocation17], %s1518
        // Predicated region
        $region93: #{block_forward.3} parent=55 // pred_check
          %p1520 = pneg %p249
        $region94: #{block_forward.3} parent=55 // pred_check_branch
          %1522 = sbr.rel (%p1520) target = $region96
        $region95: #{block_forward.3} parent=55 // pred_region
          %s1523 = smul.u32 4, %s32
          %s1525 = ssub.s32 512, 512
          %1526 = vsyncadd %s1516, %s1525
          %s1527 = smul.addr %s1523, 128
          %s1528 = scalar_lea.hbm %s9, %s1527
          %s1529 = sshll.u32 %s1519, 4
          %s1530 = int_to_ptr.vmem [resolvable:$true] %s1529
          %1535 = dma.vmem_to_hbm [thread:$0]  %s1530, 512, %s1528, %s1516, 128, 128, 8
        $region96: #{block_forward.3} parent=55 // pred_fallthru
          _
      $region56: #{block_forward.3} parent=5 // pred_fallthru
        _
      %p1536 = scmp.le.s32.totalorder 2, %s27
      // Predicated region
      $region97: #{block_forward.3} parent=5 // pred_check
        %p1537 = pneg %p1536
      $region98: #{block_forward.3} parent=5 // pred_check_branch
        %1539 = sbr.rel (%p1537) target = $region100
      $region99: #{block_forward.3} parent=5 // pred_region
        %s1540 = ssub.s32 %s27, 2
        // Predicated region
        $region101: #{block_forward.3} parent=99 // pred_check
          %p1541 = pneg %p255
        $region102: #{block_forward.3} parent=99 // pred_check_branch
          %1543 = sbr.rel (%p1541) target = $region104
        $region103: #{block_forward.3} parent=99 // pred_region
          %s1544 = sand.u32 %s240, 1
          %s1545 = scalar_lea.sflag [#allocation4], %s1544
          %s1546 = sand.u32 %s240, 1
          %s1547 = smul.addr %s1546, 32
          %s1548 = scalar_lea.vmem [#allocation17], %s1547
          %1549 = dma.done %s1545, 512
        $region104: #{block_forward.3} parent=99 // pred_fallthru
          _
      $region100: #{block_forward.3} parent=5 // pred_fallthru
        _
    $region6: #{block_forward.3} parent=1 // loop_footer
      %s31 = sadd.s32 1, %s27
    $region7: #{block_forward.3} parent=1 // loop_footer_branch
      %26 = sbr.rel target = $region3
    $region8: #{block_forward.3} parent=1 // loop_exit
      _
    %1550 = vsyncpa [#allocation3], 1
    %s1551 = scalar_lea.sflag [#allocation3], 1
    %1552 = vsyncpa %s1551, 1
    %1553 = vsyncpa [#allocation6], 1
    %s1554 = scalar_lea.sflag [#allocation6], 1
    %1555 = vsyncpa %s1554, 1
    %1556 = vsyncpa [#allocation9], 1
    %1557 = vsyncpa [#allocation12], 1
    %1558 = vsyncpa [#allocation15], 1
    %1559 = vsyncpa [#allocation4], 1
    %s1560 = scalar_lea.sflag [#allocation4], 1
    %1561 = vsyncpa %s1560, 1

</llo_original>
